<compile_context>
chip_gen: v5e
topology: v5e:2x2
jax: 0.10.0
libtpu: 0.0.40
codegen_flags: <defaults>
</compile_context>

<pallas_src>
import jax
import jax.numpy as jnp
from jax.experimental import pallas as pl
from jax.experimental.pallas import tpu as pltpu

# Small, shape-consistent hyper-parameters (module defaults scaled down)
B = 2            # batch
S = 8            # sequence length
H_BERT = 32      # bert.config.hidden_size
PRE = 32         # pre_emb_size
GH = PRE // 2    # GRU hidden size per direction (bidirectional -> 2*GH = PRE)
FIN = 32         # final_emb_size
OUT = 11         # 10 class logits + 1 note
OUT_PAD = 128    # lane-dense kernel output width (sliced to OUT in the wrapper)
LANES = 128      # lane width of the packed weight slabs

# bf16 operands for the slab matmuls (f32 accumulation via
# preferred_element_type).  Recurrence matmuls & all gate math remain f32.
SLAB_MXU_DTYPE = jnp.bfloat16

# ---------------------------------------------------------------------------
# Packed-weight slab layout (shared by prep_kernel_params and the kernel).
# Each block gets its own rows (sublanes), lane offset 0, padded to 128 lanes.
# ---------------------------------------------------------------------------
_W_BLOCKS = [                      # bf16 matmul-operand slab
    ("w1t",   H_BERT, PRE),        # preprocess Linear 1 (transposed)
    ("w2t",   PRE,    PRE),        # preprocess Linear 2 (transposed)
    ("wih0f", PRE,    3 * GH),     # GRU layer-0 fwd input projection
    ("wih0b", PRE,    3 * GH),     # GRU layer-0 bwd input projection
    ("w1_ff", GH,     3 * GH),     # GRU layer-1 fwd dir, layer-0 fwd-half input
    ("w1_bf", GH,     3 * GH),     # GRU layer-1 fwd dir, layer-0 bwd-half input
    ("w1_fb", GH,     3 * GH),     # GRU layer-1 bwd dir, layer-0 fwd-half input
    ("w1_bb", GH,     3 * GH),     # GRU layer-1 bwd dir, layer-0 bwd-half input
    ("wf1t",  PRE,    FIN),        # final Linear 1 (transposed)
    ("wf2t",  FIN,    OUT_PAD),    # final Linear 2 (transposed, lane-padded)
]

_B_BLOCKS = [                      # f32 recurrence-weight / bias slab
    ("whhf0", GH, 3 * GH),
    ("whhb0", GH, 3 * GH),
    ("whhf1", GH, 3 * GH),
    ("whhb1", GH, 3 * GH),
    ("b1",    1, PRE),
    ("b2",    1, PRE),
    ("gib0f", 1, 3 * GH),
    ("gib0b", 1, 3 * GH),
    ("gib1f", 1, 3 * GH),
    ("gib1b", 1, 3 * GH),
    ("bhnf0", 1, GH),
    ("bhnb0", 1, GH),
    ("bhnf1", 1, GH),
    ("bhnb1", 1, GH),
    ("bf1",   1, FIN),
    ("bf2",   1, OUT_PAD),
]


def _layout(blocks):
    offsets, row = {}, 0
    for name, r, c in blocks:
        offsets[name] = (row, r, c)
        row += r
    return offsets, ((row + 7) // 8) * 8


W_OFF, W_ROWS = _layout(_W_BLOCKS)   # 256 rows x 128 lanes (bf16)
B_OFF, B_ROWS = _layout(_B_BLOCKS)   # 80  rows x 128 lanes (f32)


def _pack(blocks, layout, total_rows, dtype):
    slab = jnp.zeros((total_rows, LANES), dtype)
    for name, arr in blocks.items():
        r0, r, c = layout[name]
        assert arr.shape == (r, c), (name, arr.shape, (r, c))
        slab = slab.at[r0:r0 + r, 0:c].set(arr.astype(dtype))
    return slab


def _carve(ref, layout, name):
    r0, r, c = layout[name]
    return ref[r0:r0 + r, 0:c]


# ---------------------------------------------------------------------------
# Kernel
# ---------------------------------------------------------------------------
def _mm(a, b):
    # Cast the activation to the weight's dtype: bf16 for the packed slab
    # weights, f32 for the recurrence weights.  Always accumulate in f32.
    return jnp.dot(a.astype(b.dtype), b, preferred_element_type=jnp.float32)


def _hardswish(v):
    # nn.Hardswish: x * relu6(x + 3) / 6   (f32 element-wise)
    return v * jnp.clip(v + 3.0, 0.0, 6.0) * (1.0 / 6.0)


def _gru_step(gi_t, h_prev, w_hh_t, b_hh_n):
    """One GRU cell step.  gi_t already contains x@W_ih.T + b_ih (all gates)
    + b_hh (r,z gates); only the n-gate hidden bias (pre-broadcast to (B,GH))
    is applied here.  Recurrence matmul stays f32."""
    gh = _mm(h_prev, w_hh_t)                                   # (B, 3*GH) f32
    r = jax.nn.sigmoid(gi_t[:, :GH] + gh[:, :GH])
    z = jax.nn.sigmoid(gi_t[:, GH:2 * GH] + gh[:, GH:2 * GH])
    n = jnp.tanh(gi_t[:, 2 * GH:] + r * (gh[:, 2 * GH:] + b_hh_n))
    return (1.0 - z) * n + z * h_prev


def sentiment_kernel(x_ref, w_ref, b_ref, out_ref):
    b_dim, s_len, h_bert = x_ref.shape

    def W(name):            # bf16 matmul-weight block
        return _carve(w_ref, W_OFF, name)

    def Bv(name):           # f32 recurrence-weight / bias block
        return _carve(b_ref, B_OFF, name)

    # ---- preprocess_tokens: Linear -> (Dropout p=0) -> Hardswish, x2, batched
    #      over all B*S tokens as one slab (row index = b*S + t) ----
    x_slab = x_ref[...].reshape(b_dim * s_len, h_bert)          # (B*S, H_BERT)
    h = _hardswish(_mm(x_slab, W("w1t")) + Bv("b1"))            # (B*S, PRE)
    h = _hardswish(_mm(h, W("w2t")) + Bv("b2"))                 # (B*S, PRE)

    # ---- GRU layer 0 (bidirectional) ----
    # Input projections hoisted out of the recurrence; W_ih pre-split into
    # fwd / bwd halves in prep, so no in-loop lane-range selects are needed.
    gi0_f = (_mm(h, W("wih0f")) + Bv("gib0f")).reshape(b_dim, s_len, 3 * GH)
    gi0_b = (_mm(h, W("wih0b")) + Bv("gib0b")).reshape(b_dim, s_len, 3 * GH)
    # Per-step slices pre-carved before the loop (off the serial chain).
    gi0_f_t = [gi0_f[:, t, :] for t in range(s_len)]
    gi0_b_t = [gi0_b[:, t, :] for t in range(s_len)]

    whhf0 = Bv("whhf0")
    whhb0 = Bv("whhb0")
    bnf0 = jnp.broadcast_to(Bv("bhnf0"), (b_dim, GH))           # hoisted
    bnb0 = jnp.broadcast_to(Bv("bhnb0"), (b_dim, GH))

    h_f = jnp.zeros((b_dim, GH), jnp.float32)
    h_b = jnp.zeros((b_dim, GH), jnp.float32)
    hf_seq = [None] * s_len
    hb_seq = [None] * s_len
    for t in range(s_len):               # fwd @ t, bwd @ s_len-1-t:
        tb = s_len - 1 - t               # two independent chains in flight
        h_f = _gru_step(gi0_f_t[t], h_f, whhf0, bnf0)
        h_b = _gru_step(gi0_b_t[tb], h_b, whhb0, bnb0)
        hf_seq[t] = h_f
        hb_seq[tb] = h_b

    # ---- GRU layer 1 (bidirectional) ----
    # Layer-0 states stay in registers; time-major (row = t*B + b) slabs are
    # built by a single sublane concat each, and layer-1's W_ih is split on
    # the input axis -> no (fwd | bwd) lane concat at offset GH.
    fwd_slab = jnp.concatenate(hf_seq, axis=0)                  # (S*B, GH)
    bwd_slab = jnp.concatenate(hb_seq, axis=0)                  # (S*B, GH)
    gi1_f = (_mm(fwd_slab, W("w1_ff")) + _mm(bwd_slab, W("w1_bf"))
             + Bv("gib1f"))                                     # (S*B, 3*GH)
    gi1_f_t = [gi1_f[t * b_dim:(t + 1) * b_dim, :] for t in range(s_len)]

    whhf1 = Bv("whhf1")
    bnf1 = jnp.broadcast_to(Bv("bhnf1"), (b_dim, GH))
    h_f1 = jnp.zeros((b_dim, GH), jnp.float32)
    for t in range(s_len):
        h_f1 = _gru_step(gi1_f_t[t], h_f1, whhf1, bnf1)

    # Backward direction of layer 1: only its state at t = S-1 reaches the
    # output gru_output[:, -1, GH:], i.e. exactly one cell step from h = 0.
    gi1_b_last = (_mm(hf_seq[s_len - 1], W("w1_fb"))
                  + _mm(hb_seq[s_len - 1], W("w1_bb")) + Bv("gib1b"))
    bnb1 = jnp.broadcast_to(Bv("bhnb1"), (b_dim, GH))
    h_b1 = _gru_step(gi1_b_last, jnp.zeros((b_dim, GH), jnp.float32),
                     Bv("whhb1"), bnb1)

    last = jnp.concatenate([h_f1, h_b1], axis=-1)               # (B, PRE)

    # ---- final head: Linear -> Hardswish -> Linear(FIN, 11), lane-padded ----
    f = _hardswish(_mm(last, W("wf1t")) + Bv("bf1"))            # (B, FIN)
    out_ref[...] = _mm(f, W("wf2t")) + Bv("bf2")                # (B, OUT_PAD)


# ---------------------------------------------------------------------------
# Wrapper-side one-time weight prep: transpose, split, fold biases, pack slabs
# ---------------------------------------------------------------------------
def prep_kernel_params(params):
    w1, b1, w2, b2 = params[0:4]
    grup = params[4:20]
    wf1, bf1, wf2, bf2 = params[20:24]

    wif0, whf0, bif0, bhf0 = grup[0:4]      # layer 0 forward
    wib0, whb0, bib0, bhb0 = grup[4:8]      # layer 0 backward
    wif1, whf1, bif1, bhf1 = grup[8:12]     # layer 1 forward
    wib1, whb1, bib1, bhb1 = grup[12:16]    # layer 1 backward

    def fold_gi_bias(b_ih, b_hh):
        # b_ih (all gates) + b_hh (r,z gates) folded onto the hoisted gi slab;
        # the n-gate hidden bias stays inside the recurrence (multiplied by r).
        return b_ih + jnp.concatenate(
            [b_hh[:, :2 * GH], jnp.zeros((1, GH), jnp.float32)], axis=1)

    w_blocks = {
        "w1t":   w1.T,
        "w2t":   w2.T,
        "wih0f": wif0.T,
        "wih0b": wib0.T,
        "w1_ff": wif1.T[:GH, :],
        "w1_bf": wif1.T[GH:, :],
        "w1_fb": wib1.T[:GH, :],
        "w1_bb": wib1.T[GH:, :],
        "wf1t":  wf1.T,
        "wf2t":  jnp.concatenate(
            [wf2.T, jnp.zeros((FIN, OUT_PAD - OUT), jnp.float32)], axis=1),
    }
    b_blocks = {
        "whhf0": whf0.T, "whhb0": whb0.T, "whhf1": whf1.T, "whhb1": whb1.T,
        "b1": b1, "b2": b2,
        "gib0f": fold_gi_bias(bif0, bhf0), "gib0b": fold_gi_bias(bib0, bhb0),
        "gib1f": fold_gi_bias(bif1, bhf1), "gib1b": fold_gi_bias(bib1, bhb1),
        "bhnf0": bhf0[:, 2 * GH:], "bhnb0": bhb0[:, 2 * GH:],
        "bhnf1": bhf1[:, 2 * GH:], "bhnb1": bhb1[:, 2 * GH:],
        "bf1": bf1,
        "bf2": jnp.concatenate(
            [bf2, jnp.zeros((1, OUT_PAD - OUT), jnp.float32)], axis=1),
    }
    wslab = _pack(w_blocks, W_OFF, W_ROWS, SLAB_MXU_DTYPE)   # (256, 128) bf16
    bslab = _pack(b_blocks, B_OFF, B_ROWS, jnp.float32)      # (80, 128)  f32
    return wslab, bslab


@jax.jit
def sentiment_head_pallas(x_bsh, wslab, bslab):
    """x_bsh: (B, S, H_BERT) batch-first BERT output; wslab/bslab from
    prep_kernel_params.  Returns (class_pred, note_pred)."""
    logits = pl.pallas_call(
        sentiment_kernel,
        out_shape=jax.ShapeDtypeStruct((x_bsh.shape[0], OUT_PAD), jnp.float32),
        in_specs=[pl.BlockSpec(memory_space=pltpu.MemorySpace.VMEM)] * 3,
        out_specs=pl.BlockSpec(memory_space=pltpu.MemorySpace.VMEM),
    )(x_bsh, wslab, bslab)
    class_pred = logits[:, :OUT - 1]
    note_pred = logits[:, OUT - 1]
    return class_pred, note_pred


# ---------------------------------------------------------------------------
# Parameter init (PyTorch layout) and pure-JAX reference
# ---------------------------------------------------------------------------
def init_params(key):
    """Deterministic kaiming-normal weights, zero biases (biases kept (1, N)).
    Layout matches the PyTorch module parameters."""
    def kaiming(k, shape, fan_in):
        return jax.random.normal(k, shape, jnp.float32) * jnp.sqrt(2.0 / fan_in)

    keys = iter(jax.random.split(key, 16))
    params = []
    # preprocess_tokens: Linear(H_BERT, PRE), Linear(PRE, PRE)
    params += [kaiming(next(keys), (PRE, H_BERT), H_BERT),
               jnp.zeros((1, PRE), jnp.float32)]
    params += [kaiming(next(keys), (PRE, PRE), PRE),
               jnp.zeros((1, PRE), jnp.float32)]
    # GRU: 2 layers x 2 directions x (w_ih, w_hh, b_ih, b_hh)
    for layer in range(2):
        in_sz = PRE if layer == 0 else 2 * GH
        for _direction in range(2):
            params += [kaiming(next(keys), (3 * GH, in_sz), in_sz),
                       kaiming(next(keys), (3 * GH, GH), GH),
                       jnp.zeros((1, 3 * GH), jnp.float32),
                       jnp.zeros((1, 3 * GH), jnp.float32)]
    # final: Linear(PRE, FIN), Linear(FIN, 11)
    params += [kaiming(next(keys), (FIN, PRE), PRE),
               jnp.zeros((1, FIN), jnp.float32)]
    params += [kaiming(next(keys), (OUT, FIN), FIN),
               jnp.zeros((1, OUT), jnp.float32)]
    return params


def reference(x_bsh, params, mm_dtype=jnp.float32):
    """Pure-JAX re-implementation with PyTorch semantics.  mm_dtype controls
    the operand dtype of the slab matmuls (MLP, GRU input projections, final
    head) to mirror the kernel's bf16-operand / f32-accumulation policy; the
    recurrence matmuls and all gate math stay f32."""
    def mmd(a, b):
        return jnp.dot(a.astype(mm_dtype), b.astype(mm_dtype),
                       preferred_element_type=jnp.float32)

    def hsw(v):
        return v * jnp.clip(v + 3.0, 0.0, 6.0) / 6.0

    w1, b1, w2, b2 = params[0:4]
    grup = params[4:20]
    wf1, bf1, wf2, bf2 = params[20:24]

    h = hsw(mmd(x_bsh, w1.T) + b1)
    h = hsw(mmd(h, w2.T) + b2)

    def cell(x_t, hp, w_ih, w_hh, b_ih, b_hh):
        gi = mmd(x_t, w_ih.T) + b_ih
        gh = jnp.dot(hp, w_hh.T, preferred_element_type=jnp.float32) + b_hh
        r = jax.nn.sigmoid(gi[:, :GH] + gh[:, :GH])
        z = jax.nn.sigmoid(gi[:, GH:2 * GH] + gh[:, GH:2 * GH])
        n = jnp.tanh(gi[:, 2 * GH:] + r * gh[:, 2 * GH:])
        return (1.0 - z) * n + z * hp

    seq = [h[:, t, :] for t in range(S)]
    for layer in range(2):
        wif, whf, bif, bhf = grup[layer * 8 + 0: layer * 8 + 4]
        wib, whb, bib, bhb = grup[layer * 8 + 4: layer * 8 + 8]
        hf = jnp.zeros((x_bsh.shape[0], GH), jnp.float32)
        of = []
        for t in range(S):
            hf = cell(seq[t], hf, wif, whf, bif, bhf)
            of.append(hf)
        hb = jnp.zeros((x_bsh.shape[0], GH), jnp.float32)
        ob = [None] * S
        for t in range(S - 1, -1, -1):
            hb = cell(seq[t], hb, wib, whb, bib, bhb)
            ob[t] = hb
        seq = [jnp.concatenate([of[t], ob[t]], axis=-1) for t in range(S)]

    last = seq[-1]
    f = hsw(mmd(last, wf1.T) + bf1)
    logits = mmd(f, wf2.T) + bf2
    return logits[..., :-1], logits[..., -1]


if __name__ == "__main__":
    key = jax.random.PRNGKey(0)
    k_x, k_p = jax.random.split(key)
    # x plays the role of self.bert(toks)[0]: (B, S, hidden_size)
    x = jax.random.normal(k_x, (B, S, H_BERT), jnp.float32)
    params = init_params(k_p)
    wslab, bslab = prep_kernel_params(params)    # one-time pack into 2 slabs

    class_pred, note_pred = sentiment_head_pallas(x, wslab, bslab)
    jax.block_until_ready((class_pred, note_pred))

    assert class_pred.shape == (B, OUT - 1) and note_pred.shape == (B,)

    # Tight structural check vs. a reference using the same matmul-dtype
    # policy (bf16 slab operands, f32 accumulation, f32 recurrence).
    ref_c_m, ref_n_m = reference(x, params, mm_dtype=SLAB_MXU_DTYPE)
    assert jnp.allclose(class_pred, ref_c_m, rtol=2e-3, atol=2e-3)
    assert jnp.allclose(note_pred, ref_n_m, rtol=2e-3, atol=2e-3)

    # Loose semantic sanity check vs. the full-f32 PyTorch-style reference
    # (bf16 slab operands perturb the logits by at most a few 1e-2 here).
    ref_c, ref_n = reference(x, params, mm_dtype=jnp.float32)
    assert jnp.allclose(class_pred, ref_c, rtol=1.5e-1, atol=1.5e-1)
    assert jnp.allclose(note_pred, ref_n, rtol=1.5e-1, atol=1.5e-1)

    print("KERNEL_OK")
</pallas_src>

<mosaic_0001>
module attributes {stable_mosaic.version = 11 : i64} {
  func.func @sentiment_kernel(%arg0: memref<2x8x32xf32, #tpu.memory_space<vmem>>, %arg1: memref<256x128xbf16, #tpu.memory_space<vmem>>, %arg2: memref<80x128xf32, #tpu.memory_space<vmem>>, %arg3: memref<2x128xf32, #tpu.memory_space<vmem>>) attributes {dimension_semantics = [], scalar_prefetch = 0 : i64, scratch_operands = 0 : i64, tpu.core_type = #tpu.core_type<tc>} {
    %c0 = arith.constant 0 : index
    %c0_0 = arith.constant 0 : index
    %c0_1 = arith.constant 0 : index
    %0 = vector.load %arg0[%c0, %c0_0, %c0_1] : memref<2x8x32xf32, #tpu.memory_space<vmem>>, vector<2x8x32xf32>
    %1 = vector.shape_cast %0 : vector<2x8x32xf32> to vector<16x32xf32>
    %c0_2 = arith.constant 0 : index
    %c0_3 = arith.constant 0 : index
    %2 = vector.load %arg1[%c0_2, %c0_3] : memref<256x128xbf16, #tpu.memory_space<vmem>>, vector<32x32xbf16>
    %3 = arith.truncf %1 : vector<16x32xf32> to vector<16x32xbf16>
    %cst = arith.constant dense<0.000000e+00> : vector<16x32xf32>
    %4 = tpu.matmul %3, %2, %cst {dimension_numbers = #tpu.dot_dimension_numbers<[1], [0], [0], [1], [0, 0, 1, 1], [], []>} : vector<16x32xbf16>, vector<32x32xbf16>, vector<16x32xf32> -> vector<16x32xf32>
    %c64 = arith.constant 64 : index
    %c0_4 = arith.constant 0 : index
    %5 = vector.load %arg2[%c64, %c0_4] : memref<80x128xf32, #tpu.memory_space<vmem>>, vector<1x32xf32>
    %6 = vector.broadcast %5 : vector<1x32xf32> to vector<16x32xf32>
    %7 = arith.addf %4, %6 : vector<16x32xf32>
    %cst_5 = arith.constant 3.000000e+00 : f32
    %8 = vector.broadcast %cst_5 : f32 to vector<16x32xf32>
    %9 = arith.addf %7, %8 : vector<16x32xf32>
    %cst_6 = arith.constant 0.000000e+00 : f32
    %cst_7 = arith.constant 6.000000e+00 : f32
    %10 = vector.broadcast %cst_6 : f32 to vector<16x32xf32>
    %11 = arith.maximumf %10, %9 : vector<16x32xf32>
    %12 = vector.broadcast %cst_7 : f32 to vector<16x32xf32>
    %13 = arith.minimumf %12, %11 : vector<16x32xf32>
    %14 = arith.mulf %7, %13 : vector<16x32xf32>
    %cst_8 = arith.constant 0.166666672 : f32
    %15 = vector.broadcast %cst_8 : f32 to vector<16x32xf32>
    %16 = arith.mulf %14, %15 : vector<16x32xf32>
    %c32 = arith.constant 32 : index
    %c0_9 = arith.constant 0 : index
    %17 = vector.load %arg1[%c32, %c0_9] : memref<256x128xbf16, #tpu.memory_space<vmem>>, vector<32x32xbf16>
    %18 = arith.truncf %16 : vector<16x32xf32> to vector<16x32xbf16>
    %cst_10 = arith.constant dense<0.000000e+00> : vector<16x32xf32>
    %19 = tpu.matmul %18, %17, %cst_10 {dimension_numbers = #tpu.dot_dimension_numbers<[1], [0], [0], [1], [0, 0, 1, 1], [], []>} : vector<16x32xbf16>, vector<32x32xbf16>, vector<16x32xf32> -> vector<16x32xf32>
    %c65 = arith.constant 65 : index
    %c0_11 = arith.constant 0 : index
    %20 = vector.load %arg2[%c65, %c0_11] : memref<80x128xf32, #tpu.memory_space<vmem>>, vector<1x32xf32>
    %21 = vector.broadcast %20 : vector<1x32xf32> to vector<16x32xf32>
    %22 = arith.addf %19, %21 : vector<16x32xf32>
    %cst_12 = arith.constant 3.000000e+00 : f32
    %23 = vector.broadcast %cst_12 : f32 to vector<16x32xf32>
    %24 = arith.addf %22, %23 : vector<16x32xf32>
    %cst_13 = arith.constant 0.000000e+00 : f32
    %cst_14 = arith.constant 6.000000e+00 : f32
    %25 = vector.broadcast %cst_13 : f32 to vector<16x32xf32>
    %26 = arith.maximumf %25, %24 : vector<16x32xf32>
    %27 = vector.broadcast %cst_14 : f32 to vector<16x32xf32>
    %28 = arith.minimumf %27, %26 : vector<16x32xf32>
    %29 = arith.mulf %22, %28 : vector<16x32xf32>
    %cst_15 = arith.constant 0.166666672 : f32
    %30 = vector.broadcast %cst_15 : f32 to vector<16x32xf32>
    %31 = arith.mulf %29, %30 : vector<16x32xf32>
    %c64_16 = arith.constant 64 : index
    %c0_17 = arith.constant 0 : index
    %32 = vector.load %arg1[%c64_16, %c0_17] : memref<256x128xbf16, #tpu.memory_space<vmem>>, vector<32x48xbf16>
    %33 = arith.truncf %31 : vector<16x32xf32> to vector<16x32xbf16>
    %cst_18 = arith.constant dense<0.000000e+00> : vector<16x48xf32>
    %34 = tpu.matmul %33, %32, %cst_18 {dimension_numbers = #tpu.dot_dimension_numbers<[1], [0], [0], [1], [0, 0, 1, 1], [], []>} : vector<16x32xbf16>, vector<32x48xbf16>, vector<16x48xf32> -> vector<16x48xf32>
    %c66 = arith.constant 66 : index
    %c0_19 = arith.constant 0 : index
    %35 = vector.load %arg2[%c66, %c0_19] : memref<80x128xf32, #tpu.memory_space<vmem>>, vector<1x48xf32>
    %36 = vector.broadcast %35 : vector<1x48xf32> to vector<16x48xf32>
    %37 = arith.addf %34, %36 : vector<16x48xf32>
    %38 = vector.shape_cast %37 : vector<16x48xf32> to vector<2x8x48xf32>
    %c96 = arith.constant 96 : index
    %c0_20 = arith.constant 0 : index
    %39 = vector.load %arg1[%c96, %c0_20] : memref<256x128xbf16, #tpu.memory_space<vmem>>, vector<32x48xbf16>
    %40 = arith.truncf %31 : vector<16x32xf32> to vector<16x32xbf16>
    %cst_21 = arith.constant dense<0.000000e+00> : vector<16x48xf32>
    %41 = tpu.matmul %40, %39, %cst_21 {dimension_numbers = #tpu.dot_dimension_numbers<[1], [0], [0], [1], [0, 0, 1, 1], [], []>} : vector<16x32xbf16>, vector<32x48xbf16>, vector<16x48xf32> -> vector<16x48xf32>
    %c67 = arith.constant 67 : index
    %c0_22 = arith.constant 0 : index
    %42 = vector.load %arg2[%c67, %c0_22] : memref<80x128xf32, #tpu.memory_space<vmem>>, vector<1x48xf32>
    %43 = vector.broadcast %42 : vector<1x48xf32> to vector<16x48xf32>
    %44 = arith.addf %41, %43 : vector<16x48xf32>
    %45 = vector.shape_cast %44 : vector<16x48xf32> to vector<2x8x48xf32>
    %46 = vector.extract_strided_slice %38 {offsets = [0, 0, 0], sizes = [2, 1, 48], strides = [1, 1, 1]} : vector<2x8x48xf32> to vector<2x1x48xf32>
    %47 = vector.shape_cast %46 : vector<2x1x48xf32> to vector<2x48xf32>
    %48 = vector.extract_strided_slice %38 {offsets = [0, 1, 0], sizes = [2, 1, 48], strides = [1, 1, 1]} : vector<2x8x48xf32> to vector<2x1x48xf32>
    %49 = vector.shape_cast %48 : vector<2x1x48xf32> to vector<2x48xf32>
    %50 = vector.extract_strided_slice %38 {offsets = [0, 2, 0], sizes = [2, 1, 48], strides = [1, 1, 1]} : vector<2x8x48xf32> to vector<2x1x48xf32>
    %51 = vector.shape_cast %50 : vector<2x1x48xf32> to vector<2x48xf32>
    %52 = vector.extract_strided_slice %38 {offsets = [0, 3, 0], sizes = [2, 1, 48], strides = [1, 1, 1]} : vector<2x8x48xf32> to vector<2x1x48xf32>
    %53 = vector.shape_cast %52 : vector<2x1x48xf32> to vector<2x48xf32>
    %54 = vector.extract_strided_slice %38 {offsets = [0, 4, 0], sizes = [2, 1, 48], strides = [1, 1, 1]} : vector<2x8x48xf32> to vector<2x1x48xf32>
    %55 = vector.shape_cast %54 : vector<2x1x48xf32> to vector<2x48xf32>
    %56 = vector.extract_strided_slice %38 {offsets = [0, 5, 0], sizes = [2, 1, 48], strides = [1, 1, 1]} : vector<2x8x48xf32> to vector<2x1x48xf32>
    %57 = vector.shape_cast %56 : vector<2x1x48xf32> to vector<2x48xf32>
    %58 = vector.extract_strided_slice %38 {offsets = [0, 6, 0], sizes = [2, 1, 48], strides = [1, 1, 1]} : vector<2x8x48xf32> to vector<2x1x48xf32>
    %59 = vector.shape_cast %58 : vector<2x1x48xf32> to vector<2x48xf32>
    %60 = vector.extract_strided_slice %38 {offsets = [0, 7, 0], sizes = [2, 1, 48], strides = [1, 1, 1]} : vector<2x8x48xf32> to vector<2x1x48xf32>
    %61 = vector.shape_cast %60 : vector<2x1x48xf32> to vector<2x48xf32>
    %62 = vector.extract_strided_slice %45 {offsets = [0, 0, 0], sizes = [2, 1, 48], strides = [1, 1, 1]} : vector<2x8x48xf32> to vector<2x1x48xf32>
    %63 = vector.shape_cast %62 : vector<2x1x48xf32> to vector<2x48xf32>
    %64 = vector.extract_strided_slice %45 {offsets = [0, 1, 0], sizes = [2, 1, 48], strides = [1, 1, 1]} : vector<2x8x48xf32> to vector<2x1x48xf32>
    %65 = vector.shape_cast %64 : vector<2x1x48xf32> to vector<2x48xf32>
    %66 = vector.extract_strided_slice %45 {offsets = [0, 2, 0], sizes = [2, 1, 48], strides = [1, 1, 1]} : vector<2x8x48xf32> to vector<2x1x48xf32>
    %67 = vector.shape_cast %66 : vector<2x1x48xf32> to vector<2x48xf32>
    %68 = vector.extract_strided_slice %45 {offsets = [0, 3, 0], sizes = [2, 1, 48], strides = [1, 1, 1]} : vector<2x8x48xf32> to vector<2x1x48xf32>
    %69 = vector.shape_cast %68 : vector<2x1x48xf32> to vector<2x48xf32>
    %70 = vector.extract_strided_slice %45 {offsets = [0, 4, 0], sizes = [2, 1, 48], strides = [1, 1, 1]} : vector<2x8x48xf32> to vector<2x1x48xf32>
    %71 = vector.shape_cast %70 : vector<2x1x48xf32> to vector<2x48xf32>
    %72 = vector.extract_strided_slice %45 {offsets = [0, 5, 0], sizes = [2, 1, 48], strides = [1, 1, 1]} : vector<2x8x48xf32> to vector<2x1x48xf32>
    %73 = vector.shape_cast %72 : vector<2x1x48xf32> to vector<2x48xf32>
    %74 = vector.extract_strided_slice %45 {offsets = [0, 6, 0], sizes = [2, 1, 48], strides = [1, 1, 1]} : vector<2x8x48xf32> to vector<2x1x48xf32>
    %75 = vector.shape_cast %74 : vector<2x1x48xf32> to vector<2x48xf32>
    %76 = vector.extract_strided_slice %45 {offsets = [0, 7, 0], sizes = [2, 1, 48], strides = [1, 1, 1]} : vector<2x8x48xf32> to vector<2x1x48xf32>
    %77 = vector.shape_cast %76 : vector<2x1x48xf32> to vector<2x48xf32>
    %c0_23 = arith.constant 0 : index
    %c0_24 = arith.constant 0 : index
    %78 = vector.load %arg2[%c0_23, %c0_24] : memref<80x128xf32, #tpu.memory_space<vmem>>, vector<16x48xf32>
    %c16 = arith.constant 16 : index
    %c0_25 = arith.constant 0 : index
    %79 = vector.load %arg2[%c16, %c0_25] : memref<80x128xf32, #tpu.memory_space<vmem>>, vector<16x48xf32>
    %c70 = arith.constant 70 : index
    %c0_26 = arith.constant 0 : index
    %80 = vector.load %arg2[%c70, %c0_26] : memref<80x128xf32, #tpu.memory_space<vmem>>, vector<1x16xf32>
    %81 = vector.shape_cast %80 : vector<1x16xf32> to vector<1x16xf32>
    %82 = vector.broadcast %81 : vector<1x16xf32> to vector<2x16xf32>
    %c71 = arith.constant 71 : index
    %c0_27 = arith.constant 0 : index
    %83 = vector.load %arg2[%c71, %c0_27] : memref<80x128xf32, #tpu.memory_space<vmem>>, vector<1x16xf32>
    %84 = vector.shape_cast %83 : vector<1x16xf32> to vector<1x16xf32>
    %85 = vector.broadcast %84 : vector<1x16xf32> to vector<2x16xf32>
    %cst_28 = arith.constant 0.000000e+00 : f32
    %86 = vector.broadcast %cst_28 : f32 to vector<2x16xf32>
    %cst_29 = arith.constant 0.000000e+00 : f32
    %87 = vector.broadcast %cst_29 : f32 to vector<2x16xf32>
    %cst_30 = arith.constant dense<0.000000e+00> : vector<2x48xf32>
    %88 = tpu.matmul %86, %78, %cst_30 {dimension_numbers = #tpu.dot_dimension_numbers<[1], [0], [0], [1], [0, 0, 1, 1], [], []>} : vector<2x16xf32>, vector<16x48xf32>, vector<2x48xf32> -> vector<2x48xf32>
    %89 = vector.extract_strided_slice %47 {offsets = [0, 0], sizes = [2, 16], strides = [1, 1]} : vector<2x48xf32> to vector<2x16xf32>
    %90 = vector.extract_strided_slice %88 {offsets = [0, 0], sizes = [2, 16], strides = [1, 1]} : vector<2x48xf32> to vector<2x16xf32>
    %91 = arith.addf %89, %90 : vector<2x16xf32>
    %92 = arith.negf %91 : vector<2x16xf32>
    %93 = math.exp %92 : vector<2x16xf32>
    %cst_31 = arith.constant 1.000000e+00 : f32
    %94 = vector.broadcast %cst_31 : f32 to vector<2x16xf32>
    %95 = arith.addf %94, %93 : vector<2x16xf32>
    %96 = arith.divf %94, %95 : vector<2x16xf32>
    %97 = vector.extract_strided_slice %47 {offsets = [0, 16], sizes = [2, 16], strides = [1, 1]} : vector<2x48xf32> to vector<2x16xf32>
    %98 = vector.extract_strided_slice %88 {offsets = [0, 16], sizes = [2, 16], strides = [1, 1]} : vector<2x48xf32> to vector<2x16xf32>
    %99 = arith.addf %97, %98 : vector<2x16xf32>
    %100 = arith.negf %99 : vector<2x16xf32>
    %101 = math.exp %100 : vector<2x16xf32>
    %cst_32 = arith.constant 1.000000e+00 : f32
    %102 = vector.broadcast %cst_32 : f32 to vector<2x16xf32>
    %103 = arith.addf %102, %101 : vector<2x16xf32>
    %104 = arith.divf %102, %103 : vector<2x16xf32>
    %105 = vector.extract_strided_slice %47 {offsets = [0, 32], sizes = [2, 16], strides = [1, 1]} : vector<2x48xf32> to vector<2x16xf32>
    %106 = vector.extract_strided_slice %88 {offsets = [0, 32], sizes = [2, 16], strides = [1, 1]} : vector<2x48xf32> to vector<2x16xf32>
    %107 = arith.addf %106, %82 : vector<2x16xf32>
    %108 = arith.mulf %96, %107 : vector<2x16xf32>
    %109 = arith.addf %105, %108 : vector<2x16xf32>
    %110 = math.tanh %109 : vector<2x16xf32>
    %cst_33 = arith.constant 1.000000e+00 : f32
    %111 = vector.broadcast %cst_33 : f32 to vector<2x16xf32>
    %112 = arith.subf %111, %104 : vector<2x16xf32>
    %113 = arith.mulf %112, %110 : vector<2x16xf32>
    %114 = arith.mulf %104, %86 : vector<2x16xf32>
    %115 = arith.addf %113, %114 : vector<2x16xf32>
    %cst_34 = arith.constant dense<0.000000e+00> : vector<2x48xf32>
    %116 = tpu.matmul %87, %79, %cst_34 {dimension_numbers = #tpu.dot_dimension_numbers<[1], [0], [0], [1], [0, 0, 1, 1], [], []>} : vector<2x16xf32>, vector<16x48xf32>, vector<2x48xf32> -> vector<2x48xf32>
    %117 = vector.extract_strided_slice %77 {offsets = [0, 0], sizes = [2, 16], strides = [1, 1]} : vector<2x48xf32> to vector<2x16xf32>
    %118 = vector.extract_strided_slice %116 {offsets = [0, 0], sizes = [2, 16], strides = [1, 1]} : vector<2x48xf32> to vector<2x16xf32>
    %119 = arith.addf %117, %118 : vector<2x16xf32>
    %120 = arith.negf %119 : vector<2x16xf32>
    %121 = math.exp %120 : vector<2x16xf32>
    %cst_35 = arith.constant 1.000000e+00 : f32
    %122 = vector.broadcast %cst_35 : f32 to vector<2x16xf32>
    %123 = arith.addf %122, %121 : vector<2x16xf32>
    %124 = arith.divf %122, %123 : vector<2x16xf32>
    %125 = vector.extract_strided_slice %77 {offsets = [0, 16], sizes = [2, 16], strides = [1, 1]} : vector<2x48xf32> to vector<2x16xf32>
    %126 = vector.extract_strided_slice %116 {offsets = [0, 16], sizes = [2, 16], strides = [1, 1]} : vector<2x48xf32> to vector<2x16xf32>
    %127 = arith.addf %125, %126 : vector<2x16xf32>
    %128 = arith.negf %127 : vector<2x16xf32>
    %129 = math.exp %128 : vector<2x16xf32>
    %cst_36 = arith.constant 1.000000e+00 : f32
    %130 = vector.broadcast %cst_36 : f32 to vector<2x16xf32>
    %131 = arith.addf %130, %129 : vector<2x16xf32>
    %132 = arith.divf %130, %131 : vector<2x16xf32>
    %133 = vector.extract_strided_slice %77 {offsets = [0, 32], sizes = [2, 16], strides = [1, 1]} : vector<2x48xf32> to vector<2x16xf32>
    %134 = vector.extract_strided_slice %116 {offsets = [0, 32], sizes = [2, 16], strides = [1, 1]} : vector<2x48xf32> to vector<2x16xf32>
    %135 = arith.addf %134, %85 : vector<2x16xf32>
    %136 = arith.mulf %124, %135 : vector<2x16xf32>
    %137 = arith.addf %133, %136 : vector<2x16xf32>
    %138 = math.tanh %137 : vector<2x16xf32>
    %cst_37 = arith.constant 1.000000e+00 : f32
    %139 = vector.broadcast %cst_37 : f32 to vector<2x16xf32>
    %140 = arith.subf %139, %132 : vector<2x16xf32>
    %141 = arith.mulf %140, %138 : vector<2x16xf32>
    %142 = arith.mulf %132, %87 : vector<2x16xf32>
    %143 = arith.addf %141, %142 : vector<2x16xf32>
    %cst_38 = arith.constant dense<0.000000e+00> : vector<2x48xf32>
    %144 = tpu.matmul %115, %78, %cst_38 {dimension_numbers = #tpu.dot_dimension_numbers<[1], [0], [0], [1], [0, 0, 1, 1], [], []>} : vector<2x16xf32>, vector<16x48xf32>, vector<2x48xf32> -> vector<2x48xf32>
    %145 = vector.extract_strided_slice %49 {offsets = [0, 0], sizes = [2, 16], strides = [1, 1]} : vector<2x48xf32> to vector<2x16xf32>
    %146 = vector.extract_strided_slice %144 {offsets = [0, 0], sizes = [2, 16], strides = [1, 1]} : vector<2x48xf32> to vector<2x16xf32>
    %147 = arith.addf %145, %146 : vector<2x16xf32>
    %148 = arith.negf %147 : vector<2x16xf32>
    %149 = math.exp %148 : vector<2x16xf32>
    %cst_39 = arith.constant 1.000000e+00 : f32
    %150 = vector.broadcast %cst_39 : f32 to vector<2x16xf32>
    %151 = arith.addf %150, %149 : vector<2x16xf32>
    %152 = arith.divf %150, %151 : vector<2x16xf32>
    %153 = vector.extract_strided_slice %49 {offsets = [0, 16], sizes = [2, 16], strides = [1, 1]} : vector<2x48xf32> to vector<2x16xf32>
    %154 = vector.extract_strided_slice %144 {offsets = [0, 16], sizes = [2, 16], strides = [1, 1]} : vector<2x48xf32> to vector<2x16xf32>
    %155 = arith.addf %153, %154 : vector<2x16xf32>
    %156 = arith.negf %155 : vector<2x16xf32>
    %157 = math.exp %156 : vector<2x16xf32>
    %cst_40 = arith.constant 1.000000e+00 : f32
    %158 = vector.broadcast %cst_40 : f32 to vector<2x16xf32>
    %159 = arith.addf %158, %157 : vector<2x16xf32>
    %160 = arith.divf %158, %159 : vector<2x16xf32>
    %161 = vector.extract_strided_slice %49 {offsets = [0, 32], sizes = [2, 16], strides = [1, 1]} : vector<2x48xf32> to vector<2x16xf32>
    %162 = vector.extract_strided_slice %144 {offsets = [0, 32], sizes = [2, 16], strides = [1, 1]} : vector<2x48xf32> to vector<2x16xf32>
    %163 = arith.addf %162, %82 : vector<2x16xf32>
    %164 = arith.mulf %152, %163 : vector<2x16xf32>
    %165 = arith.addf %161, %164 : vector<2x16xf32>
    %166 = math.tanh %165 : vector<2x16xf32>
    %cst_41 = arith.constant 1.000000e+00 : f32
    %167 = vector.broadcast %cst_41 : f32 to vector<2x16xf32>
    %168 = arith.subf %167, %160 : vector<2x16xf32>
    %169 = arith.mulf %168, %166 : vector<2x16xf32>
    %170 = arith.mulf %160, %115 : vector<2x16xf32>
    %171 = arith.addf %169, %170 : vector<2x16xf32>
    %cst_42 = arith.constant dense<0.000000e+00> : vector<2x48xf32>
    %172 = tpu.matmul %143, %79, %cst_42 {dimension_numbers = #tpu.dot_dimension_numbers<[1], [0], [0], [1], [0, 0, 1, 1], [], []>} : vector<2x16xf32>, vector<16x48xf32>, vector<2x48xf32> -> vector<2x48xf32>
    %173 = vector.extract_strided_slice %75 {offsets = [0, 0], sizes = [2, 16], strides = [1, 1]} : vector<2x48xf32> to vector<2x16xf32>
    %174 = vector.extract_strided_slice %172 {offsets = [0, 0], sizes = [2, 16], strides = [1, 1]} : vector<2x48xf32> to vector<2x16xf32>
    %175 = arith.addf %173, %174 : vector<2x16xf32>
    %176 = arith.negf %175 : vector<2x16xf32>
    %177 = math.exp %176 : vector<2x16xf32>
    %cst_43 = arith.constant 1.000000e+00 : f32
    %178 = vector.broadcast %cst_43 : f32 to vector<2x16xf32>
    %179 = arith.addf %178, %177 : vector<2x16xf32>
    %180 = arith.divf %178, %179 : vector<2x16xf32>
    %181 = vector.extract_strided_slice %75 {offsets = [0, 16], sizes = [2, 16], strides = [1, 1]} : vector<2x48xf32> to vector<2x16xf32>
    %182 = vector.extract_strided_slice %172 {offsets = [0, 16], sizes = [2, 16], strides = [1, 1]} : vector<2x48xf32> to vector<2x16xf32>
    %183 = arith.addf %181, %182 : vector<2x16xf32>
    %184 = arith.negf %183 : vector<2x16xf32>
    %185 = math.exp %184 : vector<2x16xf32>
    %cst_44 = arith.constant 1.000000e+00 : f32
    %186 = vector.broadcast %cst_44 : f32 to vector<2x16xf32>
    %187 = arith.addf %186, %185 : vector<2x16xf32>
    %188 = arith.divf %186, %187 : vector<2x16xf32>
    %189 = vector.extract_strided_slice %75 {offsets = [0, 32], sizes = [2, 16], strides = [1, 1]} : vector<2x48xf32> to vector<2x16xf32>
    %190 = vector.extract_strided_slice %172 {offsets = [0, 32], sizes = [2, 16], strides = [1, 1]} : vector<2x48xf32> to vector<2x16xf32>
    %191 = arith.addf %190, %85 : vector<2x16xf32>
    %192 = arith.mulf %180, %191 : vector<2x16xf32>
    %193 = arith.addf %189, %192 : vector<2x16xf32>
    %194 = math.tanh %193 : vector<2x16xf32>
    %cst_45 = arith.constant 1.000000e+00 : f32
    %195 = vector.broadcast %cst_45 : f32 to vector<2x16xf32>
    %196 = arith.subf %195, %188 : vector<2x16xf32>
    %197 = arith.mulf %196, %194 : vector<2x16xf32>
    %198 = arith.mulf %188, %143 : vector<2x16xf32>
    %199 = arith.addf %197, %198 : vector<2x16xf32>
    %cst_46 = arith.constant dense<0.000000e+00> : vector<2x48xf32>
    %200 = tpu.matmul %171, %78, %cst_46 {dimension_numbers = #tpu.dot_dimension_numbers<[1], [0], [0], [1], [0, 0, 1, 1], [], []>} : vector<2x16xf32>, vector<16x48xf32>, vector<2x48xf32> -> vector<2x48xf32>
    %201 = vector.extract_strided_slice %51 {offsets = [0, 0], sizes = [2, 16], strides = [1, 1]} : vector<2x48xf32> to vector<2x16xf32>
    %202 = vector.extract_strided_slice %200 {offsets = [0, 0], sizes = [2, 16], strides = [1, 1]} : vector<2x48xf32> to vector<2x16xf32>
    %203 = arith.addf %201, %202 : vector<2x16xf32>
    %204 = arith.negf %203 : vector<2x16xf32>
    %205 = math.exp %204 : vector<2x16xf32>
    %cst_47 = arith.constant 1.000000e+00 : f32
    %206 = vector.broadcast %cst_47 : f32 to vector<2x16xf32>
    %207 = arith.addf %206, %205 : vector<2x16xf32>
    %208 = arith.divf %206, %207 : vector<2x16xf32>
    %209 = vector.extract_strided_slice %51 {offsets = [0, 16], sizes = [2, 16], strides = [1, 1]} : vector<2x48xf32> to vector<2x16xf32>
    %210 = vector.extract_strided_slice %200 {offsets = [0, 16], sizes = [2, 16], strides = [1, 1]} : vector<2x48xf32> to vector<2x16xf32>
    %211 = arith.addf %209, %210 : vector<2x16xf32>
    %212 = arith.negf %211 : vector<2x16xf32>
    %213 = math.exp %212 : vector<2x16xf32>
    %cst_48 = arith.constant 1.000000e+00 : f32
    %214 = vector.broadcast %cst_48 : f32 to vector<2x16xf32>
    %215 = arith.addf %214, %213 : vector<2x16xf32>
    %216 = arith.divf %214, %215 : vector<2x16xf32>
    %217 = vector.extract_strided_slice %51 {offsets = [0, 32], sizes = [2, 16], strides = [1, 1]} : vector<2x48xf32> to vector<2x16xf32>
    %218 = vector.extract_strided_slice %200 {offsets = [0, 32], sizes = [2, 16], strides = [1, 1]} : vector<2x48xf32> to vector<2x16xf32>
    %219 = arith.addf %218, %82 : vector<2x16xf32>
    %220 = arith.mulf %208, %219 : vector<2x16xf32>
    %221 = arith.addf %217, %220 : vector<2x16xf32>
    %222 = math.tanh %221 : vector<2x16xf32>
    %cst_49 = arith.constant 1.000000e+00 : f32
    %223 = vector.broadcast %cst_49 : f32 to vector<2x16xf32>
    %224 = arith.subf %223, %216 : vector<2x16xf32>
    %225 = arith.mulf %224, %222 : vector<2x16xf32>
    %226 = arith.mulf %216, %171 : vector<2x16xf32>
    %227 = arith.addf %225, %226 : vector<2x16xf32>
    %cst_50 = arith.constant dense<0.000000e+00> : vector<2x48xf32>
    %228 = tpu.matmul %199, %79, %cst_50 {dimension_numbers = #tpu.dot_dimension_numbers<[1], [0], [0], [1], [0, 0, 1, 1], [], []>} : vector<2x16xf32>, vector<16x48xf32>, vector<2x48xf32> -> vector<2x48xf32>
    %229 = vector.extract_strided_slice %73 {offsets = [0, 0], sizes = [2, 16], strides = [1, 1]} : vector<2x48xf32> to vector<2x16xf32>
    %230 = vector.extract_strided_slice %228 {offsets = [0, 0], sizes = [2, 16], strides = [1, 1]} : vector<2x48xf32> to vector<2x16xf32>
    %231 = arith.addf %229, %230 : vector<2x16xf32>
    %232 = arith.negf %231 : vector<2x16xf32>
    %233 = math.exp %232 : vector<2x16xf32>
    %cst_51 = arith.constant 1.000000e+00 : f32
    %234 = vector.broadcast %cst_51 : f32 to vector<2x16xf32>
    %235 = arith.addf %234, %233 : vector<2x16xf32>
    %236 = arith.divf %234, %235 : vector<2x16xf32>
    %237 = vector.extract_strided_slice %73 {offsets = [0, 16], sizes = [2, 16], strides = [1, 1]} : vector<2x48xf32> to vector<2x16xf32>
    %238 = vector.extract_strided_slice %228 {offsets = [0, 16], sizes = [2, 16], strides = [1, 1]} : vector<2x48xf32> to vector<2x16xf32>
    %239 = arith.addf %237, %238 : vector<2x16xf32>
    %240 = arith.negf %239 : vector<2x16xf32>
    %241 = math.exp %240 : vector<2x16xf32>
    %cst_52 = arith.constant 1.000000e+00 : f32
    %242 = vector.broadcast %cst_52 : f32 to vector<2x16xf32>
    %243 = arith.addf %242, %241 : vector<2x16xf32>
    %244 = arith.divf %242, %243 : vector<2x16xf32>
    %245 = vector.extract_strided_slice %73 {offsets = [0, 32], sizes = [2, 16], strides = [1, 1]} : vector<2x48xf32> to vector<2x16xf32>
    %246 = vector.extract_strided_slice %228 {offsets = [0, 32], sizes = [2, 16], strides = [1, 1]} : vector<2x48xf32> to vector<2x16xf32>
    %247 = arith.addf %246, %85 : vector<2x16xf32>
    %248 = arith.mulf %236, %247 : vector<2x16xf32>
    %249 = arith.addf %245, %248 : vector<2x16xf32>
    %250 = math.tanh %249 : vector<2x16xf32>
    %cst_53 = arith.constant 1.000000e+00 : f32
    %251 = vector.broadcast %cst_53 : f32 to vector<2x16xf32>
    %252 = arith.subf %251, %244 : vector<2x16xf32>
    %253 = arith.mulf %252, %250 : vector<2x16xf32>
    %254 = arith.mulf %244, %199 : vector<2x16xf32>
    %255 = arith.addf %253, %254 : vector<2x16xf32>
    %cst_54 = arith.constant dense<0.000000e+00> : vector<2x48xf32>
    %256 = tpu.matmul %227, %78, %cst_54 {dimension_numbers = #tpu.dot_dimension_numbers<[1], [0], [0], [1], [0, 0, 1, 1], [], []>} : vector<2x16xf32>, vector<16x48xf32>, vector<2x48xf32> -> vector<2x48xf32>
    %257 = vector.extract_strided_slice %53 {offsets = [0, 0], sizes = [2, 16], strides = [1, 1]} : vector<2x48xf32> to vector<2x16xf32>
    %258 = vector.extract_strided_slice %256 {offsets = [0, 0], sizes = [2, 16], strides = [1, 1]} : vector<2x48xf32> to vector<2x16xf32>
    %259 = arith.addf %257, %258 : vector<2x16xf32>
    %260 = arith.negf %259 : vector<2x16xf32>
    %261 = math.exp %260 : vector<2x16xf32>
    %cst_55 = arith.constant 1.000000e+00 : f32
    %262 = vector.broadcast %cst_55 : f32 to vector<2x16xf32>
    %263 = arith.addf %262, %261 : vector<2x16xf32>
    %264 = arith.divf %262, %263 : vector<2x16xf32>
    %265 = vector.extract_strided_slice %53 {offsets = [0, 16], sizes = [2, 16], strides = [1, 1]} : vector<2x48xf32> to vector<2x16xf32>
    %266 = vector.extract_strided_slice %256 {offsets = [0, 16], sizes = [2, 16], strides = [1, 1]} : vector<2x48xf32> to vector<2x16xf32>
    %267 = arith.addf %265, %266 : vector<2x16xf32>
    %268 = arith.negf %267 : vector<2x16xf32>
    %269 = math.exp %268 : vector<2x16xf32>
    %cst_56 = arith.constant 1.000000e+00 : f32
    %270 = vector.broadcast %cst_56 : f32 to vector<2x16xf32>
    %271 = arith.addf %270, %269 : vector<2x16xf32>
    %272 = arith.divf %270, %271 : vector<2x16xf32>
    %273 = vector.extract_strided_slice %53 {offsets = [0, 32], sizes = [2, 16], strides = [1, 1]} : vector<2x48xf32> to vector<2x16xf32>
    %274 = vector.extract_strided_slice %256 {offsets = [0, 32], sizes = [2, 16], strides = [1, 1]} : vector<2x48xf32> to vector<2x16xf32>
    %275 = arith.addf %274, %82 : vector<2x16xf32>
    %276 = arith.mulf %264, %275 : vector<2x16xf32>
    %277 = arith.addf %273, %276 : vector<2x16xf32>
    %278 = math.tanh %277 : vector<2x16xf32>
    %cst_57 = arith.constant 1.000000e+00 : f32
    %279 = vector.broadcast %cst_57 : f32 to vector<2x16xf32>
    %280 = arith.subf %279, %272 : vector<2x16xf32>
    %281 = arith.mulf %280, %278 : vector<2x16xf32>
    %282 = arith.mulf %272, %227 : vector<2x16xf32>
    %283 = arith.addf %281, %282 : vector<2x16xf32>
    %cst_58 = arith.constant dense<0.000000e+00> : vector<2x48xf32>
    %284 = tpu.matmul %255, %79, %cst_58 {dimension_numbers = #tpu.dot_dimension_numbers<[1], [0], [0], [1], [0, 0, 1, 1], [], []>} : vector<2x16xf32>, vector<16x48xf32>, vector<2x48xf32> -> vector<2x48xf32>
    %285 = vector.extract_strided_slice %71 {offsets = [0, 0], sizes = [2, 16], strides = [1, 1]} : vector<2x48xf32> to vector<2x16xf32>
    %286 = vector.extract_strided_slice %284 {offsets = [0, 0], sizes = [2, 16], strides = [1, 1]} : vector<2x48xf32> to vector<2x16xf32>
    %287 = arith.addf %285, %286 : vector<2x16xf32>
    %288 = arith.negf %287 : vector<2x16xf32>
    %289 = math.exp %288 : vector<2x16xf32>
    %cst_59 = arith.constant 1.000000e+00 : f32
    %290 = vector.broadcast %cst_59 : f32 to vector<2x16xf32>
    %291 = arith.addf %290, %289 : vector<2x16xf32>
    %292 = arith.divf %290, %291 : vector<2x16xf32>
    %293 = vector.extract_strided_slice %71 {offsets = [0, 16], sizes = [2, 16], strides = [1, 1]} : vector<2x48xf32> to vector<2x16xf32>
    %294 = vector.extract_strided_slice %284 {offsets = [0, 16], sizes = [2, 16], strides = [1, 1]} : vector<2x48xf32> to vector<2x16xf32>
    %295 = arith.addf %293, %294 : vector<2x16xf32>
    %296 = arith.negf %295 : vector<2x16xf32>
    %297 = math.exp %296 : vector<2x16xf32>
    %cst_60 = arith.constant 1.000000e+00 : f32
    %298 = vector.broadcast %cst_60 : f32 to vector<2x16xf32>
    %299 = arith.addf %298, %297 : vector<2x16xf32>
    %300 = arith.divf %298, %299 : vector<2x16xf32>
    %301 = vector.extract_strided_slice %71 {offsets = [0, 32], sizes = [2, 16], strides = [1, 1]} : vector<2x48xf32> to vector<2x16xf32>
    %302 = vector.extract_strided_slice %284 {offsets = [0, 32], sizes = [2, 16], strides = [1, 1]} : vector<2x48xf32> to vector<2x16xf32>
    %303 = arith.addf %302, %85 : vector<2x16xf32>
    %304 = arith.mulf %292, %303 : vector<2x16xf32>
    %305 = arith.addf %301, %304 : vector<2x16xf32>
    %306 = math.tanh %305 : vector<2x16xf32>
    %cst_61 = arith.constant 1.000000e+00 : f32
    %307 = vector.broadcast %cst_61 : f32 to vector<2x16xf32>
    %308 = arith.subf %307, %300 : vector<2x16xf32>
    %309 = arith.mulf %308, %306 : vector<2x16xf32>
    %310 = arith.mulf %300, %255 : vector<2x16xf32>
    %311 = arith.addf %309, %310 : vector<2x16xf32>
    %cst_62 = arith.constant dense<0.000000e+00> : vector<2x48xf32>
    %312 = tpu.matmul %283, %78, %cst_62 {dimension_numbers = #tpu.dot_dimension_numbers<[1], [0], [0], [1], [0, 0, 1, 1], [], []>} : vector<2x16xf32>, vector<16x48xf32>, vector<2x48xf32> -> vector<2x48xf32>
    %313 = vector.extract_strided_slice %55 {offsets = [0, 0], sizes = [2, 16], strides = [1, 1]} : vector<2x48xf32> to vector<2x16xf32>
    %314 = vector.extract_strided_slice %312 {offsets = [0, 0], sizes = [2, 16], strides = [1, 1]} : vector<2x48xf32> to vector<2x16xf32>
    %315 = arith.addf %313, %314 : vector<2x16xf32>
    %316 = arith.negf %315 : vector<2x16xf32>
    %317 = math.exp %316 : vector<2x16xf32>
    %cst_63 = arith.constant 1.000000e+00 : f32
    %318 = vector.broadcast %cst_63 : f32 to vector<2x16xf32>
    %319 = arith.addf %318, %317 : vector<2x16xf32>
    %320 = arith.divf %318, %319 : vector<2x16xf32>
    %321 = vector.extract_strided_slice %55 {offsets = [0, 16], sizes = [2, 16], strides = [1, 1]} : vector<2x48xf32> to vector<2x16xf32>
    %322 = vector.extract_strided_slice %312 {offsets = [0, 16], sizes = [2, 16], strides = [1, 1]} : vector<2x48xf32> to vector<2x16xf32>
    %323 = arith.addf %321, %322 : vector<2x16xf32>
    %324 = arith.negf %323 : vector<2x16xf32>
    %325 = math.exp %324 : vector<2x16xf32>
    %cst_64 = arith.constant 1.000000e+00 : f32
    %326 = vector.broadcast %cst_64 : f32 to vector<2x16xf32>
    %327 = arith.addf %326, %325 : vector<2x16xf32>
    %328 = arith.divf %326, %327 : vector<2x16xf32>
    %329 = vector.extract_strided_slice %55 {offsets = [0, 32], sizes = [2, 16], strides = [1, 1]} : vector<2x48xf32> to vector<2x16xf32>
    %330 = vector.extract_strided_slice %312 {offsets = [0, 32], sizes = [2, 16], strides = [1, 1]} : vector<2x48xf32> to vector<2x16xf32>
    %331 = arith.addf %330, %82 : vector<2x16xf32>
    %332 = arith.mulf %320, %331 : vector<2x16xf32>
    %333 = arith.addf %329, %332 : vector<2x16xf32>
    %334 = math.tanh %333 : vector<2x16xf32>
    %cst_65 = arith.constant 1.000000e+00 : f32
    %335 = vector.broadcast %cst_65 : f32 to vector<2x16xf32>
    %336 = arith.subf %335, %328 : vector<2x16xf32>
    %337 = arith.mulf %336, %334 : vector<2x16xf32>
    %338 = arith.mulf %328, %283 : vector<2x16xf32>
    %339 = arith.addf %337, %338 : vector<2x16xf32>
    %cst_66 = arith.constant dense<0.000000e+00> : vector<2x48xf32>
    %340 = tpu.matmul %311, %79, %cst_66 {dimension_numbers = #tpu.dot_dimension_numbers<[1], [0], [0], [1], [0, 0, 1, 1], [], []>} : vector<2x16xf32>, vector<16x48xf32>, vector<2x48xf32> -> vector<2x48xf32>
    %341 = vector.extract_strided_slice %69 {offsets = [0, 0], sizes = [2, 16], strides = [1, 1]} : vector<2x48xf32> to vector<2x16xf32>
    %342 = vector.extract_strided_slice %340 {offsets = [0, 0], sizes = [2, 16], strides = [1, 1]} : vector<2x48xf32> to vector<2x16xf32>
    %343 = arith.addf %341, %342 : vector<2x16xf32>
    %344 = arith.negf %343 : vector<2x16xf32>
    %345 = math.exp %344 : vector<2x16xf32>
    %cst_67 = arith.constant 1.000000e+00 : f32
    %346 = vector.broadcast %cst_67 : f32 to vector<2x16xf32>
    %347 = arith.addf %346, %345 : vector<2x16xf32>
    %348 = arith.divf %346, %347 : vector<2x16xf32>
    %349 = vector.extract_strided_slice %69 {offsets = [0, 16], sizes = [2, 16], strides = [1, 1]} : vector<2x48xf32> to vector<2x16xf32>
    %350 = vector.extract_strided_slice %340 {offsets = [0, 16], sizes = [2, 16], strides = [1, 1]} : vector<2x48xf32> to vector<2x16xf32>
    %351 = arith.addf %349, %350 : vector<2x16xf32>
    %352 = arith.negf %351 : vector<2x16xf32>
    %353 = math.exp %352 : vector<2x16xf32>
    %cst_68 = arith.constant 1.000000e+00 : f32
    %354 = vector.broadcast %cst_68 : f32 to vector<2x16xf32>
    %355 = arith.addf %354, %353 : vector<2x16xf32>
    %356 = arith.divf %354, %355 : vector<2x16xf32>
    %357 = vector.extract_strided_slice %69 {offsets = [0, 32], sizes = [2, 16], strides = [1, 1]} : vector<2x48xf32> to vector<2x16xf32>
    %358 = vector.extract_strided_slice %340 {offsets = [0, 32], sizes = [2, 16], strides = [1, 1]} : vector<2x48xf32> to vector<2x16xf32>
    %359 = arith.addf %358, %85 : vector<2x16xf32>
    %360 = arith.mulf %348, %359 : vector<2x16xf32>
    %361 = arith.addf %357, %360 : vector<2x16xf32>
    %362 = math.tanh %361 : vector<2x16xf32>
    %cst_69 = arith.constant 1.000000e+00 : f32
    %363 = vector.broadcast %cst_69 : f32 to vector<2x16xf32>
    %364 = arith.subf %363, %356 : vector<2x16xf32>
    %365 = arith.mulf %364, %362 : vector<2x16xf32>
    %366 = arith.mulf %356, %311 : vector<2x16xf32>
    %367 = arith.addf %365, %366 : vector<2x16xf32>
    %cst_70 = arith.constant dense<0.000000e+00> : vector<2x48xf32>
    %368 = tpu.matmul %339, %78, %cst_70 {dimension_numbers = #tpu.dot_dimension_numbers<[1], [0], [0], [1], [0, 0, 1, 1], [], []>} : vector<2x16xf32>, vector<16x48xf32>, vector<2x48xf32> -> vector<2x48xf32>
    %369 = vector.extract_strided_slice %57 {offsets = [0, 0], sizes = [2, 16], strides = [1, 1]} : vector<2x48xf32> to vector<2x16xf32>
    %370 = vector.extract_strided_slice %368 {offsets = [0, 0], sizes = [2, 16], strides = [1, 1]} : vector<2x48xf32> to vector<2x16xf32>
    %371 = arith.addf %369, %370 : vector<2x16xf32>
    %372 = arith.negf %371 : vector<2x16xf32>
    %373 = math.exp %372 : vector<2x16xf32>
    %cst_71 = arith.constant 1.000000e+00 : f32
    %374 = vector.broadcast %cst_71 : f32 to vector<2x16xf32>
    %375 = arith.addf %374, %373 : vector<2x16xf32>
    %376 = arith.divf %374, %375 : vector<2x16xf32>
    %377 = vector.extract_strided_slice %57 {offsets = [0, 16], sizes = [2, 16], strides = [1, 1]} : vector<2x48xf32> to vector<2x16xf32>
    %378 = vector.extract_strided_slice %368 {offsets = [0, 16], sizes = [2, 16], strides = [1, 1]} : vector<2x48xf32> to vector<2x16xf32>
    %379 = arith.addf %377, %378 : vector<2x16xf32>
    %380 = arith.negf %379 : vector<2x16xf32>
    %381 = math.exp %380 : vector<2x16xf32>
    %cst_72 = arith.constant 1.000000e+00 : f32
    %382 = vector.broadcast %cst_72 : f32 to vector<2x16xf32>
    %383 = arith.addf %382, %381 : vector<2x16xf32>
    %384 = arith.divf %382, %383 : vector<2x16xf32>
    %385 = vector.extract_strided_slice %57 {offsets = [0, 32], sizes = [2, 16], strides = [1, 1]} : vector<2x48xf32> to vector<2x16xf32>
    %386 = vector.extract_strided_slice %368 {offsets = [0, 32], sizes = [2, 16], strides = [1, 1]} : vector<2x48xf32> to vector<2x16xf32>
    %387 = arith.addf %386, %82 : vector<2x16xf32>
    %388 = arith.mulf %376, %387 : vector<2x16xf32>
    %389 = arith.addf %385, %388 : vector<2x16xf32>
    %390 = math.tanh %389 : vector<2x16xf32>
    %cst_73 = arith.constant 1.000000e+00 : f32
    %391 = vector.broadcast %cst_73 : f32 to vector<2x16xf32>
    %392 = arith.subf %391, %384 : vector<2x16xf32>
    %393 = arith.mulf %392, %390 : vector<2x16xf32>
    %394 = arith.mulf %384, %339 : vector<2x16xf32>
    %395 = arith.addf %393, %394 : vector<2x16xf32>
    %cst_74 = arith.constant dense<0.000000e+00> : vector<2x48xf32>
    %396 = tpu.matmul %367, %79, %cst_74 {dimension_numbers = #tpu.dot_dimension_numbers<[1], [0], [0], [1], [0, 0, 1, 1], [], []>} : vector<2x16xf32>, vector<16x48xf32>, vector<2x48xf32> -> vector<2x48xf32>
    %397 = vector.extract_strided_slice %67 {offsets = [0, 0], sizes = [2, 16], strides = [1, 1]} : vector<2x48xf32> to vector<2x16xf32>
    %398 = vector.extract_strided_slice %396 {offsets = [0, 0], sizes = [2, 16], strides = [1, 1]} : vector<2x48xf32> to vector<2x16xf32>
    %399 = arith.addf %397, %398 : vector<2x16xf32>
    %400 = arith.negf %399 : vector<2x16xf32>
    %401 = math.exp %400 : vector<2x16xf32>
    %cst_75 = arith.constant 1.000000e+00 : f32
    %402 = vector.broadcast %cst_75 : f32 to vector<2x16xf32>
    %403 = arith.addf %402, %401 : vector<2x16xf32>
    %404 = arith.divf %402, %403 : vector<2x16xf32>
    %405 = vector.extract_strided_slice %67 {offsets = [0, 16], sizes = [2, 16], strides = [1, 1]} : vector<2x48xf32> to vector<2x16xf32>
    %406 = vector.extract_strided_slice %396 {offsets = [0, 16], sizes = [2, 16], strides = [1, 1]} : vector<2x48xf32> to vector<2x16xf32>
    %407 = arith.addf %405, %406 : vector<2x16xf32>
    %408 = arith.negf %407 : vector<2x16xf32>
    %409 = math.exp %408 : vector<2x16xf32>
    %cst_76 = arith.constant 1.000000e+00 : f32
    %410 = vector.broadcast %cst_76 : f32 to vector<2x16xf32>
    %411 = arith.addf %410, %409 : vector<2x16xf32>
    %412 = arith.divf %410, %411 : vector<2x16xf32>
    %413 = vector.extract_strided_slice %67 {offsets = [0, 32], sizes = [2, 16], strides = [1, 1]} : vector<2x48xf32> to vector<2x16xf32>
    %414 = vector.extract_strided_slice %396 {offsets = [0, 32], sizes = [2, 16], strides = [1, 1]} : vector<2x48xf32> to vector<2x16xf32>
    %415 = arith.addf %414, %85 : vector<2x16xf32>
    %416 = arith.mulf %404, %415 : vector<2x16xf32>
    %417 = arith.addf %413, %416 : vector<2x16xf32>
    %418 = math.tanh %417 : vector<2x16xf32>
    %cst_77 = arith.constant 1.000000e+00 : f32
    %419 = vector.broadcast %cst_77 : f32 to vector<2x16xf32>
    %420 = arith.subf %419, %412 : vector<2x16xf32>
    %421 = arith.mulf %420, %418 : vector<2x16xf32>
    %422 = arith.mulf %412, %367 : vector<2x16xf32>
    %423 = arith.addf %421, %422 : vector<2x16xf32>
    %cst_78 = arith.constant dense<0.000000e+00> : vector<2x48xf32>
    %424 = tpu.matmul %395, %78, %cst_78 {dimension_numbers = #tpu.dot_dimension_numbers<[1], [0], [0], [1], [0, 0, 1, 1], [], []>} : vector<2x16xf32>, vector<16x48xf32>, vector<2x48xf32> -> vector<2x48xf32>
    %425 = vector.extract_strided_slice %59 {offsets = [0, 0], sizes = [2, 16], strides = [1, 1]} : vector<2x48xf32> to vector<2x16xf32>
    %426 = vector.extract_strided_slice %424 {offsets = [0, 0], sizes = [2, 16], strides = [1, 1]} : vector<2x48xf32> to vector<2x16xf32>
    %427 = arith.addf %425, %426 : vector<2x16xf32>
    %428 = arith.negf %427 : vector<2x16xf32>
    %429 = math.exp %428 : vector<2x16xf32>
    %cst_79 = arith.constant 1.000000e+00 : f32
    %430 = vector.broadcast %cst_79 : f32 to vector<2x16xf32>
    %431 = arith.addf %430, %429 : vector<2x16xf32>
    %432 = arith.divf %430, %431 : vector<2x16xf32>
    %433 = vector.extract_strided_slice %59 {offsets = [0, 16], sizes = [2, 16], strides = [1, 1]} : vector<2x48xf32> to vector<2x16xf32>
    %434 = vector.extract_strided_slice %424 {offsets = [0, 16], sizes = [2, 16], strides = [1, 1]} : vector<2x48xf32> to vector<2x16xf32>
    %435 = arith.addf %433, %434 : vector<2x16xf32>
    %436 = arith.negf %435 : vector<2x16xf32>
    %437 = math.exp %436 : vector<2x16xf32>
    %cst_80 = arith.constant 1.000000e+00 : f32
    %438 = vector.broadcast %cst_80 : f32 to vector<2x16xf32>
    %439 = arith.addf %438, %437 : vector<2x16xf32>
    %440 = arith.divf %438, %439 : vector<2x16xf32>
    %441 = vector.extract_strided_slice %59 {offsets = [0, 32], sizes = [2, 16], strides = [1, 1]} : vector<2x48xf32> to vector<2x16xf32>
    %442 = vector.extract_strided_slice %424 {offsets = [0, 32], sizes = [2, 16], strides = [1, 1]} : vector<2x48xf32> to vector<2x16xf32>
    %443 = arith.addf %442, %82 : vector<2x16xf32>
    %444 = arith.mulf %432, %443 : vector<2x16xf32>
    %445 = arith.addf %441, %444 : vector<2x16xf32>
    %446 = math.tanh %445 : vector<2x16xf32>
    %cst_81 = arith.constant 1.000000e+00 : f32
    %447 = vector.broadcast %cst_81 : f32 to vector<2x16xf32>
    %448 = arith.subf %447, %440 : vector<2x16xf32>
    %449 = arith.mulf %448, %446 : vector<2x16xf32>
    %450 = arith.mulf %440, %395 : vector<2x16xf32>
    %451 = arith.addf %449, %450 : vector<2x16xf32>
    %cst_82 = arith.constant dense<0.000000e+00> : vector<2x48xf32>
    %452 = tpu.matmul %423, %79, %cst_82 {dimension_numbers = #tpu.dot_dimension_numbers<[1], [0], [0], [1], [0, 0, 1, 1], [], []>} : vector<2x16xf32>, vector<16x48xf32>, vector<2x48xf32> -> vector<2x48xf32>
    %453 = vector.extract_strided_slice %65 {offsets = [0, 0], sizes = [2, 16], strides = [1, 1]} : vector<2x48xf32> to vector<2x16xf32>
    %454 = vector.extract_strided_slice %452 {offsets = [0, 0], sizes = [2, 16], strides = [1, 1]} : vector<2x48xf32> to vector<2x16xf32>
    %455 = arith.addf %453, %454 : vector<2x16xf32>
    %456 = arith.negf %455 : vector<2x16xf32>
    %457 = math.exp %456 : vector<2x16xf32>
    %cst_83 = arith.constant 1.000000e+00 : f32
    %458 = vector.broadcast %cst_83 : f32 to vector<2x16xf32>
    %459 = arith.addf %458, %457 : vector<2x16xf32>
    %460 = arith.divf %458, %459 : vector<2x16xf32>
    %461 = vector.extract_strided_slice %65 {offsets = [0, 16], sizes = [2, 16], strides = [1, 1]} : vector<2x48xf32> to vector<2x16xf32>
    %462 = vector.extract_strided_slice %452 {offsets = [0, 16], sizes = [2, 16], strides = [1, 1]} : vector<2x48xf32> to vector<2x16xf32>
    %463 = arith.addf %461, %462 : vector<2x16xf32>
    %464 = arith.negf %463 : vector<2x16xf32>
    %465 = math.exp %464 : vector<2x16xf32>
    %cst_84 = arith.constant 1.000000e+00 : f32
    %466 = vector.broadcast %cst_84 : f32 to vector<2x16xf32>
    %467 = arith.addf %466, %465 : vector<2x16xf32>
    %468 = arith.divf %466, %467 : vector<2x16xf32>
    %469 = vector.extract_strided_slice %65 {offsets = [0, 32], sizes = [2, 16], strides = [1, 1]} : vector<2x48xf32> to vector<2x16xf32>
    %470 = vector.extract_strided_slice %452 {offsets = [0, 32], sizes = [2, 16], strides = [1, 1]} : vector<2x48xf32> to vector<2x16xf32>
    %471 = arith.addf %470, %85 : vector<2x16xf32>
    %472 = arith.mulf %460, %471 : vector<2x16xf32>
    %473 = arith.addf %469, %472 : vector<2x16xf32>
    %474 = math.tanh %473 : vector<2x16xf32>
    %cst_85 = arith.constant 1.000000e+00 : f32
    %475 = vector.broadcast %cst_85 : f32 to vector<2x16xf32>
    %476 = arith.subf %475, %468 : vector<2x16xf32>
    %477 = arith.mulf %476, %474 : vector<2x16xf32>
    %478 = arith.mulf %468, %423 : vector<2x16xf32>
    %479 = arith.addf %477, %478 : vector<2x16xf32>
    %cst_86 = arith.constant dense<0.000000e+00> : vector<2x48xf32>
    %480 = tpu.matmul %451, %78, %cst_86 {dimension_numbers = #tpu.dot_dimension_numbers<[1], [0], [0], [1], [0, 0, 1, 1], [], []>} : vector<2x16xf32>, vector<16x48xf32>, vector<2x48xf32> -> vector<2x48xf32>
    %481 = vector.extract_strided_slice %61 {offsets = [0, 0], sizes = [2, 16], strides = [1, 1]} : vector<2x48xf32> to vector<2x16xf32>
    %482 = vector.extract_strided_slice %480 {offsets = [0, 0], sizes = [2, 16], strides = [1, 1]} : vector<2x48xf32> to vector<2x16xf32>
    %483 = arith.addf %481, %482 : vector<2x16xf32>
    %484 = arith.negf %483 : vector<2x16xf32>
    %485 = math.exp %484 : vector<2x16xf32>
    %cst_87 = arith.constant 1.000000e+00 : f32
    %486 = vector.broadcast %cst_87 : f32 to vector<2x16xf32>
    %487 = arith.addf %486, %485 : vector<2x16xf32>
    %488 = arith.divf %486, %487 : vector<2x16xf32>
    %489 = vector.extract_strided_slice %61 {offsets = [0, 16], sizes = [2, 16], strides = [1, 1]} : vector<2x48xf32> to vector<2x16xf32>
    %490 = vector.extract_strided_slice %480 {offsets = [0, 16], sizes = [2, 16], strides = [1, 1]} : vector<2x48xf32> to vector<2x16xf32>
    %491 = arith.addf %489, %490 : vector<2x16xf32>
    %492 = arith.negf %491 : vector<2x16xf32>
    %493 = math.exp %492 : vector<2x16xf32>
    %cst_88 = arith.constant 1.000000e+00 : f32
    %494 = vector.broadcast %cst_88 : f32 to vector<2x16xf32>
    %495 = arith.addf %494, %493 : vector<2x16xf32>
    %496 = arith.divf %494, %495 : vector<2x16xf32>
    %497 = vector.extract_strided_slice %61 {offsets = [0, 32], sizes = [2, 16], strides = [1, 1]} : vector<2x48xf32> to vector<2x16xf32>
    %498 = vector.extract_strided_slice %480 {offsets = [0, 32], sizes = [2, 16], strides = [1, 1]} : vector<2x48xf32> to vector<2x16xf32>
    %499 = arith.addf %498, %82 : vector<2x16xf32>
    %500 = arith.mulf %488, %499 : vector<2x16xf32>
    %501 = arith.addf %497, %500 : vector<2x16xf32>
    %502 = math.tanh %501 : vector<2x16xf32>
    %cst_89 = arith.constant 1.000000e+00 : f32
    %503 = vector.broadcast %cst_89 : f32 to vector<2x16xf32>
    %504 = arith.subf %503, %496 : vector<2x16xf32>
    %505 = arith.mulf %504, %502 : vector<2x16xf32>
    %506 = arith.mulf %496, %451 : vector<2x16xf32>
    %507 = arith.addf %505, %506 : vector<2x16xf32>
    %cst_90 = arith.constant dense<0.000000e+00> : vector<2x48xf32>
    %508 = tpu.matmul %479, %79, %cst_90 {dimension_numbers = #tpu.dot_dimension_numbers<[1], [0], [0], [1], [0, 0, 1, 1], [], []>} : vector<2x16xf32>, vector<16x48xf32>, vector<2x48xf32> -> vector<2x48xf32>
    %509 = vector.extract_strided_slice %63 {offsets = [0, 0], sizes = [2, 16], strides = [1, 1]} : vector<2x48xf32> to vector<2x16xf32>
    %510 = vector.extract_strided_slice %508 {offsets = [0, 0], sizes = [2, 16], strides = [1, 1]} : vector<2x48xf32> to vector<2x16xf32>
    %511 = arith.addf %509, %510 : vector<2x16xf32>
    %512 = arith.negf %511 : vector<2x16xf32>
    %513 = math.exp %512 : vector<2x16xf32>
    %cst_91 = arith.constant 1.000000e+00 : f32
    %514 = vector.broadcast %cst_91 : f32 to vector<2x16xf32>
    %515 = arith.addf %514, %513 : vector<2x16xf32>
    %516 = arith.divf %514, %515 : vector<2x16xf32>
    %517 = vector.extract_strided_slice %63 {offsets = [0, 16], sizes = [2, 16], strides = [1, 1]} : vector<2x48xf32> to vector<2x16xf32>
    %518 = vector.extract_strided_slice %508 {offsets = [0, 16], sizes = [2, 16], strides = [1, 1]} : vector<2x48xf32> to vector<2x16xf32>
    %519 = arith.addf %517, %518 : vector<2x16xf32>
    %520 = arith.negf %519 : vector<2x16xf32>
    %521 = math.exp %520 : vector<2x16xf32>
    %cst_92 = arith.constant 1.000000e+00 : f32
    %522 = vector.broadcast %cst_92 : f32 to vector<2x16xf32>
    %523 = arith.addf %522, %521 : vector<2x16xf32>
    %524 = arith.divf %522, %523 : vector<2x16xf32>
    %525 = vector.extract_strided_slice %63 {offsets = [0, 32], sizes = [2, 16], strides = [1, 1]} : vector<2x48xf32> to vector<2x16xf32>
    %526 = vector.extract_strided_slice %508 {offsets = [0, 32], sizes = [2, 16], strides = [1, 1]} : vector<2x48xf32> to vector<2x16xf32>
    %527 = arith.addf %526, %85 : vector<2x16xf32>
    %528 = arith.mulf %516, %527 : vector<2x16xf32>
    %529 = arith.addf %525, %528 : vector<2x16xf32>
    %530 = math.tanh %529 : vector<2x16xf32>
    %cst_93 = arith.constant 1.000000e+00 : f32
    %531 = vector.broadcast %cst_93 : f32 to vector<2x16xf32>
    %532 = arith.subf %531, %524 : vector<2x16xf32>
    %533 = arith.mulf %532, %530 : vector<2x16xf32>
    %534 = arith.mulf %524, %479 : vector<2x16xf32>
    %535 = arith.addf %533, %534 : vector<2x16xf32>
    %536 = tpu.concatenate %115, %171, %227, %283, %339, %395, %451, %507 in 0 : vector<2x16xf32>, vector<2x16xf32>, vector<2x16xf32>, vector<2x16xf32>, vector<2x16xf32>, vector<2x16xf32>, vector<2x16xf32>, vector<2x16xf32> -> vector<16x16xf32>
    %537 = tpu.concatenate %535, %479, %423, %367, %311, %255, %199, %143 in 0 : vector<2x16xf32>, vector<2x16xf32>, vector<2x16xf32>, vector<2x16xf32>, vector<2x16xf32>, vector<2x16xf32>, vector<2x16xf32>, vector<2x16xf32> -> vector<16x16xf32>
    %c128 = arith.constant 128 : index
    %c0_94 = arith.constant 0 : index
    %538 = vector.load %arg1[%c128, %c0_94] : memref<256x128xbf16, #tpu.memory_space<vmem>>, vector<16x48xbf16>
    %539 = arith.truncf %536 : vector<16x16xf32> to vector<16x16xbf16>
    %cst_95 = arith.constant dense<0.000000e+00> : vector<16x48xf32>
    %540 = tpu.matmul %539, %538, %cst_95 {dimension_numbers = #tpu.dot_dimension_numbers<[1], [0], [0], [1], [0, 0, 1, 1], [], []>} : vector<16x16xbf16>, vector<16x48xbf16>, vector<16x48xf32> -> vector<16x48xf32>
    %c144 = arith.constant 144 : index
    %c0_96 = arith.constant 0 : index
    %541 = vector.load %arg1[%c144, %c0_96] : memref<256x128xbf16, #tpu.memory_space<vmem>>, vector<16x48xbf16>
    %542 = arith.truncf %537 : vector<16x16xf32> to vector<16x16xbf16>
    %cst_97 = arith.constant dense<0.000000e+00> : vector<16x48xf32>
    %543 = tpu.matmul %542, %541, %cst_97 {dimension_numbers = #tpu.dot_dimension_numbers<[1], [0], [0], [1], [0, 0, 1, 1], [], []>} : vector<16x16xbf16>, vector<16x48xbf16>, vector<16x48xf32> -> vector<16x48xf32>
    %544 = arith.addf %540, %543 : vector<16x48xf32>
    %c68 = arith.constant 68 : index
    %c0_98 = arith.constant 0 : index
    %545 = vector.load %arg2[%c68, %c0_98] : memref<80x128xf32, #tpu.memory_space<vmem>>, vector<1x48xf32>
    %546 = vector.broadcast %545 : vector<1x48xf32> to vector<16x48xf32>
    %547 = arith.addf %544, %546 : vector<16x48xf32>
    %548 = vector.extract_strided_slice %547 {offsets = [0, 0], sizes = [2, 48], strides = [1, 1]} : vector<16x48xf32> to vector<2x48xf32>
    %549 = vector.extract_strided_slice %547 {offsets = [2, 0], sizes = [2, 48], strides = [1, 1]} : vector<16x48xf32> to vector<2x48xf32>
    %550 = vector.extract_strided_slice %547 {offsets = [4, 0], sizes = [2, 48], strides = [1, 1]} : vector<16x48xf32> to vector<2x48xf32>
    %551 = vector.extract_strided_slice %547 {offsets = [6, 0], sizes = [2, 48], strides = [1, 1]} : vector<16x48xf32> to vector<2x48xf32>
    %552 = vector.extract_strided_slice %547 {offsets = [8, 0], sizes = [2, 48], strides = [1, 1]} : vector<16x48xf32> to vector<2x48xf32>
    %553 = vector.extract_strided_slice %547 {offsets = [10, 0], sizes = [2, 48], strides = [1, 1]} : vector<16x48xf32> to vector<2x48xf32>
    %554 = vector.extract_strided_slice %547 {offsets = [12, 0], sizes = [2, 48], strides = [1, 1]} : vector<16x48xf32> to vector<2x48xf32>
    %555 = vector.extract_strided_slice %547 {offsets = [14, 0], sizes = [2, 48], strides = [1, 1]} : vector<16x48xf32> to vector<2x48xf32>
    %c32_99 = arith.constant 32 : index
    %c0_100 = arith.constant 0 : index
    %556 = vector.load %arg2[%c32_99, %c0_100] : memref<80x128xf32, #tpu.memory_space<vmem>>, vector<16x48xf32>
    %c72 = arith.constant 72 : index
    %c0_101 = arith.constant 0 : index
    %557 = vector.load %arg2[%c72, %c0_101] : memref<80x128xf32, #tpu.memory_space<vmem>>, vector<1x16xf32>
    %558 = vector.shape_cast %557 : vector<1x16xf32> to vector<1x16xf32>
    %559 = vector.broadcast %558 : vector<1x16xf32> to vector<2x16xf32>
    %cst_102 = arith.constant 0.000000e+00 : f32
    %560 = vector.broadcast %cst_102 : f32 to vector<2x16xf32>
    %cst_103 = arith.constant dense<0.000000e+00> : vector<2x48xf32>
    %561 = tpu.matmul %560, %556, %cst_103 {dimension_numbers = #tpu.dot_dimension_numbers<[1], [0], [0], [1], [0, 0, 1, 1], [], []>} : vector<2x16xf32>, vector<16x48xf32>, vector<2x48xf32> -> vector<2x48xf32>
    %562 = vector.extract_strided_slice %548 {offsets = [0, 0], sizes = [2, 16], strides = [1, 1]} : vector<2x48xf32> to vector<2x16xf32>
    %563 = vector.extract_strided_slice %561 {offsets = [0, 0], sizes = [2, 16], strides = [1, 1]} : vector<2x48xf32> to vector<2x16xf32>
    %564 = arith.addf %562, %563 : vector<2x16xf32>
    %565 = arith.negf %564 : vector<2x16xf32>
    %566 = math.exp %565 : vector<2x16xf32>
    %cst_104 = arith.constant 1.000000e+00 : f32
    %567 = vector.broadcast %cst_104 : f32 to vector<2x16xf32>
    %568 = arith.addf %567, %566 : vector<2x16xf32>
    %569 = arith.divf %567, %568 : vector<2x16xf32>
    %570 = vector.extract_strided_slice %548 {offsets = [0, 16], sizes = [2, 16], strides = [1, 1]} : vector<2x48xf32> to vector<2x16xf32>
    %571 = vector.extract_strided_slice %561 {offsets = [0, 16], sizes = [2, 16], strides = [1, 1]} : vector<2x48xf32> to vector<2x16xf32>
    %572 = arith.addf %570, %571 : vector<2x16xf32>
    %573 = arith.negf %572 : vector<2x16xf32>
    %574 = math.exp %573 : vector<2x16xf32>
    %cst_105 = arith.constant 1.000000e+00 : f32
    %575 = vector.broadcast %cst_105 : f32 to vector<2x16xf32>
    %576 = arith.addf %575, %574 : vector<2x16xf32>
    %577 = arith.divf %575, %576 : vector<2x16xf32>
    %578 = vector.extract_strided_slice %548 {offsets = [0, 32], sizes = [2, 16], strides = [1, 1]} : vector<2x48xf32> to vector<2x16xf32>
    %579 = vector.extract_strided_slice %561 {offsets = [0, 32], sizes = [2, 16], strides = [1, 1]} : vector<2x48xf32> to vector<2x16xf32>
    %580 = arith.addf %579, %559 : vector<2x16xf32>
    %581 = arith.mulf %569, %580 : vector<2x16xf32>
    %582 = arith.addf %578, %581 : vector<2x16xf32>
    %583 = math.tanh %582 : vector<2x16xf32>
    %cst_106 = arith.constant 1.000000e+00 : f32
    %584 = vector.broadcast %cst_106 : f32 to vector<2x16xf32>
    %585 = arith.subf %584, %577 : vector<2x16xf32>
    %586 = arith.mulf %585, %583 : vector<2x16xf32>
    %587 = arith.mulf %577, %560 : vector<2x16xf32>
    %588 = arith.addf %586, %587 : vector<2x16xf32>
    %cst_107 = arith.constant dense<0.000000e+00> : vector<2x48xf32>
    %589 = tpu.matmul %588, %556, %cst_107 {dimension_numbers = #tpu.dot_dimension_numbers<[1], [0], [0], [1], [0, 0, 1, 1], [], []>} : vector<2x16xf32>, vector<16x48xf32>, vector<2x48xf32> -> vector<2x48xf32>
    %590 = vector.extract_strided_slice %549 {offsets = [0, 0], sizes = [2, 16], strides = [1, 1]} : vector<2x48xf32> to vector<2x16xf32>
    %591 = vector.extract_strided_slice %589 {offsets = [0, 0], sizes = [2, 16], strides = [1, 1]} : vector<2x48xf32> to vector<2x16xf32>
    %592 = arith.addf %590, %591 : vector<2x16xf32>
    %593 = arith.negf %592 : vector<2x16xf32>
    %594 = math.exp %593 : vector<2x16xf32>
    %cst_108 = arith.constant 1.000000e+00 : f32
    %595 = vector.broadcast %cst_108 : f32 to vector<2x16xf32>
    %596 = arith.addf %595, %594 : vector<2x16xf32>
    %597 = arith.divf %595, %596 : vector<2x16xf32>
    %598 = vector.extract_strided_slice %549 {offsets = [0, 16], sizes = [2, 16], strides = [1, 1]} : vector<2x48xf32> to vector<2x16xf32>
    %599 = vector.extract_strided_slice %589 {offsets = [0, 16], sizes = [2, 16], strides = [1, 1]} : vector<2x48xf32> to vector<2x16xf32>
    %600 = arith.addf %598, %599 : vector<2x16xf32>
    %601 = arith.negf %600 : vector<2x16xf32>
    %602 = math.exp %601 : vector<2x16xf32>
    %cst_109 = arith.constant 1.000000e+00 : f32
    %603 = vector.broadcast %cst_109 : f32 to vector<2x16xf32>
    %604 = arith.addf %603, %602 : vector<2x16xf32>
    %605 = arith.divf %603, %604 : vector<2x16xf32>
    %606 = vector.extract_strided_slice %549 {offsets = [0, 32], sizes = [2, 16], strides = [1, 1]} : vector<2x48xf32> to vector<2x16xf32>
    %607 = vector.extract_strided_slice %589 {offsets = [0, 32], sizes = [2, 16], strides = [1, 1]} : vector<2x48xf32> to vector<2x16xf32>
    %608 = arith.addf %607, %559 : vector<2x16xf32>
    %609 = arith.mulf %597, %608 : vector<2x16xf32>
    %610 = arith.addf %606, %609 : vector<2x16xf32>
    %611 = math.tanh %610 : vector<2x16xf32>
    %cst_110 = arith.constant 1.000000e+00 : f32
    %612 = vector.broadcast %cst_110 : f32 to vector<2x16xf32>
    %613 = arith.subf %612, %605 : vector<2x16xf32>
    %614 = arith.mulf %613, %611 : vector<2x16xf32>
    %615 = arith.mulf %605, %588 : vector<2x16xf32>
    %616 = arith.addf %614, %615 : vector<2x16xf32>
    %cst_111 = arith.constant dense<0.000000e+00> : vector<2x48xf32>
    %617 = tpu.matmul %616, %556, %cst_111 {dimension_numbers = #tpu.dot_dimension_numbers<[1], [0], [0], [1], [0, 0, 1, 1], [], []>} : vector<2x16xf32>, vector<16x48xf32>, vector<2x48xf32> -> vector<2x48xf32>
    %618 = vector.extract_strided_slice %550 {offsets = [0, 0], sizes = [2, 16], strides = [1, 1]} : vector<2x48xf32> to vector<2x16xf32>
    %619 = vector.extract_strided_slice %617 {offsets = [0, 0], sizes = [2, 16], strides = [1, 1]} : vector<2x48xf32> to vector<2x16xf32>
    %620 = arith.addf %618, %619 : vector<2x16xf32>
    %621 = arith.negf %620 : vector<2x16xf32>
    %622 = math.exp %621 : vector<2x16xf32>
    %cst_112 = arith.constant 1.000000e+00 : f32
    %623 = vector.broadcast %cst_112 : f32 to vector<2x16xf32>
    %624 = arith.addf %623, %622 : vector<2x16xf32>
    %625 = arith.divf %623, %624 : vector<2x16xf32>
    %626 = vector.extract_strided_slice %550 {offsets = [0, 16], sizes = [2, 16], strides = [1, 1]} : vector<2x48xf32> to vector<2x16xf32>
    %627 = vector.extract_strided_slice %617 {offsets = [0, 16], sizes = [2, 16], strides = [1, 1]} : vector<2x48xf32> to vector<2x16xf32>
    %628 = arith.addf %626, %627 : vector<2x16xf32>
    %629 = arith.negf %628 : vector<2x16xf32>
    %630 = math.exp %629 : vector<2x16xf32>
    %cst_113 = arith.constant 1.000000e+00 : f32
    %631 = vector.broadcast %cst_113 : f32 to vector<2x16xf32>
    %632 = arith.addf %631, %630 : vector<2x16xf32>
    %633 = arith.divf %631, %632 : vector<2x16xf32>
    %634 = vector.extract_strided_slice %550 {offsets = [0, 32], sizes = [2, 16], strides = [1, 1]} : vector<2x48xf32> to vector<2x16xf32>
    %635 = vector.extract_strided_slice %617 {offsets = [0, 32], sizes = [2, 16], strides = [1, 1]} : vector<2x48xf32> to vector<2x16xf32>
    %636 = arith.addf %635, %559 : vector<2x16xf32>
    %637 = arith.mulf %625, %636 : vector<2x16xf32>
    %638 = arith.addf %634, %637 : vector<2x16xf32>
    %639 = math.tanh %638 : vector<2x16xf32>
    %cst_114 = arith.constant 1.000000e+00 : f32
    %640 = vector.broadcast %cst_114 : f32 to vector<2x16xf32>
    %641 = arith.subf %640, %633 : vector<2x16xf32>
    %642 = arith.mulf %641, %639 : vector<2x16xf32>
    %643 = arith.mulf %633, %616 : vector<2x16xf32>
    %644 = arith.addf %642, %643 : vector<2x16xf32>
    %cst_115 = arith.constant dense<0.000000e+00> : vector<2x48xf32>
    %645 = tpu.matmul %644, %556, %cst_115 {dimension_numbers = #tpu.dot_dimension_numbers<[1], [0], [0], [1], [0, 0, 1, 1], [], []>} : vector<2x16xf32>, vector<16x48xf32>, vector<2x48xf32> -> vector<2x48xf32>
    %646 = vector.extract_strided_slice %551 {offsets = [0, 0], sizes = [2, 16], strides = [1, 1]} : vector<2x48xf32> to vector<2x16xf32>
    %647 = vector.extract_strided_slice %645 {offsets = [0, 0], sizes = [2, 16], strides = [1, 1]} : vector<2x48xf32> to vector<2x16xf32>
    %648 = arith.addf %646, %647 : vector<2x16xf32>
    %649 = arith.negf %648 : vector<2x16xf32>
    %650 = math.exp %649 : vector<2x16xf32>
    %cst_116 = arith.constant 1.000000e+00 : f32
    %651 = vector.broadcast %cst_116 : f32 to vector<2x16xf32>
    %652 = arith.addf %651, %650 : vector<2x16xf32>
    %653 = arith.divf %651, %652 : vector<2x16xf32>
    %654 = vector.extract_strided_slice %551 {offsets = [0, 16], sizes = [2, 16], strides = [1, 1]} : vector<2x48xf32> to vector<2x16xf32>
    %655 = vector.extract_strided_slice %645 {offsets = [0, 16], sizes = [2, 16], strides = [1, 1]} : vector<2x48xf32> to vector<2x16xf32>
    %656 = arith.addf %654, %655 : vector<2x16xf32>
    %657 = arith.negf %656 : vector<2x16xf32>
    %658 = math.exp %657 : vector<2x16xf32>
    %cst_117 = arith.constant 1.000000e+00 : f32
    %659 = vector.broadcast %cst_117 : f32 to vector<2x16xf32>
    %660 = arith.addf %659, %658 : vector<2x16xf32>
    %661 = arith.divf %659, %660 : vector<2x16xf32>
    %662 = vector.extract_strided_slice %551 {offsets = [0, 32], sizes = [2, 16], strides = [1, 1]} : vector<2x48xf32> to vector<2x16xf32>
    %663 = vector.extract_strided_slice %645 {offsets = [0, 32], sizes = [2, 16], strides = [1, 1]} : vector<2x48xf32> to vector<2x16xf32>
    %664 = arith.addf %663, %559 : vector<2x16xf32>
    %665 = arith.mulf %653, %664 : vector<2x16xf32>
    %666 = arith.addf %662, %665 : vector<2x16xf32>
    %667 = math.tanh %666 : vector<2x16xf32>
    %cst_118 = arith.constant 1.000000e+00 : f32
    %668 = vector.broadcast %cst_118 : f32 to vector<2x16xf32>
    %669 = arith.subf %668, %661 : vector<2x16xf32>
    %670 = arith.mulf %669, %667 : vector<2x16xf32>
    %671 = arith.mulf %661, %644 : vector<2x16xf32>
    %672 = arith.addf %670, %671 : vector<2x16xf32>
    %cst_119 = arith.constant dense<0.000000e+00> : vector<2x48xf32>
    %673 = tpu.matmul %672, %556, %cst_119 {dimension_numbers = #tpu.dot_dimension_numbers<[1], [0], [0], [1], [0, 0, 1, 1], [], []>} : vector<2x16xf32>, vector<16x48xf32>, vector<2x48xf32> -> vector<2x48xf32>
    %674 = vector.extract_strided_slice %552 {offsets = [0, 0], sizes = [2, 16], strides = [1, 1]} : vector<2x48xf32> to vector<2x16xf32>
    %675 = vector.extract_strided_slice %673 {offsets = [0, 0], sizes = [2, 16], strides = [1, 1]} : vector<2x48xf32> to vector<2x16xf32>
    %676 = arith.addf %674, %675 : vector<2x16xf32>
    %677 = arith.negf %676 : vector<2x16xf32>
    %678 = math.exp %677 : vector<2x16xf32>
    %cst_120 = arith.constant 1.000000e+00 : f32
    %679 = vector.broadcast %cst_120 : f32 to vector<2x16xf32>
    %680 = arith.addf %679, %678 : vector<2x16xf32>
    %681 = arith.divf %679, %680 : vector<2x16xf32>
    %682 = vector.extract_strided_slice %552 {offsets = [0, 16], sizes = [2, 16], strides = [1, 1]} : vector<2x48xf32> to vector<2x16xf32>
    %683 = vector.extract_strided_slice %673 {offsets = [0, 16], sizes = [2, 16], strides = [1, 1]} : vector<2x48xf32> to vector<2x16xf32>
    %684 = arith.addf %682, %683 : vector<2x16xf32>
    %685 = arith.negf %684 : vector<2x16xf32>
    %686 = math.exp %685 : vector<2x16xf32>
    %cst_121 = arith.constant 1.000000e+00 : f32
    %687 = vector.broadcast %cst_121 : f32 to vector<2x16xf32>
    %688 = arith.addf %687, %686 : vector<2x16xf32>
    %689 = arith.divf %687, %688 : vector<2x16xf32>
    %690 = vector.extract_strided_slice %552 {offsets = [0, 32], sizes = [2, 16], strides = [1, 1]} : vector<2x48xf32> to vector<2x16xf32>
    %691 = vector.extract_strided_slice %673 {offsets = [0, 32], sizes = [2, 16], strides = [1, 1]} : vector<2x48xf32> to vector<2x16xf32>
    %692 = arith.addf %691, %559 : vector<2x16xf32>
    %693 = arith.mulf %681, %692 : vector<2x16xf32>
    %694 = arith.addf %690, %693 : vector<2x16xf32>
    %695 = math.tanh %694 : vector<2x16xf32>
    %cst_122 = arith.constant 1.000000e+00 : f32
    %696 = vector.broadcast %cst_122 : f32 to vector<2x16xf32>
    %697 = arith.subf %696, %689 : vector<2x16xf32>
    %698 = arith.mulf %697, %695 : vector<2x16xf32>
    %699 = arith.mulf %689, %672 : vector<2x16xf32>
    %700 = arith.addf %698, %699 : vector<2x16xf32>
    %cst_123 = arith.constant dense<0.000000e+00> : vector<2x48xf32>
    %701 = tpu.matmul %700, %556, %cst_123 {dimension_numbers = #tpu.dot_dimension_numbers<[1], [0], [0], [1], [0, 0, 1, 1], [], []>} : vector<2x16xf32>, vector<16x48xf32>, vector<2x48xf32> -> vector<2x48xf32>
    %702 = vector.extract_strided_slice %553 {offsets = [0, 0], sizes = [2, 16], strides = [1, 1]} : vector<2x48xf32> to vector<2x16xf32>
    %703 = vector.extract_strided_slice %701 {offsets = [0, 0], sizes = [2, 16], strides = [1, 1]} : vector<2x48xf32> to vector<2x16xf32>
    %704 = arith.addf %702, %703 : vector<2x16xf32>
    %705 = arith.negf %704 : vector<2x16xf32>
    %706 = math.exp %705 : vector<2x16xf32>
    %cst_124 = arith.constant 1.000000e+00 : f32
    %707 = vector.broadcast %cst_124 : f32 to vector<2x16xf32>
    %708 = arith.addf %707, %706 : vector<2x16xf32>
    %709 = arith.divf %707, %708 : vector<2x16xf32>
    %710 = vector.extract_strided_slice %553 {offsets = [0, 16], sizes = [2, 16], strides = [1, 1]} : vector<2x48xf32> to vector<2x16xf32>
    %711 = vector.extract_strided_slice %701 {offsets = [0, 16], sizes = [2, 16], strides = [1, 1]} : vector<2x48xf32> to vector<2x16xf32>
    %712 = arith.addf %710, %711 : vector<2x16xf32>
    %713 = arith.negf %712 : vector<2x16xf32>
    %714 = math.exp %713 : vector<2x16xf32>
    %cst_125 = arith.constant 1.000000e+00 : f32
    %715 = vector.broadcast %cst_125 : f32 to vector<2x16xf32>
    %716 = arith.addf %715, %714 : vector<2x16xf32>
    %717 = arith.divf %715, %716 : vector<2x16xf32>
    %718 = vector.extract_strided_slice %553 {offsets = [0, 32], sizes = [2, 16], strides = [1, 1]} : vector<2x48xf32> to vector<2x16xf32>
    %719 = vector.extract_strided_slice %701 {offsets = [0, 32], sizes = [2, 16], strides = [1, 1]} : vector<2x48xf32> to vector<2x16xf32>
    %720 = arith.addf %719, %559 : vector<2x16xf32>
    %721 = arith.mulf %709, %720 : vector<2x16xf32>
    %722 = arith.addf %718, %721 : vector<2x16xf32>
    %723 = math.tanh %722 : vector<2x16xf32>
    %cst_126 = arith.constant 1.000000e+00 : f32
    %724 = vector.broadcast %cst_126 : f32 to vector<2x16xf32>
    %725 = arith.subf %724, %717 : vector<2x16xf32>
    %726 = arith.mulf %725, %723 : vector<2x16xf32>
    %727 = arith.mulf %717, %700 : vector<2x16xf32>
    %728 = arith.addf %726, %727 : vector<2x16xf32>
    %cst_127 = arith.constant dense<0.000000e+00> : vector<2x48xf32>
    %729 = tpu.matmul %728, %556, %cst_127 {dimension_numbers = #tpu.dot_dimension_numbers<[1], [0], [0], [1], [0, 0, 1, 1], [], []>} : vector<2x16xf32>, vector<16x48xf32>, vector<2x48xf32> -> vector<2x48xf32>
    %730 = vector.extract_strided_slice %554 {offsets = [0, 0], sizes = [2, 16], strides = [1, 1]} : vector<2x48xf32> to vector<2x16xf32>
    %731 = vector.extract_strided_slice %729 {offsets = [0, 0], sizes = [2, 16], strides = [1, 1]} : vector<2x48xf32> to vector<2x16xf32>
    %732 = arith.addf %730, %731 : vector<2x16xf32>
    %733 = arith.negf %732 : vector<2x16xf32>
    %734 = math.exp %733 : vector<2x16xf32>
    %cst_128 = arith.constant 1.000000e+00 : f32
    %735 = vector.broadcast %cst_128 : f32 to vector<2x16xf32>
    %736 = arith.addf %735, %734 : vector<2x16xf32>
    %737 = arith.divf %735, %736 : vector<2x16xf32>
    %738 = vector.extract_strided_slice %554 {offsets = [0, 16], sizes = [2, 16], strides = [1, 1]} : vector<2x48xf32> to vector<2x16xf32>
    %739 = vector.extract_strided_slice %729 {offsets = [0, 16], sizes = [2, 16], strides = [1, 1]} : vector<2x48xf32> to vector<2x16xf32>
    %740 = arith.addf %738, %739 : vector<2x16xf32>
    %741 = arith.negf %740 : vector<2x16xf32>
    %742 = math.exp %741 : vector<2x16xf32>
    %cst_129 = arith.constant 1.000000e+00 : f32
    %743 = vector.broadcast %cst_129 : f32 to vector<2x16xf32>
    %744 = arith.addf %743, %742 : vector<2x16xf32>
    %745 = arith.divf %743, %744 : vector<2x16xf32>
    %746 = vector.extract_strided_slice %554 {offsets = [0, 32], sizes = [2, 16], strides = [1, 1]} : vector<2x48xf32> to vector<2x16xf32>
    %747 = vector.extract_strided_slice %729 {offsets = [0, 32], sizes = [2, 16], strides = [1, 1]} : vector<2x48xf32> to vector<2x16xf32>
    %748 = arith.addf %747, %559 : vector<2x16xf32>
    %749 = arith.mulf %737, %748 : vector<2x16xf32>
    %750 = arith.addf %746, %749 : vector<2x16xf32>
    %751 = math.tanh %750 : vector<2x16xf32>
    %cst_130 = arith.constant 1.000000e+00 : f32
    %752 = vector.broadcast %cst_130 : f32 to vector<2x16xf32>
    %753 = arith.subf %752, %745 : vector<2x16xf32>
    %754 = arith.mulf %753, %751 : vector<2x16xf32>
    %755 = arith.mulf %745, %728 : vector<2x16xf32>
    %756 = arith.addf %754, %755 : vector<2x16xf32>
    %cst_131 = arith.constant dense<0.000000e+00> : vector<2x48xf32>
    %757 = tpu.matmul %756, %556, %cst_131 {dimension_numbers = #tpu.dot_dimension_numbers<[1], [0], [0], [1], [0, 0, 1, 1], [], []>} : vector<2x16xf32>, vector<16x48xf32>, vector<2x48xf32> -> vector<2x48xf32>
    %758 = vector.extract_strided_slice %555 {offsets = [0, 0], sizes = [2, 16], strides = [1, 1]} : vector<2x48xf32> to vector<2x16xf32>
    %759 = vector.extract_strided_slice %757 {offsets = [0, 0], sizes = [2, 16], strides = [1, 1]} : vector<2x48xf32> to vector<2x16xf32>
    %760 = arith.addf %758, %759 : vector<2x16xf32>
    %761 = arith.negf %760 : vector<2x16xf32>
    %762 = math.exp %761 : vector<2x16xf32>
    %cst_132 = arith.constant 1.000000e+00 : f32
    %763 = vector.broadcast %cst_132 : f32 to vector<2x16xf32>
    %764 = arith.addf %763, %762 : vector<2x16xf32>
    %765 = arith.divf %763, %764 : vector<2x16xf32>
    %766 = vector.extract_strided_slice %555 {offsets = [0, 16], sizes = [2, 16], strides = [1, 1]} : vector<2x48xf32> to vector<2x16xf32>
    %767 = vector.extract_strided_slice %757 {offsets = [0, 16], sizes = [2, 16], strides = [1, 1]} : vector<2x48xf32> to vector<2x16xf32>
    %768 = arith.addf %766, %767 : vector<2x16xf32>
    %769 = arith.negf %768 : vector<2x16xf32>
    %770 = math.exp %769 : vector<2x16xf32>
    %cst_133 = arith.constant 1.000000e+00 : f32
    %771 = vector.broadcast %cst_133 : f32 to vector<2x16xf32>
    %772 = arith.addf %771, %770 : vector<2x16xf32>
    %773 = arith.divf %771, %772 : vector<2x16xf32>
    %774 = vector.extract_strided_slice %555 {offsets = [0, 32], sizes = [2, 16], strides = [1, 1]} : vector<2x48xf32> to vector<2x16xf32>
    %775 = vector.extract_strided_slice %757 {offsets = [0, 32], sizes = [2, 16], strides = [1, 1]} : vector<2x48xf32> to vector<2x16xf32>
    %776 = arith.addf %775, %559 : vector<2x16xf32>
    %777 = arith.mulf %765, %776 : vector<2x16xf32>
    %778 = arith.addf %774, %777 : vector<2x16xf32>
    %779 = math.tanh %778 : vector<2x16xf32>
    %cst_134 = arith.constant 1.000000e+00 : f32
    %780 = vector.broadcast %cst_134 : f32 to vector<2x16xf32>
    %781 = arith.subf %780, %773 : vector<2x16xf32>
    %782 = arith.mulf %781, %779 : vector<2x16xf32>
    %783 = arith.mulf %773, %756 : vector<2x16xf32>
    %784 = arith.addf %782, %783 : vector<2x16xf32>
    %c160 = arith.constant 160 : index
    %c0_135 = arith.constant 0 : index
    %785 = vector.load %arg1[%c160, %c0_135] : memref<256x128xbf16, #tpu.memory_space<vmem>>, vector<16x48xbf16>
    %786 = arith.truncf %507 : vector<2x16xf32> to vector<2x16xbf16>
    %cst_136 = arith.constant dense<0.000000e+00> : vector<2x48xf32>
    %787 = tpu.matmul %786, %785, %cst_136 {dimension_numbers = #tpu.dot_dimension_numbers<[1], [0], [0], [1], [0, 0, 1, 1], [], []>} : vector<2x16xbf16>, vector<16x48xbf16>, vector<2x48xf32> -> vector<2x48xf32>
    %c176 = arith.constant 176 : index
    %c0_137 = arith.constant 0 : index
    %788 = vector.load %arg1[%c176, %c0_137] : memref<256x128xbf16, #tpu.memory_space<vmem>>, vector<16x48xbf16>
    %789 = arith.truncf %143 : vector<2x16xf32> to vector<2x16xbf16>
    %cst_138 = arith.constant dense<0.000000e+00> : vector<2x48xf32>
    %790 = tpu.matmul %789, %788, %cst_138 {dimension_numbers = #tpu.dot_dimension_numbers<[1], [0], [0], [1], [0, 0, 1, 1], [], []>} : vector<2x16xbf16>, vector<16x48xbf16>, vector<2x48xf32> -> vector<2x48xf32>
    %791 = arith.addf %787, %790 : vector<2x48xf32>
    %c69 = arith.constant 69 : index
    %c0_139 = arith.constant 0 : index
    %792 = vector.load %arg2[%c69, %c0_139] : memref<80x128xf32, #tpu.memory_space<vmem>>, vector<1x48xf32>
    %793 = vector.broadcast %792 : vector<1x48xf32> to vector<2x48xf32>
    %794 = arith.addf %791, %793 : vector<2x48xf32>
    %c73 = arith.constant 73 : index
    %c0_140 = arith.constant 0 : index
    %795 = vector.load %arg2[%c73, %c0_140] : memref<80x128xf32, #tpu.memory_space<vmem>>, vector<1x16xf32>
    %796 = vector.shape_cast %795 : vector<1x16xf32> to vector<1x16xf32>
    %797 = vector.broadcast %796 : vector<1x16xf32> to vector<2x16xf32>
    %cst_141 = arith.constant 0.000000e+00 : f32
    %798 = vector.broadcast %cst_141 : f32 to vector<2x16xf32>
    %c48 = arith.constant 48 : index
    %c0_142 = arith.constant 0 : index
    %799 = vector.load %arg2[%c48, %c0_142] : memref<80x128xf32, #tpu.memory_space<vmem>>, vector<16x48xf32>
    %cst_143 = arith.constant dense<0.000000e+00> : vector<2x48xf32>
    %800 = tpu.matmul %798, %799, %cst_143 {dimension_numbers = #tpu.dot_dimension_numbers<[1], [0], [0], [1], [0, 0, 1, 1], [], []>} : vector<2x16xf32>, vector<16x48xf32>, vector<2x48xf32> -> vector<2x48xf32>
    %801 = vector.extract_strided_slice %794 {offsets = [0, 0], sizes = [2, 16], strides = [1, 1]} : vector<2x48xf32> to vector<2x16xf32>
    %802 = vector.extract_strided_slice %800 {offsets = [0, 0], sizes = [2, 16], strides = [1, 1]} : vector<2x48xf32> to vector<2x16xf32>
    %803 = arith.addf %801, %802 : vector<2x16xf32>
    %804 = arith.negf %803 : vector<2x16xf32>
    %805 = math.exp %804 : vector<2x16xf32>
    %cst_144 = arith.constant 1.000000e+00 : f32
    %806 = vector.broadcast %cst_144 : f32 to vector<2x16xf32>
    %807 = arith.addf %806, %805 : vector<2x16xf32>
    %808 = arith.divf %806, %807 : vector<2x16xf32>
    %809 = vector.extract_strided_slice %794 {offsets = [0, 16], sizes = [2, 16], strides = [1, 1]} : vector<2x48xf32> to vector<2x16xf32>
    %810 = vector.extract_strided_slice %800 {offsets = [0, 16], sizes = [2, 16], strides = [1, 1]} : vector<2x48xf32> to vector<2x16xf32>
    %811 = arith.addf %809, %810 : vector<2x16xf32>
    %812 = arith.negf %811 : vector<2x16xf32>
    %813 = math.exp %812 : vector<2x16xf32>
    %cst_145 = arith.constant 1.000000e+00 : f32
    %814 = vector.broadcast %cst_145 : f32 to vector<2x16xf32>
    %815 = arith.addf %814, %813 : vector<2x16xf32>
    %816 = arith.divf %814, %815 : vector<2x16xf32>
    %817 = vector.extract_strided_slice %794 {offsets = [0, 32], sizes = [2, 16], strides = [1, 1]} : vector<2x48xf32> to vector<2x16xf32>
    %818 = vector.extract_strided_slice %800 {offsets = [0, 32], sizes = [2, 16], strides = [1, 1]} : vector<2x48xf32> to vector<2x16xf32>
    %819 = arith.addf %818, %797 : vector<2x16xf32>
    %820 = arith.mulf %808, %819 : vector<2x16xf32>
    %821 = arith.addf %817, %820 : vector<2x16xf32>
    %822 = math.tanh %821 : vector<2x16xf32>
    %cst_146 = arith.constant 1.000000e+00 : f32
    %823 = vector.broadcast %cst_146 : f32 to vector<2x16xf32>
    %824 = arith.subf %823, %816 : vector<2x16xf32>
    %825 = arith.mulf %824, %822 : vector<2x16xf32>
    %826 = arith.mulf %816, %798 : vector<2x16xf32>
    %827 = arith.addf %825, %826 : vector<2x16xf32>
    %828 = tpu.concatenate %784, %827 in 1 : vector<2x16xf32>, vector<2x16xf32> -> vector<2x32xf32>
    %c192 = arith.constant 192 : index
    %c0_147 = arith.constant 0 : index
    %829 = vector.load %arg1[%c192, %c0_147] : memref<256x128xbf16, #tpu.memory_space<vmem>>, vector<32x32xbf16>
    %830 = arith.truncf %828 : vector<2x32xf32> to vector<2x32xbf16>
    %cst_148 = arith.constant dense<0.000000e+00> : vector<2x32xf32>
    %831 = tpu.matmul %830, %829, %cst_148 {dimension_numbers = #tpu.dot_dimension_numbers<[1], [0], [0], [1], [0, 0, 1, 1], [], []>} : vector<2x32xbf16>, vector<32x32xbf16>, vector<2x32xf32> -> vector<2x32xf32>
    %c74 = arith.constant 74 : index
    %c0_149 = arith.constant 0 : index
    %832 = vector.load %arg2[%c74, %c0_149] : memref<80x128xf32, #tpu.memory_space<vmem>>, vector<1x32xf32>
    %833 = vector.broadcast %832 : vector<1x32xf32> to vector<2x32xf32>
    %834 = arith.addf %831, %833 : vector<2x32xf32>
    %cst_150 = arith.constant 3.000000e+00 : f32
    %835 = vector.broadcast %cst_150 : f32 to vector<2x32xf32>
    %836 = arith.addf %834, %835 : vector<2x32xf32>
    %cst_151 = arith.constant 0.000000e+00 : f32
    %cst_152 = arith.constant 6.000000e+00 : f32
    %837 = vector.broadcast %cst_151 : f32 to vector<2x32xf32>
    %838 = arith.maximumf %837, %836 : vector<2x32xf32>
    %839 = vector.broadcast %cst_152 : f32 to vector<2x32xf32>
    %840 = arith.minimumf %839, %838 : vector<2x32xf32>
    %841 = arith.mulf %834, %840 : vector<2x32xf32>
    %cst_153 = arith.constant 0.166666672 : f32
    %842 = vector.broadcast %cst_153 : f32 to vector<2x32xf32>
    %843 = arith.mulf %841, %842 : vector<2x32xf32>
    %c224 = arith.constant 224 : index
    %c0_154 = arith.constant 0 : index
    %844 = vector.load %arg1[%c224, %c0_154] : memref<256x128xbf16, #tpu.memory_space<vmem>>, vector<32x128xbf16>
    %845 = arith.truncf %843 : vector<2x32xf32> to vector<2x32xbf16>
    %cst_155 = arith.constant dense<0.000000e+00> : vector<2x128xf32>
    %846 = tpu.matmul %845, %844, %cst_155 {dimension_numbers = #tpu.dot_dimension_numbers<[1], [0], [0], [1], [0, 0, 1, 1], [], []>} : vector<2x32xbf16>, vector<32x128xbf16>, vector<2x128xf32> -> vector<2x128xf32>
    %c75 = arith.constant 75 : index
    %c0_156 = arith.constant 0 : index
    %847 = vector.load %arg2[%c75, %c0_156] : memref<80x128xf32, #tpu.memory_space<vmem>>, vector<1x128xf32>
    %848 = vector.broadcast %847 : vector<1x128xf32> to vector<2x128xf32>
    %849 = arith.addf %846, %848 : vector<2x128xf32>
    %c0_157 = arith.constant 0 : index
    %c0_158 = arith.constant 0 : index
    %850 = vector.load %arg3[%c0_157, %c0_158] : memref<2x128xf32, #tpu.memory_space<vmem>>, vector<2x128xf32>
    tpu.vector_store %arg3[%c0_157, %c0_158], %849 {strides = array<i32>} : memref<2x128xf32, #tpu.memory_space<vmem>>, vector<2x128xf32>,
    return
  }
}

</mosaic_0001>

<llo_original>
// kernel: sentiment_head_pallas.1
$region0: #{sentiment_head_pallas.1}
  #allocation0 [shape = 'u32[]', space=smem, size = 0x4, offset = 0x4, fixed_abs, tag = 'smem constant byte address 0x4 - core index']
  #allocation1 [shape = 'u32[72,128]{1,0:T(1,128)}', space=vmem, size = 0x9000, scoped, tag = 'internal scratch']
  %s0 = inlined_call_operand.hbm [shape: f32[2,8,32], index: 0, kind: input, shape index: {}]
  %s1 = inlined_call_operand.hbm [shape: bf16[256,128], index: 1, kind: input, shape index: {}]
  %s2 = inlined_call_operand.hbm [shape: f32[80,128], index: 2, kind: input, shape index: {}]
  %s3 = inlined_call_operand.vmem [shape: f32[2,128], index: 3, kind: output, shape index: {}]
  %s4 = sld [smem:[#allocation0]]
  $region34: #{sentiment_head_pallas.1} parent=0
    _
  %s6 = ssub.s32 1, %s4
  %s7 = scalar_select 0, %s6, %s4
  $region1: #{sentiment_head_pallas.1} parent=0
    #allocation2 [shape = 'u8[8192]{0}', space=vmem, size = 0x2000, scoped, tag = 'input window, operand 0, single buffered']
    #allocation3 [shape = 's32[1]{0}', space=sflag, size = 0x4, scoped, tag = 'scoped memory for sentiment_head_pallas.1']
    #allocation4 [shape = 'u8[65536]{0}', space=vmem, size = 0x10000, scoped, tag = 'input window, operand 1, single buffered']
    #allocation5 [shape = 's32[1]{0}', space=sflag, size = 0x4, scoped, tag = 'scoped memory for sentiment_head_pallas.1']
    #allocation6 [shape = 'u8[40960]{0}', space=vmem, size = 0xa000, scoped, tag = 'input window, operand 2, single buffered']
    %8 = vsyncpa [#allocation3], 0
    %9 = vsyncpa [#allocation5], 0
    // Predicated region
    $region2: #{sentiment_head_pallas.1} parent=1 // pred_check
      _
    $region3: #{sentiment_head_pallas.1} parent=1 // pred_check_branch
      %11 = sbr.rel (0) target = $region5
    $region4: #{sentiment_head_pallas.1} parent=1 // pred_region
      %13 = vsyncadd [#allocation3], 0
      %s14 = sshll.u32 %s0, 4
      %s15 = int_to_ptr.hbm [resolvable:$true] %s14
      %s16 = sshll.u32 [#allocation2], 4
      %s17 = int_to_ptr.vmem [resolvable:$true] %s16
      %22 = dma.hbm_to_vmem [thread:$0]  %s15, 256, %s17, [#allocation3], 128, 128, 8
    $region5: #{sentiment_head_pallas.1} parent=1 // pred_fallthru
      _
    // Predicated region
    $region6: #{sentiment_head_pallas.1} parent=1 // pred_check
      _
    $region7: #{sentiment_head_pallas.1} parent=1 // pred_check_branch
      %24 = sbr.rel (0) target = $region9
    $region8: #{sentiment_head_pallas.1} parent=1 // pred_region
      %26 = vsyncadd [#allocation5], 0
      %s27 = sshll.u32 %s1, 4
      %s28 = int_to_ptr.hbm [resolvable:$true] %s27
      %s29 = sshll.u32 [#allocation4], 4
      %s30 = int_to_ptr.vmem [resolvable:$true] %s29
      %35 = dma.hbm_to_vmem [thread:$0]  %s28, 2048, %s30, [#allocation5], 64, 64, 4
    $region9: #{sentiment_head_pallas.1} parent=1 // pred_fallthru
      _
    // Predicated region
    $region10: #{sentiment_head_pallas.1} parent=1 // pred_check
      _
    $region11: #{sentiment_head_pallas.1} parent=1 // pred_check_branch
      %37 = sbr.rel (0) target = $region13
    $region12: #{sentiment_head_pallas.1} parent=1 // pred_region
      %39 = vsyncadd [#allocation5], 0
      %s40 = sshll.u32 %s2, 4
      %s41 = int_to_ptr.hbm [resolvable:$true] %s40
      %s42 = sshll.u32 [#allocation6], 4
      %s43 = int_to_ptr.vmem [resolvable:$true] %s42
      %48 = dma.hbm_to_vmem [thread:$0]  %s41, 1280, %s43, [#allocation5], 128, 128, 8
    $region13: #{sentiment_head_pallas.1} parent=1 // pred_fallthru
      _
    // Predicated region
    $region14: #{sentiment_head_pallas.1} parent=1 // pred_check
      _
    $region15: #{sentiment_head_pallas.1} parent=1 // pred_check_branch
      %50 = sbr.rel (0) target = $region17
    $region16: #{sentiment_head_pallas.1} parent=1 // pred_region
      %52 = dma.done [#allocation3], 256
    $region17: #{sentiment_head_pallas.1} parent=1 // pred_fallthru
      _
    // Predicated region
    $region18: #{sentiment_head_pallas.1} parent=1 // pred_check
      _
    $region19: #{sentiment_head_pallas.1} parent=1 // pred_check_branch
      %54 = sbr.rel (0) target = $region21
    $region20: #{sentiment_head_pallas.1} parent=1 // pred_region
      %56 = dma.done [#allocation5], 2048
    $region21: #{sentiment_head_pallas.1} parent=1 // pred_fallthru
      _
    // Predicated region
    $region22: #{sentiment_head_pallas.1} parent=1 // pred_check
      _
    $region23: #{sentiment_head_pallas.1} parent=1 // pred_check_branch
      %58 = sbr.rel (0) target = $region25
    $region24: #{sentiment_head_pallas.1} parent=1 // pred_region
      %60 = dma.done [#allocation5], 1280
    $region25: #{sentiment_head_pallas.1} parent=1 // pred_fallthru
      _
    %v62 = vld [vmem:[#allocation2] sm:$0xff]
    %v63 = vld [vmem:[#allocation2 + $0x8] sm:$0xff]
    %v64 = vld [vmem:[#allocation4] sm:$0xf]
    %v65 = vld [vmem:[#allocation4 + $0x4] sm:$0xf]
    %v66 = vld [vmem:[#allocation4 + $0x8] sm:$0xf]
    %v67 = vld [vmem:[#allocation4 + $0xc] sm:$0xf]
    %v68 = vpack.c.bf16 %v63, %v62
    %v69 = vld [vmem:[#allocation6 + $0x40] sm:$0x1]
    %v70 = vperm.slane %v69, 0
    %v75 = vunpack.c.l.b16 %v64
    %v76 = vunpack.c.l.b16 %v65
    %v77 = vunpack.c.l.b16 %v66
    %v78 = vunpack.c.l.b16 %v67
    %v79 = vpack.c.b16 %v76, %v75
    %v80 = vpack.c.b16 %v78, %v77
    %vm83 = vcmask 261120
    %v85 = vsel %vm83, %v68, 0
    %87 = vmatpush.bf16.msra.mxu0 0
    %88 = vmatpush.bf16.msra.mxu0 0
    %89 = vmatpush.bf16.msra.mxu0 0
    %90 = vmatpush.bf16.msra.mxu0 0
    %91 = vmatpush.bf16.msra.mxu0 0
    %92 = vmatpush.bf16.msra.mxu0 0
    %93 = vmatpush.bf16.msra.mxu0 %v80
    %94 = vmatpush.bf16.msra.mxu0 %v79
    %95 = vmatmul.bf16.gmra.mxu0 %v85
    %v96 = vpop.f32.mrf.mxu0
    %v97 = vadd.f32 %v70, %v96
    %v98 = vpop.f32.mrf.mxu0
    %v99 = vadd.f32 %v70, %v98
    %100 = vdwg.mxu0
    %v101 = vadd.f32 %v97, 3.0
    %v102 = vadd.f32 %v99, 3.0
    %v103 = vmax.f32 %v101, 0.0
    %v104 = vmax.f32 %v102, 0.0
    %v105 = vmin.f32 %v103, 6.0
    %v106 = vmin.f32 %v104, 6.0
    %v107 = vmul.f32 %v97, %v105
    %v108 = vmul.f32 %v99, %v106
    %v109 = vmul.f32 %v107, 0.16666667
    %v110 = vmul.f32 %v108, 0.16666667
    %v111 = vld [vmem:[#allocation4 + $0x10] sm:$0xf]
    %v112 = vld [vmem:[#allocation4 + $0x14] sm:$0xf]
    %v113 = vld [vmem:[#allocation4 + $0x18] sm:$0xf]
    %v114 = vld [vmem:[#allocation4 + $0x1c] sm:$0xf]
    %v115 = vpack.c.bf16 %v110, %v109
    %v116 = vld [vmem:[#allocation6 + $0x41] sm:$0x1]
    %v117 = vperm.slane %v116, 0
    %v122 = vunpack.c.l.b16 %v111
    %v123 = vunpack.c.l.b16 %v112
    %v124 = vunpack.c.l.b16 %v113
    %v125 = vunpack.c.l.b16 %v114
    %v126 = vpack.c.b16 %v123, %v122
    %v127 = vpack.c.b16 %v125, %v124
    %v131 = vsel %vm83, %v115, 0
    %133 = vmatpush.bf16.msra.mxu0 0
    %134 = vmatpush.bf16.msra.mxu0 0
    %135 = vmatpush.bf16.msra.mxu0 0
    %136 = vmatpush.bf16.msra.mxu0 0
    %137 = vmatpush.bf16.msra.mxu0 0
    %138 = vmatpush.bf16.msra.mxu0 0
    %139 = vmatpush.bf16.msra.mxu0 %v127
    %140 = vmatpush.bf16.msra.mxu0 %v126
    %141 = vmatmul.bf16.gmra.mxu0 %v131
    %v142 = vpop.f32.mrf.mxu0
    %v143 = vadd.f32 %v117, %v142
    %v144 = vpop.f32.mrf.mxu0
    %v145 = vadd.f32 %v117, %v144
    %146 = vdwg.mxu0
    %v147 = vadd.f32 %v143, 3.0
    %v148 = vadd.f32 %v145, 3.0
    %v149 = vmax.f32 %v147, 0.0
    %v150 = vmax.f32 %v148, 0.0
    %v151 = vmin.f32 %v149, 6.0
    %v152 = vmin.f32 %v150, 6.0
    %v153 = vmul.f32 %v143, %v151
    %v154 = vmul.f32 %v145, %v152
    %v155 = vmul.f32 %v153, 0.16666667
    %v156 = vmul.f32 %v154, 0.16666667
    %v157 = vld [vmem:[#allocation4 + $0x20] sm:$0xf]
    %v158 = vld [vmem:[#allocation4 + $0x24] sm:$0xf]
    %v159 = vld [vmem:[#allocation4 + $0x28] sm:$0xf]
    %v160 = vld [vmem:[#allocation4 + $0x2c] sm:$0xf]
    %v161 = vpack.c.bf16 %v156, %v155
    %v162 = vld [vmem:[#allocation6 + $0x42] sm:$0x1]
    %v163 = vperm.slane %v162, 0
    %v168 = vunpack.c.l.b16 %v157
    %v169 = vunpack.c.l.b16 %v158
    %v170 = vunpack.c.l.b16 %v159
    %v171 = vunpack.c.l.b16 %v160
    %v172 = vpack.c.b16 %v169, %v168
    %v173 = vpack.c.b16 %v171, %v170
    %v177 = vsel %vm83, %v161, 0
    %179 = vmatpush.bf16.msra.mxu0 0
    %180 = vmatpush.bf16.msra.mxu0 0
    %181 = vmatpush.bf16.msra.mxu0 0
    %182 = vmatpush.bf16.msra.mxu0 0
    %183 = vmatpush.bf16.msra.mxu0 0
    %184 = vmatpush.bf16.msra.mxu0 0
    %185 = vmatpush.bf16.msra.mxu0 %v173
    %186 = vmatpush.bf16.msra.mxu0 %v172
    %187 = vmatmul.bf16.gmra.mxu0 %v177
    %v188 = vpop.f32.mrf.mxu0
    %v189 = vadd.f32 %v163, %v188
    %v190 = vpop.f32.mrf.mxu0
    %v191 = vadd.f32 %v163, %v190
    %192 = vdwg.mxu0
    %v193 = vld [vmem:[#allocation4 + $0x30] sm:$0xf]
    %v194 = vld [vmem:[#allocation4 + $0x34] sm:$0xf]
    %v195 = vld [vmem:[#allocation4 + $0x38] sm:$0xf]
    %v196 = vld [vmem:[#allocation4 + $0x3c] sm:$0xf]
    %v197 = vld [vmem:[#allocation6 + $0x43] sm:$0x1]
    %v198 = vperm.slane %v197, 0
    %v203 = vunpack.c.l.b16 %v193
    %v204 = vunpack.c.l.b16 %v194
    %v205 = vunpack.c.l.b16 %v195
    %v206 = vunpack.c.l.b16 %v196
    %v207 = vpack.c.b16 %v204, %v203
    %v208 = vpack.c.b16 %v206, %v205
    %211 = vmatpush.bf16.msra.mxu0 0
    %212 = vmatpush.bf16.msra.mxu0 0
    %213 = vmatpush.bf16.msra.mxu0 0
    %214 = vmatpush.bf16.msra.mxu0 0
    %215 = vmatpush.bf16.msra.mxu0 0
    %216 = vmatpush.bf16.msra.mxu0 0
    %217 = vmatpush.bf16.msra.mxu0 %v208
    %218 = vmatpush.bf16.msra.mxu0 %v207
    %219 = vmatmul.bf16.gmra.mxu0 %v177
    %v220 = vpop.f32.mrf.mxu0
    %v221 = vadd.f32 %v198, %v220
    %v222 = vpop.f32.mrf.mxu0
    %v223 = vadd.f32 %v198, %v222
    %224 = vdwg.mxu0
    %v225 = vld [vmem:[#allocation6] sm:$0xff]
    %v226 = vld [vmem:[#allocation6 + $0x8] sm:$0xff]
    %v227 = vld [vmem:[#allocation6 + $0x10] sm:$0xff]
    %v228 = vld [vmem:[#allocation6 + $0x18] sm:$0xff]
    %v229 = vld [vmem:[#allocation6 + $0x46] sm:$0x1]
    %v230 = vperm.slane %v229, 0
    %v231 = vld [vmem:[#allocation6 + $0x47] sm:$0x1]
    %v232 = vperm.slane %v231, 0
    %vm233 = vcmask 130048
    %v235 = vsel %vm233, 0.0, 0
    %237 = vmatpush.msra.mxu0 0.0
    %238 = vmatpush.msra.mxu0 0.0
    %239 = vmatpush.msra.mxu0 0.0
    %240 = vmatpush.msra.mxu0 0.0
    %241 = vmatpush.msra.mxu0 0.0
    %242 = vmatpush.msra.mxu0 0.0
    %243 = vmatpush.msra.mxu0 0.0
    %244 = vmatpush.msra.mxu0 0.0
    %245 = vmatpush.msra.mxu0 0.0
    %246 = vmatpush.msra.mxu0 0.0
    %247 = vmatpush.msra.mxu0 0.0
    %248 = vmatpush.msra.mxu0 0.0
    %249 = vmatpush.msra.mxu0 0.0
    %250 = vmatpush.msra.mxu0 0.0
    %251 = vmatpush.msra.mxu0 %v226
    %252 = vmatpush.msra.mxu0 %v225
    %253 = vmatmul.f32.gmra.mxu0 %v235
    %v254 = vpop.f32.mrf.mxu0
    %v255 = vadd.f32 0.0, %v254
    %256 = vdwg.mxu0
    %v258 = vrot.slane %v255, 1
    %v261 = vadd.f32 %v189, %v255
    %v262 = vadd.f32 %v191, %v258
    %v263 = vxor.u32 %v261, 2147483648
    %v264 = vxor.u32 %v262, 2147483648
    %v265 = vmul.f32 %v263, 1.442695
    %v266 = vpow.pop %v265
    %v267 = vmul.f32 %v264, 1.442695
    %v268 = vpow.pop %v267
    %v269 = vadd.f32 %v266, 1.0
    %v270 = vadd.f32 %v268, 1.0
    %v271 = vrcp.pop %v269
    %v272 = vmul.f32 %v269, %v271
    %v273 = vsub.f32 1.0, %v272
    %v274 = vmul.f32 %v271, %v273
    %v275 = vadd.f32 %v271, %v274
    %vm276 = vweird.f32 %v269
    %vm277 = vweird.f32 %v271
    %vm278 = vmor %vm276, %vm277
    %v279 = vsel %vm278, %v271, %v275
    %v280 = vand.u32 2147483647, %v269
    %vm281 = vcmp.eq.f32.partialorder %v280, 8.507059e+37
    %v282 = vand.u32 %v269, 2147483648
    %v283 = vor.u32 1.1754944e-38, %v282
    %v284 = vsel %vm281, %v283, %v279
    %v285 = vmul.f32 1.0, %v284
    %v286 = vrcp.pop %v270
    %v287 = vmul.f32 %v270, %v286
    %v288 = vsub.f32 1.0, %v287
    %v289 = vmul.f32 %v286, %v288
    %v290 = vadd.f32 %v286, %v289
    %vm291 = vweird.f32 %v270
    %vm292 = vweird.f32 %v286
    %vm293 = vmor %vm291, %vm292
    %v294 = vsel %vm293, %v286, %v290
    %v295 = vand.u32 2147483647, %v270
    %vm296 = vcmp.eq.f32.partialorder %v295, 8.507059e+37
    %v297 = vand.u32 %v270, 2147483648
    %v298 = vor.u32 1.1754944e-38, %v297
    %v299 = vsel %vm296, %v298, %v294
    %v300 = vmul.f32 1.0, %v299
    %302 = vrot.lane.b32.xlu0 %v230, 32
    %v303 = vpop.permute.xlu0 %302
    %v305 = vadd.f32 %v255, %v303
    %v307 = vrot.slane %v305, 1
    %308 = vrot.lane.b32.xlu0 %v305, 96
    %v309 = vpop.permute.xlu0 %308
    %310 = vrot.lane.b32.xlu0 %v307, 96
    %v311 = vpop.permute.xlu0 %310
    %v314 = vmul.f32 %v285, %v309
    %v315 = vmul.f32 %v300, %v311
    %318 = vrot.lane.b32.xlu0 %v314, 32
    %v319 = vpop.permute.xlu0 %318
    %320 = vrot.lane.b32.xlu0 %v315, 32
    %v321 = vpop.permute.xlu0 %320
    %v324 = vadd.f32 %v189, %v319
    %v325 = vadd.f32 %v191, %v321
    %v326 = vtanh.pop %v324
    %v327 = vtanh.pop %v325
    %v328 = vsub.f32 1.0, %v285
    %v329 = vsub.f32 1.0, %v300
    %332 = vrot.lane.b32.xlu0 %v326, 112
    %v333 = vpop.permute.xlu0 %332
    %334 = vrot.lane.b32.xlu0 %v327, 112
    %v335 = vpop.permute.xlu0 %334
    %v338 = vmul.f32 %v328, %v333
    %v339 = vmul.f32 %v329, %v335
    %v340 = vmul.f32 %v285, 0.0
    %v341 = vmul.f32 %v300, 0.0
    %v342 = vadd.f32 %v338, %v340
    %v343 = vadd.f32 %v339, %v341
    %344 = vmatpush.msra.mxu0 0.0
    %345 = vmatpush.msra.mxu0 0.0
    %346 = vmatpush.msra.mxu0 0.0
    %347 = vmatpush.msra.mxu0 0.0
    %348 = vmatpush.msra.mxu0 0.0
    %349 = vmatpush.msra.mxu0 0.0
    %350 = vmatpush.msra.mxu0 0.0
    %351 = vmatpush.msra.mxu0 0.0
    %352 = vmatpush.msra.mxu0 0.0
    %353 = vmatpush.msra.mxu0 0.0
    %354 = vmatpush.msra.mxu0 0.0
    %355 = vmatpush.msra.mxu0 0.0
    %356 = vmatpush.msra.mxu0 0.0
    %357 = vmatpush.msra.mxu0 0.0
    %358 = vmatpush.msra.mxu0 %v228
    %359 = vmatpush.msra.mxu0 %v227
    %360 = vmatmul.f32.gmra.mxu0 %v235
    %v361 = vpop.f32.mrf.mxu0
    %v362 = vadd.f32 0.0, %v361
    %363 = vdwg.mxu0
    %v365 = vrot.slane %v362, 1
    %v366 = vrot.slane %v362, 2
    %v369 = vadd.f32 %v221, %v365
    %v370 = vadd.f32 %v223, %v366
    %v371 = vxor.u32 %v369, 2147483648
    %v372 = vxor.u32 %v370, 2147483648
    %v373 = vmul.f32 %v371, 1.442695
    %v374 = vpow.pop %v373
    %v375 = vmul.f32 %v372, 1.442695
    %v376 = vpow.pop %v375
    %v377 = vadd.f32 %v374, 1.0
    %v378 = vadd.f32 %v376, 1.0
    %v379 = vrcp.pop %v377
    %v380 = vmul.f32 %v377, %v379
    %v381 = vsub.f32 1.0, %v380
    %v382 = vmul.f32 %v379, %v381
    %v383 = vadd.f32 %v379, %v382
    %vm384 = vweird.f32 %v377
    %vm385 = vweird.f32 %v379
    %vm386 = vmor %vm384, %vm385
    %v387 = vsel %vm386, %v379, %v383
    %v388 = vand.u32 2147483647, %v377
    %vm389 = vcmp.eq.f32.partialorder %v388, 8.507059e+37
    %v390 = vand.u32 %v377, 2147483648
    %v391 = vor.u32 1.1754944e-38, %v390
    %v392 = vsel %vm389, %v391, %v387
    %v393 = vmul.f32 1.0, %v392
    %v394 = vrcp.pop %v378
    %v395 = vmul.f32 %v378, %v394
    %v396 = vsub.f32 1.0, %v395
    %v397 = vmul.f32 %v394, %v396
    %v398 = vadd.f32 %v394, %v397
    %vm399 = vweird.f32 %v378
    %vm400 = vweird.f32 %v394
    %vm401 = vmor %vm399, %vm400
    %v402 = vsel %vm401, %v394, %v398
    %v403 = vand.u32 2147483647, %v378
    %vm404 = vcmp.eq.f32.partialorder %v403, 8.507059e+37
    %v405 = vand.u32 %v378, 2147483648
    %v406 = vor.u32 1.1754944e-38, %v405
    %v407 = vsel %vm404, %v406, %v402
    %v408 = vmul.f32 1.0, %v407
    %410 = vrot.lane.b32.xlu0 %v232, 32
    %v411 = vpop.permute.xlu0 %410
    %v413 = vadd.f32 %v362, %v411
    %v415 = vrot.slane %v413, 1
    %v416 = vrot.slane %v413, 2
    %417 = vrot.lane.b32.xlu0 %v415, 96
    %v418 = vpop.permute.xlu0 %417
    %419 = vrot.lane.b32.xlu0 %v416, 96
    %v420 = vpop.permute.xlu0 %419
    %v423 = vmul.f32 %v393, %v418
    %v424 = vmul.f32 %v408, %v420
    %427 = vrot.lane.b32.xlu0 %v423, 32
    %v428 = vpop.permute.xlu0 %427
    %429 = vrot.lane.b32.xlu0 %v424, 32
    %v430 = vpop.permute.xlu0 %429
    %v433 = vadd.f32 %v221, %v428
    %v434 = vadd.f32 %v223, %v430
    %v435 = vtanh.pop %v433
    %v436 = vtanh.pop %v434
    %v437 = vsub.f32 1.0, %v393
    %v438 = vsub.f32 1.0, %v408
    %441 = vrot.lane.b32.xlu0 %v435, 112
    %v442 = vpop.permute.xlu0 %441
    %443 = vrot.lane.b32.xlu0 %v436, 112
    %v444 = vpop.permute.xlu0 %443
    %v447 = vmul.f32 %v437, %v442
    %v448 = vmul.f32 %v438, %v444
    %v449 = vmul.f32 %v393, 0.0
    %v450 = vmul.f32 %v408, 0.0
    %v451 = vadd.f32 %v447, %v449
    %v452 = vadd.f32 %v448, %v450
    %v455 = vrot.slane %v343, 7
    %vm456 = vcmask 1041409
    %v457 = vsel %vm456, %v455, %v342
    %458 = vrot.lane.b32.xlu0 %v457, 112
    %v459 = vpop.permute.xlu0 %458
    %v460 = vsel %vm233, %v459, 0
    %462 = vmatpush.msra.mxu0 0.0
    %463 = vmatpush.msra.mxu0 0.0
    %464 = vmatpush.msra.mxu0 0.0
    %465 = vmatpush.msra.mxu0 0.0
    %466 = vmatpush.msra.mxu0 0.0
    %467 = vmatpush.msra.mxu0 0.0
    %468 = vmatpush.msra.mxu0 0.0
    %469 = vmatpush.msra.mxu0 0.0
    %470 = vmatpush.msra.mxu0 0.0
    %471 = vmatpush.msra.mxu0 0.0
    %472 = vmatpush.msra.mxu0 0.0
    %473 = vmatpush.msra.mxu0 0.0
    %474 = vmatpush.msra.mxu0 0.0
    %475 = vmatpush.msra.mxu0 0.0
    %476 = vmatpush.msra.mxu0 %v226
    %477 = vmatpush.msra.mxu0 %v225
    %478 = vmatmul.f32.gmra.mxu0 %v460
    %v479 = vpop.f32.mrf.mxu0
    %v480 = vadd.f32 0.0, %v479
    %481 = vdwg.mxu0
    %v483 = vrot.slane %v480, 7
    %v486 = vadd.f32 %v189, %v483
    %v487 = vadd.f32 %v191, %v480
    %v488 = vxor.u32 %v486, 2147483648
    %v489 = vxor.u32 %v487, 2147483648
    %v490 = vmul.f32 %v488, 1.442695
    %v491 = vpow.pop %v490
    %v492 = vmul.f32 %v489, 1.442695
    %v493 = vpow.pop %v492
    %v494 = vadd.f32 %v491, 1.0
    %v495 = vadd.f32 %v493, 1.0
    %v496 = vrcp.pop %v494
    %v497 = vmul.f32 %v494, %v496
    %v498 = vsub.f32 1.0, %v497
    %v499 = vmul.f32 %v496, %v498
    %v500 = vadd.f32 %v496, %v499
    %vm501 = vweird.f32 %v494
    %vm502 = vweird.f32 %v496
    %vm503 = vmor %vm501, %vm502
    %v504 = vsel %vm503, %v496, %v500
    %v505 = vand.u32 2147483647, %v494
    %vm506 = vcmp.eq.f32.partialorder %v505, 8.507059e+37
    %v507 = vand.u32 %v494, 2147483648
    %v508 = vor.u32 1.1754944e-38, %v507
    %v509 = vsel %vm506, %v508, %v504
    %v510 = vmul.f32 1.0, %v509
    %v511 = vrcp.pop %v495
    %v512 = vmul.f32 %v495, %v511
    %v513 = vsub.f32 1.0, %v512
    %v514 = vmul.f32 %v511, %v513
    %v515 = vadd.f32 %v511, %v514
    %vm516 = vweird.f32 %v495
    %vm517 = vweird.f32 %v511
    %vm518 = vmor %vm516, %vm517
    %v519 = vsel %vm518, %v511, %v515
    %v520 = vand.u32 2147483647, %v495
    %vm521 = vcmp.eq.f32.partialorder %v520, 8.507059e+37
    %v522 = vand.u32 %v495, 2147483648
    %v523 = vor.u32 1.1754944e-38, %v522
    %v524 = vsel %vm521, %v523, %v519
    %v525 = vmul.f32 1.0, %v524
    %v526 = vadd.f32 %v480, %v303
    %v528 = vrot.slane %v526, 7
    %529 = vrot.lane.b32.xlu0 %v528, 96
    %v530 = vpop.permute.xlu0 %529
    %531 = vrot.lane.b32.xlu0 %v526, 96
    %v532 = vpop.permute.xlu0 %531
    %v535 = vmul.f32 %v510, %v530
    %v536 = vmul.f32 %v525, %v532
    %539 = vrot.lane.b32.xlu0 %v535, 32
    %v540 = vpop.permute.xlu0 %539
    %541 = vrot.lane.b32.xlu0 %v536, 32
    %v542 = vpop.permute.xlu0 %541
    %v545 = vadd.f32 %v189, %v540
    %v546 = vadd.f32 %v191, %v542
    %v547 = vtanh.pop %v545
    %v548 = vtanh.pop %v546
    %v549 = vsub.f32 1.0, %v510
    %v550 = vsub.f32 1.0, %v525
    %553 = vrot.lane.b32.xlu0 %v547, 112
    %v554 = vpop.permute.xlu0 %553
    %555 = vrot.lane.b32.xlu0 %v548, 112
    %v556 = vpop.permute.xlu0 %555
    %v559 = vmul.f32 %v549, %v554
    %v560 = vmul.f32 %v550, %v556
    %v561 = vrot.slane %v342, 7
    %v564 = vmul.f32 %v510, %v561
    %v565 = vmul.f32 %v525, %v455
    %v566 = vadd.f32 %v559, %v564
    %v567 = vadd.f32 %v560, %v565
    %v570 = vrot.slane %v451, 7
    %v571 = vrot.slane %v452, 6
    %v572 = vsel %vm456, %v571, %v570
    %573 = vrot.lane.b32.xlu0 %v572, 112
    %v574 = vpop.permute.xlu0 %573
    %v575 = vsel %vm233, %v574, 0
    %577 = vmatpush.msra.mxu0 0.0
    %578 = vmatpush.msra.mxu0 0.0
    %579 = vmatpush.msra.mxu0 0.0
    %580 = vmatpush.msra.mxu0 0.0
    %581 = vmatpush.msra.mxu0 0.0
    %582 = vmatpush.msra.mxu0 0.0
    %583 = vmatpush.msra.mxu0 0.0
    %584 = vmatpush.msra.mxu0 0.0
    %585 = vmatpush.msra.mxu0 0.0
    %586 = vmatpush.msra.mxu0 0.0
    %587 = vmatpush.msra.mxu0 0.0
    %588 = vmatpush.msra.mxu0 0.0
    %589 = vmatpush.msra.mxu0 0.0
    %590 = vmatpush.msra.mxu0 0.0
    %591 = vmatpush.msra.mxu0 %v228
    %592 = vmatpush.msra.mxu0 %v227
    %593 = vmatmul.f32.gmra.mxu0 %v575
    %v594 = vpop.f32.mrf.mxu0
    %v595 = vadd.f32 0.0, %v594
    %596 = vdwg.mxu0
    %v598 = vrot.slane %v595, 2
    %v599 = vrot.slane %v595, 3
    %v602 = vadd.f32 %v221, %v598
    %v603 = vadd.f32 %v223, %v599
    %v604 = vxor.u32 %v602, 2147483648
    %v605 = vxor.u32 %v603, 2147483648
    %v606 = vmul.f32 %v604, 1.442695
    %v607 = vpow.pop %v606
    %v608 = vmul.f32 %v605, 1.442695
    %v609 = vpow.pop %v608
    %v610 = vadd.f32 %v607, 1.0
    %v611 = vadd.f32 %v609, 1.0
    %v612 = vrcp.pop %v610
    %v613 = vmul.f32 %v610, %v612
    %v614 = vsub.f32 1.0, %v613
    %v615 = vmul.f32 %v612, %v614
    %v616 = vadd.f32 %v612, %v615
    %vm617 = vweird.f32 %v610
    %vm618 = vweird.f32 %v612
    %vm619 = vmor %vm617, %vm618
    %v620 = vsel %vm619, %v612, %v616
    %v621 = vand.u32 2147483647, %v610
    %vm622 = vcmp.eq.f32.partialorder %v621, 8.507059e+37
    %v623 = vand.u32 %v610, 2147483648
    %v624 = vor.u32 1.1754944e-38, %v623
    %v625 = vsel %vm622, %v624, %v620
    %v626 = vmul.f32 1.0, %v625
    %v627 = vrcp.pop %v611
    %v628 = vmul.f32 %v611, %v627
    %v629 = vsub.f32 1.0, %v628
    %v630 = vmul.f32 %v627, %v629
    %v631 = vadd.f32 %v627, %v630
    %vm632 = vweird.f32 %v611
    %vm633 = vweird.f32 %v627
    %vm634 = vmor %vm632, %vm633
    %v635 = vsel %vm634, %v627, %v631
    %v636 = vand.u32 2147483647, %v611
    %vm637 = vcmp.eq.f32.partialorder %v636, 8.507059e+37
    %v638 = vand.u32 %v611, 2147483648
    %v639 = vor.u32 1.1754944e-38, %v638
    %v640 = vsel %vm637, %v639, %v635
    %v641 = vmul.f32 1.0, %v640
    %v642 = vadd.f32 %v595, %v411
    %v644 = vrot.slane %v642, 2
    %v645 = vrot.slane %v642, 3
    %646 = vrot.lane.b32.xlu0 %v644, 96
    %v647 = vpop.permute.xlu0 %646
    %648 = vrot.lane.b32.xlu0 %v645, 96
    %v649 = vpop.permute.xlu0 %648
    %v652 = vmul.f32 %v626, %v647
    %v653 = vmul.f32 %v641, %v649
    %656 = vrot.lane.b32.xlu0 %v652, 32
    %v657 = vpop.permute.xlu0 %656
    %658 = vrot.lane.b32.xlu0 %v653, 32
    %v659 = vpop.permute.xlu0 %658
    %v662 = vadd.f32 %v221, %v657
    %v663 = vadd.f32 %v223, %v659
    %v664 = vtanh.pop %v662
    %v665 = vtanh.pop %v663
    %v666 = vsub.f32 1.0, %v626
    %v667 = vsub.f32 1.0, %v641
    %670 = vrot.lane.b32.xlu0 %v664, 112
    %v671 = vpop.permute.xlu0 %670
    %672 = vrot.lane.b32.xlu0 %v665, 112
    %v673 = vpop.permute.xlu0 %672
    %v676 = vmul.f32 %v666, %v671
    %v677 = vmul.f32 %v667, %v673
    %v678 = vrot.slane %v451, 1
    %v679 = vrot.slane %v452, 1
    %v682 = vmul.f32 %v626, %v678
    %v683 = vmul.f32 %v641, %v679
    %v684 = vadd.f32 %v676, %v682
    %v685 = vadd.f32 %v677, %v683
    %v688 = vrot.slane %v566, 1
    %v689 = vsel %vm456, %v567, %v688
    %690 = vrot.lane.b32.xlu0 %v689, 112
    %v691 = vpop.permute.xlu0 %690
    %v692 = vsel %vm233, %v691, 0
    %694 = vmatpush.msra.mxu0 0.0
    %695 = vmatpush.msra.mxu0 0.0
    %696 = vmatpush.msra.mxu0 0.0
    %697 = vmatpush.msra.mxu0 0.0
    %698 = vmatpush.msra.mxu0 0.0
    %699 = vmatpush.msra.mxu0 0.0
    %700 = vmatpush.msra.mxu0 0.0
    %701 = vmatpush.msra.mxu0 0.0
    %702 = vmatpush.msra.mxu0 0.0
    %703 = vmatpush.msra.mxu0 0.0
    %704 = vmatpush.msra.mxu0 0.0
    %705 = vmatpush.msra.mxu0 0.0
    %706 = vmatpush.msra.mxu0 0.0
    %707 = vmatpush.msra.mxu0 0.0
    %708 = vmatpush.msra.mxu0 %v226
    %709 = vmatpush.msra.mxu0 %v225
    %710 = vmatmul.f32.gmra.mxu0 %v692
    %v711 = vpop.f32.mrf.mxu0
    %v712 = vadd.f32 0.0, %v711
    %713 = vdwg.mxu0
    %v715 = vrot.slane %v712, 6
    %v716 = vrot.slane %v712, 7
    %v719 = vadd.f32 %v189, %v715
    %v720 = vadd.f32 %v191, %v716
    %v721 = vxor.u32 %v719, 2147483648
    %v722 = vxor.u32 %v720, 2147483648
    %v723 = vmul.f32 %v721, 1.442695
    %v724 = vpow.pop %v723
    %v725 = vmul.f32 %v722, 1.442695
    %v726 = vpow.pop %v725
    %v727 = vadd.f32 %v724, 1.0
    %v728 = vadd.f32 %v726, 1.0
    %v729 = vrcp.pop %v727
    %v730 = vmul.f32 %v727, %v729
    %v731 = vsub.f32 1.0, %v730
    %v732 = vmul.f32 %v729, %v731
    %v733 = vadd.f32 %v729, %v732
    %vm734 = vweird.f32 %v727
    %vm735 = vweird.f32 %v729
    %vm736 = vmor %vm734, %vm735
    %v737 = vsel %vm736, %v729, %v733
    %v738 = vand.u32 2147483647, %v727
    %vm739 = vcmp.eq.f32.partialorder %v738, 8.507059e+37
    %v740 = vand.u32 %v727, 2147483648
    %v741 = vor.u32 1.1754944e-38, %v740
    %v742 = vsel %vm739, %v741, %v737
    %v743 = vmul.f32 1.0, %v742
    %v744 = vrcp.pop %v728
    %v745 = vmul.f32 %v728, %v744
    %v746 = vsub.f32 1.0, %v745
    %v747 = vmul.f32 %v744, %v746
    %v748 = vadd.f32 %v744, %v747
    %vm749 = vweird.f32 %v728
    %vm750 = vweird.f32 %v744
    %vm751 = vmor %vm749, %vm750
    %v752 = vsel %vm751, %v744, %v748
    %v753 = vand.u32 2147483647, %v728
    %vm754 = vcmp.eq.f32.partialorder %v753, 8.507059e+37
    %v755 = vand.u32 %v728, 2147483648
    %v756 = vor.u32 1.1754944e-38, %v755
    %v757 = vsel %vm754, %v756, %v752
    %v758 = vmul.f32 1.0, %v757
    %v759 = vadd.f32 %v712, %v303
    %v761 = vrot.slane %v759, 6
    %v762 = vrot.slane %v759, 7
    %763 = vrot.lane.b32.xlu0 %v761, 96
    %v764 = vpop.permute.xlu0 %763
    %765 = vrot.lane.b32.xlu0 %v762, 96
    %v766 = vpop.permute.xlu0 %765
    %v769 = vmul.f32 %v743, %v764
    %v770 = vmul.f32 %v758, %v766
    %773 = vrot.lane.b32.xlu0 %v769, 32
    %v774 = vpop.permute.xlu0 %773
    %775 = vrot.lane.b32.xlu0 %v770, 32
    %v776 = vpop.permute.xlu0 %775
    %v779 = vadd.f32 %v189, %v774
    %v780 = vadd.f32 %v191, %v776
    %v781 = vtanh.pop %v779
    %v782 = vtanh.pop %v780
    %v783 = vsub.f32 1.0, %v743
    %v784 = vsub.f32 1.0, %v758
    %787 = vrot.lane.b32.xlu0 %v781, 112
    %v788 = vpop.permute.xlu0 %787
    %789 = vrot.lane.b32.xlu0 %v782, 112
    %v790 = vpop.permute.xlu0 %789
    %v793 = vmul.f32 %v783, %v788
    %v794 = vmul.f32 %v784, %v790
    %v795 = vrot.slane %v566, 7
    %v796 = vrot.slane %v567, 7
    %v799 = vmul.f32 %v743, %v795
    %v800 = vmul.f32 %v758, %v796
    %v801 = vadd.f32 %v793, %v799
    %v802 = vadd.f32 %v794, %v800
    %v805 = vrot.slane %v684, 6
    %v806 = vrot.slane %v685, 5
    %v807 = vsel %vm456, %v806, %v805
    %808 = vrot.lane.b32.xlu0 %v807, 112
    %v809 = vpop.permute.xlu0 %808
    %v810 = vsel %vm233, %v809, 0
    %812 = vmatpush.msra.mxu0 0.0
    %813 = vmatpush.msra.mxu0 0.0
    %814 = vmatpush.msra.mxu0 0.0
    %815 = vmatpush.msra.mxu0 0.0
    %816 = vmatpush.msra.mxu0 0.0
    %817 = vmatpush.msra.mxu0 0.0
    %818 = vmatpush.msra.mxu0 0.0
    %819 = vmatpush.msra.mxu0 0.0
    %820 = vmatpush.msra.mxu0 0.0
    %821 = vmatpush.msra.mxu0 0.0
    %822 = vmatpush.msra.mxu0 0.0
    %823 = vmatpush.msra.mxu0 0.0
    %824 = vmatpush.msra.mxu0 0.0
    %825 = vmatpush.msra.mxu0 0.0
    %826 = vmatpush.msra.mxu0 %v228
    %827 = vmatpush.msra.mxu0 %v227
    %828 = vmatmul.f32.gmra.mxu0 %v810
    %v829 = vpop.f32.mrf.mxu0
    %v830 = vadd.f32 0.0, %v829
    %831 = vdwg.mxu0
    %v833 = vrot.slane %v830, 3
    %v834 = vrot.slane %v830, 4
    %v837 = vadd.f32 %v221, %v833
    %v838 = vadd.f32 %v223, %v834
    %v839 = vxor.u32 %v837, 2147483648
    %v840 = vxor.u32 %v838, 2147483648
    %v841 = vmul.f32 %v839, 1.442695
    %v842 = vpow.pop %v841
    %v843 = vmul.f32 %v840, 1.442695
    %v844 = vpow.pop %v843
    %v845 = vadd.f32 %v842, 1.0
    %v846 = vadd.f32 %v844, 1.0
    %v847 = vrcp.pop %v845
    %v848 = vmul.f32 %v845, %v847
    %v849 = vsub.f32 1.0, %v848
    %v850 = vmul.f32 %v847, %v849
    %v851 = vadd.f32 %v847, %v850
    %vm852 = vweird.f32 %v845
    %vm853 = vweird.f32 %v847
    %vm854 = vmor %vm852, %vm853
    %v855 = vsel %vm854, %v847, %v851
    %v856 = vand.u32 2147483647, %v845
    %vm857 = vcmp.eq.f32.partialorder %v856, 8.507059e+37
    %v858 = vand.u32 %v845, 2147483648
    %v859 = vor.u32 1.1754944e-38, %v858
    %v860 = vsel %vm857, %v859, %v855
    %v861 = vmul.f32 1.0, %v860
    %v862 = vrcp.pop %v846
    %v863 = vmul.f32 %v846, %v862
    %v864 = vsub.f32 1.0, %v863
    %v865 = vmul.f32 %v862, %v864
    %v866 = vadd.f32 %v862, %v865
    %vm867 = vweird.f32 %v846
    %vm868 = vweird.f32 %v862
    %vm869 = vmor %vm867, %vm868
    %v870 = vsel %vm869, %v862, %v866
    %v871 = vand.u32 2147483647, %v846
    %vm872 = vcmp.eq.f32.partialorder %v871, 8.507059e+37
    %v873 = vand.u32 %v846, 2147483648
    %v874 = vor.u32 1.1754944e-38, %v873
    %v875 = vsel %vm872, %v874, %v870
    %v876 = vmul.f32 1.0, %v875
    %v877 = vadd.f32 %v830, %v411
    %v879 = vrot.slane %v877, 3
    %v880 = vrot.slane %v877, 4
    %881 = vrot.lane.b32.xlu0 %v879, 96
    %v882 = vpop.permute.xlu0 %881
    %883 = vrot.lane.b32.xlu0 %v880, 96
    %v884 = vpop.permute.xlu0 %883
    %v887 = vmul.f32 %v861, %v882
    %v888 = vmul.f32 %v876, %v884
    %891 = vrot.lane.b32.xlu0 %v887, 32
    %v892 = vpop.permute.xlu0 %891
    %893 = vrot.lane.b32.xlu0 %v888, 32
    %v894 = vpop.permute.xlu0 %893
    %v897 = vadd.f32 %v221, %v892
    %v898 = vadd.f32 %v223, %v894
    %v899 = vtanh.pop %v897
    %v900 = vtanh.pop %v898
    %v901 = vsub.f32 1.0, %v861
    %v902 = vsub.f32 1.0, %v876
    %905 = vrot.lane.b32.xlu0 %v899, 112
    %v906 = vpop.permute.xlu0 %905
    %907 = vrot.lane.b32.xlu0 %v900, 112
    %v908 = vpop.permute.xlu0 %907
    %v911 = vmul.f32 %v901, %v906
    %v912 = vmul.f32 %v902, %v908
    %v913 = vrot.slane %v684, 1
    %v914 = vrot.slane %v685, 1
    %v917 = vmul.f32 %v861, %v913
    %v918 = vmul.f32 %v876, %v914
    %v919 = vadd.f32 %v911, %v917
    %v920 = vadd.f32 %v912, %v918
    %v923 = vrot.slane %v801, 2
    %v924 = vrot.slane %v802, 1
    %v925 = vsel %vm456, %v924, %v923
    %926 = vrot.lane.b32.xlu0 %v925, 112
    %v927 = vpop.permute.xlu0 %926
    %v928 = vsel %vm233, %v927, 0
    %930 = vmatpush.msra.mxu0 0.0
    %931 = vmatpush.msra.mxu0 0.0
    %932 = vmatpush.msra.mxu0 0.0
    %933 = vmatpush.msra.mxu0 0.0
    %934 = vmatpush.msra.mxu0 0.0
    %935 = vmatpush.msra.mxu0 0.0
    %936 = vmatpush.msra.mxu0 0.0
    %937 = vmatpush.msra.mxu0 0.0
    %938 = vmatpush.msra.mxu0 0.0
    %939 = vmatpush.msra.mxu0 0.0
    %940 = vmatpush.msra.mxu0 0.0
    %941 = vmatpush.msra.mxu0 0.0
    %942 = vmatpush.msra.mxu0 0.0
    %943 = vmatpush.msra.mxu0 0.0
    %944 = vmatpush.msra.mxu0 %v226
    %945 = vmatpush.msra.mxu0 %v225
    %946 = vmatmul.f32.gmra.mxu0 %v928
    %v947 = vpop.f32.mrf.mxu0
    %v948 = vadd.f32 0.0, %v947
    %949 = vdwg.mxu0
    %v951 = vrot.slane %v948, 5
    %v952 = vrot.slane %v948, 6
    %v955 = vadd.f32 %v189, %v951
    %v956 = vadd.f32 %v191, %v952
    %v957 = vxor.u32 %v955, 2147483648
    %v958 = vxor.u32 %v956, 2147483648
    %v959 = vmul.f32 %v957, 1.442695
    %v960 = vpow.pop %v959
    %v961 = vmul.f32 %v958, 1.442695
    %v962 = vpow.pop %v961
    %v963 = vadd.f32 %v960, 1.0
    %v964 = vadd.f32 %v962, 1.0
    %v965 = vrcp.pop %v963
    %v966 = vmul.f32 %v963, %v965
    %v967 = vsub.f32 1.0, %v966
    %v968 = vmul.f32 %v965, %v967
    %v969 = vadd.f32 %v965, %v968
    %vm970 = vweird.f32 %v963
    %vm971 = vweird.f32 %v965
    %vm972 = vmor %vm970, %vm971
    %v973 = vsel %vm972, %v965, %v969
    %v974 = vand.u32 2147483647, %v963
    %vm975 = vcmp.eq.f32.partialorder %v974, 8.507059e+37
    %v976 = vand.u32 %v963, 2147483648
    %v977 = vor.u32 1.1754944e-38, %v976
    %v978 = vsel %vm975, %v977, %v973
    %v979 = vmul.f32 1.0, %v978
    %v980 = vrcp.pop %v964
    %v981 = vmul.f32 %v964, %v980
    %v982 = vsub.f32 1.0, %v981
    %v983 = vmul.f32 %v980, %v982
    %v984 = vadd.f32 %v980, %v983
    %vm985 = vweird.f32 %v964
    %vm986 = vweird.f32 %v980
    %vm987 = vmor %vm985, %vm986
    %v988 = vsel %vm987, %v980, %v984
    %v989 = vand.u32 2147483647, %v964
    %vm990 = vcmp.eq.f32.partialorder %v989, 8.507059e+37
    %v991 = vand.u32 %v964, 2147483648
    %v992 = vor.u32 1.1754944e-38, %v991
    %v993 = vsel %vm990, %v992, %v988
    %v994 = vmul.f32 1.0, %v993
    %v995 = vadd.f32 %v948, %v303
    %v997 = vrot.slane %v995, 5
    %v998 = vrot.slane %v995, 6
    %999 = vrot.lane.b32.xlu0 %v997, 96
    %v1000 = vpop.permute.xlu0 %999
    %1001 = vrot.lane.b32.xlu0 %v998, 96
    %v1002 = vpop.permute.xlu0 %1001
    %v1005 = vmul.f32 %v979, %v1000
    %v1006 = vmul.f32 %v994, %v1002
    %1009 = vrot.lane.b32.xlu0 %v1005, 32
    %v1010 = vpop.permute.xlu0 %1009
    %1011 = vrot.lane.b32.xlu0 %v1006, 32
    %v1012 = vpop.permute.xlu0 %1011
    %v1015 = vadd.f32 %v189, %v1010
    %v1016 = vadd.f32 %v191, %v1012
    %v1017 = vtanh.pop %v1015
    %v1018 = vtanh.pop %v1016
    %v1019 = vsub.f32 1.0, %v979
    %v1020 = vsub.f32 1.0, %v994
    %1023 = vrot.lane.b32.xlu0 %v1017, 112
    %v1024 = vpop.permute.xlu0 %1023
    %1025 = vrot.lane.b32.xlu0 %v1018, 112
    %v1026 = vpop.permute.xlu0 %1025
    %v1029 = vmul.f32 %v1019, %v1024
    %v1030 = vmul.f32 %v1020, %v1026
    %v1031 = vrot.slane %v801, 7
    %v1032 = vrot.slane %v802, 7
    %v1035 = vmul.f32 %v979, %v1031
    %v1036 = vmul.f32 %v994, %v1032
    %v1037 = vadd.f32 %v1029, %v1035
    %v1038 = vadd.f32 %v1030, %v1036
    %v1041 = vrot.slane %v919, 5
    %v1042 = vrot.slane %v920, 4
    %v1043 = vsel %vm456, %v1042, %v1041
    %1044 = vrot.lane.b32.xlu0 %v1043, 112
    %v1045 = vpop.permute.xlu0 %1044
    %v1046 = vsel %vm233, %v1045, 0
    %1048 = vmatpush.msra.mxu0 0.0
    %1049 = vmatpush.msra.mxu0 0.0
    %1050 = vmatpush.msra.mxu0 0.0
    %1051 = vmatpush.msra.mxu0 0.0
    %1052 = vmatpush.msra.mxu0 0.0
    %1053 = vmatpush.msra.mxu0 0.0
    %1054 = vmatpush.msra.mxu0 0.0
    %1055 = vmatpush.msra.mxu0 0.0
    %1056 = vmatpush.msra.mxu0 0.0
    %1057 = vmatpush.msra.mxu0 0.0
    %1058 = vmatpush.msra.mxu0 0.0
    %1059 = vmatpush.msra.mxu0 0.0
    %1060 = vmatpush.msra.mxu0 0.0
    %1061 = vmatpush.msra.mxu0 0.0
    %1062 = vmatpush.msra.mxu0 %v228
    %1063 = vmatpush.msra.mxu0 %v227
    %1064 = vmatmul.f32.gmra.mxu0 %v1046
    %v1065 = vpop.f32.mrf.mxu0
    %v1066 = vadd.f32 0.0, %v1065
    %1067 = vdwg.mxu0
    %v1069 = vrot.slane %v1066, 4
    %v1070 = vrot.slane %v1066, 5
    %v1073 = vadd.f32 %v221, %v1069
    %v1074 = vadd.f32 %v223, %v1070
    %v1075 = vxor.u32 %v1073, 2147483648
    %v1076 = vxor.u32 %v1074, 2147483648
    %v1077 = vmul.f32 %v1075, 1.442695
    %v1078 = vpow.pop %v1077
    %v1079 = vmul.f32 %v1076, 1.442695
    %v1080 = vpow.pop %v1079
    %v1081 = vadd.f32 %v1078, 1.0
    %v1082 = vadd.f32 %v1080, 1.0
    %v1083 = vrcp.pop %v1081
    %v1084 = vmul.f32 %v1081, %v1083
    %v1085 = vsub.f32 1.0, %v1084
    %v1086 = vmul.f32 %v1083, %v1085
    %v1087 = vadd.f32 %v1083, %v1086
    %vm1088 = vweird.f32 %v1081
    %vm1089 = vweird.f32 %v1083
    %vm1090 = vmor %vm1088, %vm1089
    %v1091 = vsel %vm1090, %v1083, %v1087
    %v1092 = vand.u32 2147483647, %v1081
    %vm1093 = vcmp.eq.f32.partialorder %v1092, 8.507059e+37
    %v1094 = vand.u32 %v1081, 2147483648
    %v1095 = vor.u32 1.1754944e-38, %v1094
    %v1096 = vsel %vm1093, %v1095, %v1091
    %v1097 = vmul.f32 1.0, %v1096
    %v1098 = vrcp.pop %v1082
    %v1099 = vmul.f32 %v1082, %v1098
    %v1100 = vsub.f32 1.0, %v1099
    %v1101 = vmul.f32 %v1098, %v1100
    %v1102 = vadd.f32 %v1098, %v1101
    %vm1103 = vweird.f32 %v1082
    %vm1104 = vweird.f32 %v1098
    %vm1105 = vmor %vm1103, %vm1104
    %v1106 = vsel %vm1105, %v1098, %v1102
    %v1107 = vand.u32 2147483647, %v1082
    %vm1108 = vcmp.eq.f32.partialorder %v1107, 8.507059e+37
    %v1109 = vand.u32 %v1082, 2147483648
    %v1110 = vor.u32 1.1754944e-38, %v1109
    %v1111 = vsel %vm1108, %v1110, %v1106
    %v1112 = vmul.f32 1.0, %v1111
    %v1113 = vadd.f32 %v1066, %v411
    %v1115 = vrot.slane %v1113, 4
    %v1116 = vrot.slane %v1113, 5
    %1117 = vrot.lane.b32.xlu0 %v1115, 96
    %v1118 = vpop.permute.xlu0 %1117
    %1119 = vrot.lane.b32.xlu0 %v1116, 96
    %v1120 = vpop.permute.xlu0 %1119
    %v1123 = vmul.f32 %v1097, %v1118
    %v1124 = vmul.f32 %v1112, %v1120
    %1127 = vrot.lane.b32.xlu0 %v1123, 32
    %v1128 = vpop.permute.xlu0 %1127
    %1129 = vrot.lane.b32.xlu0 %v1124, 32
    %v1130 = vpop.permute.xlu0 %1129
    %v1133 = vadd.f32 %v221, %v1128
    %v1134 = vadd.f32 %v223, %v1130
    %v1135 = vtanh.pop %v1133
    %v1136 = vtanh.pop %v1134
    %v1137 = vsub.f32 1.0, %v1097
    %v1138 = vsub.f32 1.0, %v1112
    %1141 = vrot.lane.b32.xlu0 %v1135, 112
    %v1142 = vpop.permute.xlu0 %1141
    %1143 = vrot.lane.b32.xlu0 %v1136, 112
    %v1144 = vpop.permute.xlu0 %1143
    %v1147 = vmul.f32 %v1137, %v1142
    %v1148 = vmul.f32 %v1138, %v1144
    %v1149 = vrot.slane %v919, 1
    %v1150 = vrot.slane %v920, 1
    %v1153 = vmul.f32 %v1097, %v1149
    %v1154 = vmul.f32 %v1112, %v1150
    %v1155 = vadd.f32 %v1147, %v1153
    %v1156 = vadd.f32 %v1148, %v1154
    %v1159 = vrot.slane %v1037, 3
    %v1160 = vrot.slane %v1038, 2
    %v1161 = vsel %vm456, %v1160, %v1159
    %1162 = vrot.lane.b32.xlu0 %v1161, 112
    %v1163 = vpop.permute.xlu0 %1162
    %v1164 = vsel %vm233, %v1163, 0
    %1166 = vmatpush.msra.mxu0 0.0
    %1167 = vmatpush.msra.mxu0 0.0
    %1168 = vmatpush.msra.mxu0 0.0
    %1169 = vmatpush.msra.mxu0 0.0
    %1170 = vmatpush.msra.mxu0 0.0
    %1171 = vmatpush.msra.mxu0 0.0
    %1172 = vmatpush.msra.mxu0 0.0
    %1173 = vmatpush.msra.mxu0 0.0
    %1174 = vmatpush.msra.mxu0 0.0
    %1175 = vmatpush.msra.mxu0 0.0
    %1176 = vmatpush.msra.mxu0 0.0
    %1177 = vmatpush.msra.mxu0 0.0
    %1178 = vmatpush.msra.mxu0 0.0
    %1179 = vmatpush.msra.mxu0 0.0
    %1180 = vmatpush.msra.mxu0 %v226
    %1181 = vmatpush.msra.mxu0 %v225
    %1182 = vmatmul.f32.gmra.mxu0 %v1164
    %v1183 = vpop.f32.mrf.mxu0
    %v1184 = vadd.f32 0.0, %v1183
    %1185 = vdwg.mxu0
    %v1187 = vrot.slane %v1184, 4
    %v1188 = vrot.slane %v1184, 5
    %v1191 = vadd.f32 %v189, %v1187
    %v1192 = vadd.f32 %v191, %v1188
    %v1193 = vxor.u32 %v1191, 2147483648
    %v1194 = vxor.u32 %v1192, 2147483648
    %v1195 = vmul.f32 %v1193, 1.442695
    %v1196 = vpow.pop %v1195
    %v1197 = vmul.f32 %v1194, 1.442695
    %v1198 = vpow.pop %v1197
    %v1199 = vadd.f32 %v1196, 1.0
    %v1200 = vadd.f32 %v1198, 1.0
    %v1201 = vrcp.pop %v1199
    %v1202 = vmul.f32 %v1199, %v1201
    %v1203 = vsub.f32 1.0, %v1202
    %v1204 = vmul.f32 %v1201, %v1203
    %v1205 = vadd.f32 %v1201, %v1204
    %vm1206 = vweird.f32 %v1199
    %vm1207 = vweird.f32 %v1201
    %vm1208 = vmor %vm1206, %vm1207
    %v1209 = vsel %vm1208, %v1201, %v1205
    %v1210 = vand.u32 2147483647, %v1199
    %vm1211 = vcmp.eq.f32.partialorder %v1210, 8.507059e+37
    %v1212 = vand.u32 %v1199, 2147483648
    %v1213 = vor.u32 1.1754944e-38, %v1212
    %v1214 = vsel %vm1211, %v1213, %v1209
    %v1215 = vmul.f32 1.0, %v1214
    %v1216 = vrcp.pop %v1200
    %v1217 = vmul.f32 %v1200, %v1216
    %v1218 = vsub.f32 1.0, %v1217
    %v1219 = vmul.f32 %v1216, %v1218
    %v1220 = vadd.f32 %v1216, %v1219
    %vm1221 = vweird.f32 %v1200
    %vm1222 = vweird.f32 %v1216
    %vm1223 = vmor %vm1221, %vm1222
    %v1224 = vsel %vm1223, %v1216, %v1220
    %v1225 = vand.u32 2147483647, %v1200
    %vm1226 = vcmp.eq.f32.partialorder %v1225, 8.507059e+37
    %v1227 = vand.u32 %v1200, 2147483648
    %v1228 = vor.u32 1.1754944e-38, %v1227
    %v1229 = vsel %vm1226, %v1228, %v1224
    %v1230 = vmul.f32 1.0, %v1229
    %v1231 = vadd.f32 %v1184, %v303
    %v1233 = vrot.slane %v1231, 4
    %v1234 = vrot.slane %v1231, 5
    %1235 = vrot.lane.b32.xlu0 %v1233, 96
    %v1236 = vpop.permute.xlu0 %1235
    %1237 = vrot.lane.b32.xlu0 %v1234, 96
    %v1238 = vpop.permute.xlu0 %1237
    %v1241 = vmul.f32 %v1215, %v1236
    %v1242 = vmul.f32 %v1230, %v1238
    %1245 = vrot.lane.b32.xlu0 %v1241, 32
    %v1246 = vpop.permute.xlu0 %1245
    %1247 = vrot.lane.b32.xlu0 %v1242, 32
    %v1248 = vpop.permute.xlu0 %1247
    %v1251 = vadd.f32 %v189, %v1246
    %v1252 = vadd.f32 %v191, %v1248
    %v1253 = vtanh.pop %v1251
    %v1254 = vtanh.pop %v1252
    %v1255 = vsub.f32 1.0, %v1215
    %v1256 = vsub.f32 1.0, %v1230
    %1259 = vrot.lane.b32.xlu0 %v1253, 112
    %v1260 = vpop.permute.xlu0 %1259
    %1261 = vrot.lane.b32.xlu0 %v1254, 112
    %v1262 = vpop.permute.xlu0 %1261
    %v1265 = vmul.f32 %v1255, %v1260
    %v1266 = vmul.f32 %v1256, %v1262
    %v1267 = vrot.slane %v1037, 7
    %v1268 = vrot.slane %v1038, 7
    %v1271 = vmul.f32 %v1215, %v1267
    %v1272 = vmul.f32 %v1230, %v1268
    %v1273 = vadd.f32 %v1265, %v1271
    %v1274 = vadd.f32 %v1266, %v1272
    %v1277 = vrot.slane %v1155, 4
    %v1278 = vrot.slane %v1156, 3
    %v1279 = vsel %vm456, %v1278, %v1277
    %1280 = vrot.lane.b32.xlu0 %v1279, 112
    %v1281 = vpop.permute.xlu0 %1280
    %v1282 = vsel %vm233, %v1281, 0
    %1284 = vmatpush.msra.mxu0 0.0
    %1285 = vmatpush.msra.mxu0 0.0
    %1286 = vmatpush.msra.mxu0 0.0
    %1287 = vmatpush.msra.mxu0 0.0
    %1288 = vmatpush.msra.mxu0 0.0
    %1289 = vmatpush.msra.mxu0 0.0
    %1290 = vmatpush.msra.mxu0 0.0
    %1291 = vmatpush.msra.mxu0 0.0
    %1292 = vmatpush.msra.mxu0 0.0
    %1293 = vmatpush.msra.mxu0 0.0
    %1294 = vmatpush.msra.mxu0 0.0
    %1295 = vmatpush.msra.mxu0 0.0
    %1296 = vmatpush.msra.mxu0 0.0
    %1297 = vmatpush.msra.mxu0 0.0
    %1298 = vmatpush.msra.mxu0 %v228
    %1299 = vmatpush.msra.mxu0 %v227
    %1300 = vmatmul.f32.gmra.mxu0 %v1282
    %v1301 = vpop.f32.mrf.mxu0
    %v1302 = vadd.f32 0.0, %v1301
    %1303 = vdwg.mxu0
    %v1305 = vrot.slane %v1302, 5
    %v1306 = vrot.slane %v1302, 6
    %v1309 = vadd.f32 %v221, %v1305
    %v1310 = vadd.f32 %v223, %v1306
    %v1311 = vxor.u32 %v1309, 2147483648
    %v1312 = vxor.u32 %v1310, 2147483648
    %v1313 = vmul.f32 %v1311, 1.442695
    %v1314 = vpow.pop %v1313
    %v1315 = vmul.f32 %v1312, 1.442695
    %v1316 = vpow.pop %v1315
    %v1317 = vadd.f32 %v1314, 1.0
    %v1318 = vadd.f32 %v1316, 1.0
    %v1319 = vrcp.pop %v1317
    %v1320 = vmul.f32 %v1317, %v1319
    %v1321 = vsub.f32 1.0, %v1320
    %v1322 = vmul.f32 %v1319, %v1321
    %v1323 = vadd.f32 %v1319, %v1322
    %vm1324 = vweird.f32 %v1317
    %vm1325 = vweird.f32 %v1319
    %vm1326 = vmor %vm1324, %vm1325
    %v1327 = vsel %vm1326, %v1319, %v1323
    %v1328 = vand.u32 2147483647, %v1317
    %vm1329 = vcmp.eq.f32.partialorder %v1328, 8.507059e+37
    %v1330 = vand.u32 %v1317, 2147483648
    %v1331 = vor.u32 1.1754944e-38, %v1330
    %v1332 = vsel %vm1329, %v1331, %v1327
    %v1333 = vmul.f32 1.0, %v1332
    %v1334 = vrcp.pop %v1318
    %v1335 = vmul.f32 %v1318, %v1334
    %v1336 = vsub.f32 1.0, %v1335
    %v1337 = vmul.f32 %v1334, %v1336
    %v1338 = vadd.f32 %v1334, %v1337
    %vm1339 = vweird.f32 %v1318
    %vm1340 = vweird.f32 %v1334
    %vm1341 = vmor %vm1339, %vm1340
    %v1342 = vsel %vm1341, %v1334, %v1338
    %v1343 = vand.u32 2147483647, %v1318
    %vm1344 = vcmp.eq.f32.partialorder %v1343, 8.507059e+37
    %v1345 = vand.u32 %v1318, 2147483648
    %v1346 = vor.u32 1.1754944e-38, %v1345
    %v1347 = vsel %vm1344, %v1346, %v1342
    %v1348 = vmul.f32 1.0, %v1347
    %v1349 = vadd.f32 %v1302, %v411
    %v1351 = vrot.slane %v1349, 5
    %v1352 = vrot.slane %v1349, 6
    %1353 = vrot.lane.b32.xlu0 %v1351, 96
    %v1354 = vpop.permute.xlu0 %1353
    %1355 = vrot.lane.b32.xlu0 %v1352, 96
    %v1356 = vpop.permute.xlu0 %1355
    %v1359 = vmul.f32 %v1333, %v1354
    %v1360 = vmul.f32 %v1348, %v1356
    %1363 = vrot.lane.b32.xlu0 %v1359, 32
    %v1364 = vpop.permute.xlu0 %1363
    %1365 = vrot.lane.b32.xlu0 %v1360, 32
    %v1366 = vpop.permute.xlu0 %1365
    %v1369 = vadd.f32 %v221, %v1364
    %v1370 = vadd.f32 %v223, %v1366
    %v1371 = vtanh.pop %v1369
    %v1372 = vtanh.pop %v1370
    %v1373 = vsub.f32 1.0, %v1333
    %v1374 = vsub.f32 1.0, %v1348
    %1377 = vrot.lane.b32.xlu0 %v1371, 112
    %v1378 = vpop.permute.xlu0 %1377
    %1379 = vrot.lane.b32.xlu0 %v1372, 112
    %v1380 = vpop.permute.xlu0 %1379
    %v1383 = vmul.f32 %v1373, %v1378
    %v1384 = vmul.f32 %v1374, %v1380
    %v1385 = vrot.slane %v1155, 1
    %v1386 = vrot.slane %v1156, 1
    %v1389 = vmul.f32 %v1333, %v1385
    %v1390 = vmul.f32 %v1348, %v1386
    %v1391 = vadd.f32 %v1383, %v1389
    %v1392 = vadd.f32 %v1384, %v1390
    %v1395 = vrot.slane %v1273, 4
    %v1396 = vrot.slane %v1274, 3
    %v1397 = vsel %vm456, %v1396, %v1395
    %1398 = vrot.lane.b32.xlu0 %v1397, 112
    %v1399 = vpop.permute.xlu0 %1398
    %v1400 = vsel %vm233, %v1399, 0
    %1402 = vmatpush.msra.mxu0 0.0
    %1403 = vmatpush.msra.mxu0 0.0
    %1404 = vmatpush.msra.mxu0 0.0
    %1405 = vmatpush.msra.mxu0 0.0
    %1406 = vmatpush.msra.mxu0 0.0
    %1407 = vmatpush.msra.mxu0 0.0
    %1408 = vmatpush.msra.mxu0 0.0
    %1409 = vmatpush.msra.mxu0 0.0
    %1410 = vmatpush.msra.mxu0 0.0
    %1411 = vmatpush.msra.mxu0 0.0
    %1412 = vmatpush.msra.mxu0 0.0
    %1413 = vmatpush.msra.mxu0 0.0
    %1414 = vmatpush.msra.mxu0 0.0
    %1415 = vmatpush.msra.mxu0 0.0
    %1416 = vmatpush.msra.mxu0 %v226
    %1417 = vmatpush.msra.mxu0 %v225
    %1418 = vmatmul.f32.gmra.mxu0 %v1400
    %v1419 = vpop.f32.mrf.mxu0
    %v1420 = vadd.f32 0.0, %v1419
    %1421 = vdwg.mxu0
    %v1423 = vrot.slane %v1420, 3
    %v1424 = vrot.slane %v1420, 4
    %v1427 = vadd.f32 %v189, %v1423
    %v1428 = vadd.f32 %v191, %v1424
    %v1429 = vxor.u32 %v1427, 2147483648
    %v1430 = vxor.u32 %v1428, 2147483648
    %v1431 = vmul.f32 %v1429, 1.442695
    %v1432 = vpow.pop %v1431
    %v1433 = vmul.f32 %v1430, 1.442695
    %v1434 = vpow.pop %v1433
    %v1435 = vadd.f32 %v1432, 1.0
    %v1436 = vadd.f32 %v1434, 1.0
    %v1437 = vrcp.pop %v1435
    %v1438 = vmul.f32 %v1435, %v1437
    %v1439 = vsub.f32 1.0, %v1438
    %v1440 = vmul.f32 %v1437, %v1439
    %v1441 = vadd.f32 %v1437, %v1440
    %vm1442 = vweird.f32 %v1435
    %vm1443 = vweird.f32 %v1437
    %vm1444 = vmor %vm1442, %vm1443
    %v1445 = vsel %vm1444, %v1437, %v1441
    %v1446 = vand.u32 2147483647, %v1435
    %vm1447 = vcmp.eq.f32.partialorder %v1446, 8.507059e+37
    %v1448 = vand.u32 %v1435, 2147483648
    %v1449 = vor.u32 1.1754944e-38, %v1448
    %v1450 = vsel %vm1447, %v1449, %v1445
    %v1451 = vmul.f32 1.0, %v1450
    %v1452 = vrcp.pop %v1436
    %v1453 = vmul.f32 %v1436, %v1452
    %v1454 = vsub.f32 1.0, %v1453
    %v1455 = vmul.f32 %v1452, %v1454
    %v1456 = vadd.f32 %v1452, %v1455
    %vm1457 = vweird.f32 %v1436
    %vm1458 = vweird.f32 %v1452
    %vm1459 = vmor %vm1457, %vm1458
    %v1460 = vsel %vm1459, %v1452, %v1456
    %v1461 = vand.u32 2147483647, %v1436
    %vm1462 = vcmp.eq.f32.partialorder %v1461, 8.507059e+37
    %v1463 = vand.u32 %v1436, 2147483648
    %v1464 = vor.u32 1.1754944e-38, %v1463
    %v1465 = vsel %vm1462, %v1464, %v1460
    %v1466 = vmul.f32 1.0, %v1465
    %v1467 = vadd.f32 %v1420, %v303
    %v1469 = vrot.slane %v1467, 3
    %v1470 = vrot.slane %v1467, 4
    %1471 = vrot.lane.b32.xlu0 %v1469, 96
    %v1472 = vpop.permute.xlu0 %1471
    %1473 = vrot.lane.b32.xlu0 %v1470, 96
    %v1474 = vpop.permute.xlu0 %1473
    %v1477 = vmul.f32 %v1451, %v1472
    %v1478 = vmul.f32 %v1466, %v1474
    %1481 = vrot.lane.b32.xlu0 %v1477, 32
    %v1482 = vpop.permute.xlu0 %1481
    %1483 = vrot.lane.b32.xlu0 %v1478, 32
    %v1484 = vpop.permute.xlu0 %1483
    %v1487 = vadd.f32 %v189, %v1482
    %v1488 = vadd.f32 %v191, %v1484
    %v1489 = vtanh.pop %v1487
    %v1490 = vtanh.pop %v1488
    %v1491 = vsub.f32 1.0, %v1451
    %v1492 = vsub.f32 1.0, %v1466
    %1495 = vrot.lane.b32.xlu0 %v1489, 112
    %v1496 = vpop.permute.xlu0 %1495
    %1497 = vrot.lane.b32.xlu0 %v1490, 112
    %v1498 = vpop.permute.xlu0 %1497
    %v1501 = vmul.f32 %v1491, %v1496
    %v1502 = vmul.f32 %v1492, %v1498
    %v1503 = vrot.slane %v1273, 7
    %v1504 = vrot.slane %v1274, 7
    %v1507 = vmul.f32 %v1451, %v1503
    %v1508 = vmul.f32 %v1466, %v1504
    %v1509 = vadd.f32 %v1501, %v1507
    %v1510 = vadd.f32 %v1502, %v1508
    %v1513 = vrot.slane %v1391, 3
    %v1514 = vrot.slane %v1392, 2
    %v1515 = vsel %vm456, %v1514, %v1513
    %1516 = vrot.lane.b32.xlu0 %v1515, 112
    %v1517 = vpop.permute.xlu0 %1516
    %v1518 = vsel %vm233, %v1517, 0
    %1520 = vmatpush.msra.mxu0 0.0
    %1521 = vmatpush.msra.mxu0 0.0
    %1522 = vmatpush.msra.mxu0 0.0
    %1523 = vmatpush.msra.mxu0 0.0
    %1524 = vmatpush.msra.mxu0 0.0
    %1525 = vmatpush.msra.mxu0 0.0
    %1526 = vmatpush.msra.mxu0 0.0
    %1527 = vmatpush.msra.mxu0 0.0
    %1528 = vmatpush.msra.mxu0 0.0
    %1529 = vmatpush.msra.mxu0 0.0
    %1530 = vmatpush.msra.mxu0 0.0
    %1531 = vmatpush.msra.mxu0 0.0
    %1532 = vmatpush.msra.mxu0 0.0
    %1533 = vmatpush.msra.mxu0 0.0
    %1534 = vmatpush.msra.mxu0 %v228
    %1535 = vmatpush.msra.mxu0 %v227
    %1536 = vmatmul.f32.gmra.mxu0 %v1518
    %v1537 = vpop.f32.mrf.mxu0
    %v1538 = vadd.f32 0.0, %v1537
    %1539 = vdwg.mxu0
    %v1541 = vrot.slane %v1538, 6
    %v1542 = vrot.slane %v1538, 7
    %v1545 = vadd.f32 %v221, %v1541
    %v1546 = vadd.f32 %v223, %v1542
    %v1547 = vxor.u32 %v1545, 2147483648
    %v1548 = vxor.u32 %v1546, 2147483648
    %v1549 = vmul.f32 %v1547, 1.442695
    %v1550 = vpow.pop %v1549
    %v1551 = vmul.f32 %v1548, 1.442695
    %v1552 = vpow.pop %v1551
    %v1553 = vadd.f32 %v1550, 1.0
    %v1554 = vadd.f32 %v1552, 1.0
    %v1555 = vrcp.pop %v1553
    %v1556 = vmul.f32 %v1553, %v1555
    %v1557 = vsub.f32 1.0, %v1556
    %v1558 = vmul.f32 %v1555, %v1557
    %v1559 = vadd.f32 %v1555, %v1558
    %vm1560 = vweird.f32 %v1553
    %vm1561 = vweird.f32 %v1555
    %vm1562 = vmor %vm1560, %vm1561
    %v1563 = vsel %vm1562, %v1555, %v1559
    %v1564 = vand.u32 2147483647, %v1553
    %vm1565 = vcmp.eq.f32.partialorder %v1564, 8.507059e+37
    %v1566 = vand.u32 %v1553, 2147483648
    %v1567 = vor.u32 1.1754944e-38, %v1566
    %v1568 = vsel %vm1565, %v1567, %v1563
    %v1569 = vmul.f32 1.0, %v1568
    %v1570 = vrcp.pop %v1554
    %v1571 = vmul.f32 %v1554, %v1570
    %v1572 = vsub.f32 1.0, %v1571
    %v1573 = vmul.f32 %v1570, %v1572
    %v1574 = vadd.f32 %v1570, %v1573
    %vm1575 = vweird.f32 %v1554
    %vm1576 = vweird.f32 %v1570
    %vm1577 = vmor %vm1575, %vm1576
    %v1578 = vsel %vm1577, %v1570, %v1574
    %v1579 = vand.u32 2147483647, %v1554
    %vm1580 = vcmp.eq.f32.partialorder %v1579, 8.507059e+37
    %v1581 = vand.u32 %v1554, 2147483648
    %v1582 = vor.u32 1.1754944e-38, %v1581
    %v1583 = vsel %vm1580, %v1582, %v1578
    %v1584 = vmul.f32 1.0, %v1583
    %v1585 = vadd.f32 %v1538, %v411
    %v1587 = vrot.slane %v1585, 6
    %v1588 = vrot.slane %v1585, 7
    %1589 = vrot.lane.b32.xlu0 %v1587, 96
    %v1590 = vpop.permute.xlu0 %1589
    %1591 = vrot.lane.b32.xlu0 %v1588, 96
    %v1592 = vpop.permute.xlu0 %1591
    %v1595 = vmul.f32 %v1569, %v1590
    %v1596 = vmul.f32 %v1584, %v1592
    %1599 = vrot.lane.b32.xlu0 %v1595, 32
    %v1600 = vpop.permute.xlu0 %1599
    %1601 = vrot.lane.b32.xlu0 %v1596, 32
    %v1602 = vpop.permute.xlu0 %1601
    %v1605 = vadd.f32 %v221, %v1600
    %v1606 = vadd.f32 %v223, %v1602
    %v1607 = vtanh.pop %v1605
    %v1608 = vtanh.pop %v1606
    %v1609 = vsub.f32 1.0, %v1569
    %v1610 = vsub.f32 1.0, %v1584
    %1613 = vrot.lane.b32.xlu0 %v1607, 112
    %v1614 = vpop.permute.xlu0 %1613
    %1615 = vrot.lane.b32.xlu0 %v1608, 112
    %v1616 = vpop.permute.xlu0 %1615
    %v1619 = vmul.f32 %v1609, %v1614
    %v1620 = vmul.f32 %v1610, %v1616
    %v1621 = vrot.slane %v1391, 1
    %v1622 = vrot.slane %v1392, 1
    %v1625 = vmul.f32 %v1569, %v1621
    %v1626 = vmul.f32 %v1584, %v1622
    %v1627 = vadd.f32 %v1619, %v1625
    %v1628 = vadd.f32 %v1620, %v1626
    %v1631 = vrot.slane %v1509, 5
    %v1632 = vrot.slane %v1510, 4
    %v1633 = vsel %vm456, %v1632, %v1631
    %1634 = vrot.lane.b32.xlu0 %v1633, 112
    %v1635 = vpop.permute.xlu0 %1634
    %v1636 = vsel %vm233, %v1635, 0
    %1638 = vmatpush.msra.mxu0 0.0
    %1639 = vmatpush.msra.mxu0 0.0
    %1640 = vmatpush.msra.mxu0 0.0
    %1641 = vmatpush.msra.mxu0 0.0
    %1642 = vmatpush.msra.mxu0 0.0
    %1643 = vmatpush.msra.mxu0 0.0
    %1644 = vmatpush.msra.mxu0 0.0
    %1645 = vmatpush.msra.mxu0 0.0
    %1646 = vmatpush.msra.mxu0 0.0
    %1647 = vmatpush.msra.mxu0 0.0
    %1648 = vmatpush.msra.mxu0 0.0
    %1649 = vmatpush.msra.mxu0 0.0
    %1650 = vmatpush.msra.mxu0 0.0
    %1651 = vmatpush.msra.mxu0 0.0
    %1652 = vmatpush.msra.mxu0 %v226
    %1653 = vmatpush.msra.mxu0 %v225
    %1654 = vmatmul.f32.gmra.mxu0 %v1636
    %v1655 = vpop.f32.mrf.mxu0
    %v1656 = vadd.f32 0.0, %v1655
    %1657 = vdwg.mxu0
    %v1659 = vrot.slane %v1656, 2
    %v1660 = vrot.slane %v1656, 3
    %v1663 = vadd.f32 %v189, %v1659
    %v1664 = vadd.f32 %v191, %v1660
    %v1665 = vxor.u32 %v1663, 2147483648
    %v1666 = vxor.u32 %v1664, 2147483648
    %v1667 = vmul.f32 %v1665, 1.442695
    %v1668 = vpow.pop %v1667
    %v1669 = vmul.f32 %v1666, 1.442695
    %v1670 = vpow.pop %v1669
    %v1671 = vadd.f32 %v1668, 1.0
    %v1672 = vadd.f32 %v1670, 1.0
    %v1673 = vrcp.pop %v1671
    %v1674 = vmul.f32 %v1671, %v1673
    %v1675 = vsub.f32 1.0, %v1674
    %v1676 = vmul.f32 %v1673, %v1675
    %v1677 = vadd.f32 %v1673, %v1676
    %vm1678 = vweird.f32 %v1671
    %vm1679 = vweird.f32 %v1673
    %vm1680 = vmor %vm1678, %vm1679
    %v1681 = vsel %vm1680, %v1673, %v1677
    %v1682 = vand.u32 2147483647, %v1671
    %vm1683 = vcmp.eq.f32.partialorder %v1682, 8.507059e+37
    %v1684 = vand.u32 %v1671, 2147483648
    %v1685 = vor.u32 1.1754944e-38, %v1684
    %v1686 = vsel %vm1683, %v1685, %v1681
    %v1687 = vmul.f32 1.0, %v1686
    %v1688 = vrcp.pop %v1672
    %v1689 = vmul.f32 %v1672, %v1688
    %v1690 = vsub.f32 1.0, %v1689
    %v1691 = vmul.f32 %v1688, %v1690
    %v1692 = vadd.f32 %v1688, %v1691
    %vm1693 = vweird.f32 %v1672
    %vm1694 = vweird.f32 %v1688
    %vm1695 = vmor %vm1693, %vm1694
    %v1696 = vsel %vm1695, %v1688, %v1692
    %v1697 = vand.u32 2147483647, %v1672
    %vm1698 = vcmp.eq.f32.partialorder %v1697, 8.507059e+37
    %v1699 = vand.u32 %v1672, 2147483648
    %v1700 = vor.u32 1.1754944e-38, %v1699
    %v1701 = vsel %vm1698, %v1700, %v1696
    %v1702 = vmul.f32 1.0, %v1701
    %v1703 = vadd.f32 %v1656, %v303
    %v1705 = vrot.slane %v1703, 2
    %v1706 = vrot.slane %v1703, 3
    %1707 = vrot.lane.b32.xlu0 %v1705, 96
    %v1708 = vpop.permute.xlu0 %1707
    %1709 = vrot.lane.b32.xlu0 %v1706, 96
    %v1710 = vpop.permute.xlu0 %1709
    %v1713 = vmul.f32 %v1687, %v1708
    %v1714 = vmul.f32 %v1702, %v1710
    %1717 = vrot.lane.b32.xlu0 %v1713, 32
    %v1718 = vpop.permute.xlu0 %1717
    %1719 = vrot.lane.b32.xlu0 %v1714, 32
    %v1720 = vpop.permute.xlu0 %1719
    %v1723 = vadd.f32 %v189, %v1718
    %v1724 = vadd.f32 %v191, %v1720
    %v1725 = vtanh.pop %v1723
    %v1726 = vtanh.pop %v1724
    %v1727 = vsub.f32 1.0, %v1687
    %v1728 = vsub.f32 1.0, %v1702
    %1731 = vrot.lane.b32.xlu0 %v1725, 112
    %v1732 = vpop.permute.xlu0 %1731
    %1733 = vrot.lane.b32.xlu0 %v1726, 112
    %v1734 = vpop.permute.xlu0 %1733
    %v1737 = vmul.f32 %v1727, %v1732
    %v1738 = vmul.f32 %v1728, %v1734
    %v1739 = vrot.slane %v1509, 7
    %v1740 = vrot.slane %v1510, 7
    %v1743 = vmul.f32 %v1687, %v1739
    %v1744 = vmul.f32 %v1702, %v1740
    %v1745 = vadd.f32 %v1737, %v1743
    %v1746 = vadd.f32 %v1738, %v1744
    %v1749 = vrot.slane %v1627, 2
    %v1750 = vrot.slane %v1628, 1
    %v1751 = vsel %vm456, %v1750, %v1749
    %1752 = vrot.lane.b32.xlu0 %v1751, 112
    %v1753 = vpop.permute.xlu0 %1752
    %v1754 = vsel %vm233, %v1753, 0
    %1756 = vmatpush.msra.mxu0 0.0
    %1757 = vmatpush.msra.mxu0 0.0
    %1758 = vmatpush.msra.mxu0 0.0
    %1759 = vmatpush.msra.mxu0 0.0
    %1760 = vmatpush.msra.mxu0 0.0
    %1761 = vmatpush.msra.mxu0 0.0
    %1762 = vmatpush.msra.mxu0 0.0
    %1763 = vmatpush.msra.mxu0 0.0
    %1764 = vmatpush.msra.mxu0 0.0
    %1765 = vmatpush.msra.mxu0 0.0
    %1766 = vmatpush.msra.mxu0 0.0
    %1767 = vmatpush.msra.mxu0 0.0
    %1768 = vmatpush.msra.mxu0 0.0
    %1769 = vmatpush.msra.mxu0 0.0
    %1770 = vmatpush.msra.mxu0 %v228
    %1771 = vmatpush.msra.mxu0 %v227
    %1772 = vmatmul.f32.gmra.mxu0 %v1754
    %v1773 = vpop.f32.mrf.mxu0
    %v1774 = vadd.f32 0.0, %v1773
    %1775 = vdwg.mxu0
    %v1777 = vrot.slane %v1774, 7
    %v1780 = vadd.f32 %v221, %v1777
    %v1781 = vadd.f32 %v223, %v1774
    %v1782 = vxor.u32 %v1780, 2147483648
    %v1783 = vxor.u32 %v1781, 2147483648
    %v1784 = vmul.f32 %v1782, 1.442695
    %v1785 = vpow.pop %v1784
    %v1786 = vmul.f32 %v1783, 1.442695
    %v1787 = vpow.pop %v1786
    %v1788 = vadd.f32 %v1785, 1.0
    %v1789 = vadd.f32 %v1787, 1.0
    %v1790 = vrcp.pop %v1788
    %v1791 = vmul.f32 %v1788, %v1790
    %v1792 = vsub.f32 1.0, %v1791
    %v1793 = vmul.f32 %v1790, %v1792
    %v1794 = vadd.f32 %v1790, %v1793
    %vm1795 = vweird.f32 %v1788
    %vm1796 = vweird.f32 %v1790
    %vm1797 = vmor %vm1795, %vm1796
    %v1798 = vsel %vm1797, %v1790, %v1794
    %v1799 = vand.u32 2147483647, %v1788
    %vm1800 = vcmp.eq.f32.partialorder %v1799, 8.507059e+37
    %v1801 = vand.u32 %v1788, 2147483648
    %v1802 = vor.u32 1.1754944e-38, %v1801
    %v1803 = vsel %vm1800, %v1802, %v1798
    %v1804 = vmul.f32 1.0, %v1803
    %v1805 = vrcp.pop %v1789
    %v1806 = vmul.f32 %v1789, %v1805
    %v1807 = vsub.f32 1.0, %v1806
    %v1808 = vmul.f32 %v1805, %v1807
    %v1809 = vadd.f32 %v1805, %v1808
    %vm1810 = vweird.f32 %v1789
    %vm1811 = vweird.f32 %v1805
    %vm1812 = vmor %vm1810, %vm1811
    %v1813 = vsel %vm1812, %v1805, %v1809
    %v1814 = vand.u32 2147483647, %v1789
    %vm1815 = vcmp.eq.f32.partialorder %v1814, 8.507059e+37
    %v1816 = vand.u32 %v1789, 2147483648
    %v1817 = vor.u32 1.1754944e-38, %v1816
    %v1818 = vsel %vm1815, %v1817, %v1813
    %v1819 = vmul.f32 1.0, %v1818
    %v1820 = vadd.f32 %v1774, %v411
    %v1822 = vrot.slane %v1820, 7
    %1823 = vrot.lane.b32.xlu0 %v1822, 96
    %v1824 = vpop.permute.xlu0 %1823
    %1825 = vrot.lane.b32.xlu0 %v1820, 96
    %v1826 = vpop.permute.xlu0 %1825
    %v1829 = vmul.f32 %v1804, %v1824
    %v1830 = vmul.f32 %v1819, %v1826
    %1833 = vrot.lane.b32.xlu0 %v1829, 32
    %v1834 = vpop.permute.xlu0 %1833
    %1835 = vrot.lane.b32.xlu0 %v1830, 32
    %v1836 = vpop.permute.xlu0 %1835
    %v1839 = vadd.f32 %v221, %v1834
    %v1840 = vadd.f32 %v223, %v1836
    %v1841 = vtanh.pop %v1839
    %v1842 = vtanh.pop %v1840
    %v1843 = vsub.f32 1.0, %v1804
    %v1844 = vsub.f32 1.0, %v1819
    %1847 = vrot.lane.b32.xlu0 %v1841, 112
    %v1848 = vpop.permute.xlu0 %1847
    %1849 = vrot.lane.b32.xlu0 %v1842, 112
    %v1850 = vpop.permute.xlu0 %1849
    %v1853 = vmul.f32 %v1843, %v1848
    %v1854 = vmul.f32 %v1844, %v1850
    %v1855 = vrot.slane %v1627, 1
    %v1858 = vmul.f32 %v1804, %v1855
    %v1859 = vmul.f32 %v1819, %v1750
    %v1860 = vadd.f32 %v1853, %v1858
    %v1861 = vadd.f32 %v1854, %v1859
    %v1864 = vrot.slane %v1745, 6
    %v1865 = vrot.slane %v1746, 5
    %v1866 = vsel %vm456, %v1865, %v1864
    %1867 = vrot.lane.b32.xlu0 %v1866, 112
    %v1868 = vpop.permute.xlu0 %1867
    %v1869 = vsel %vm233, %v1868, 0
    %1871 = vmatpush.msra.mxu0 0.0
    %1872 = vmatpush.msra.mxu0 0.0
    %1873 = vmatpush.msra.mxu0 0.0
    %1874 = vmatpush.msra.mxu0 0.0
    %1875 = vmatpush.msra.mxu0 0.0
    %1876 = vmatpush.msra.mxu0 0.0
    %1877 = vmatpush.msra.mxu0 0.0
    %1878 = vmatpush.msra.mxu0 0.0
    %1879 = vmatpush.msra.mxu0 0.0
    %1880 = vmatpush.msra.mxu0 0.0
    %1881 = vmatpush.msra.mxu0 0.0
    %1882 = vmatpush.msra.mxu0 0.0
    %1883 = vmatpush.msra.mxu0 0.0
    %1884 = vmatpush.msra.mxu0 0.0
    %1885 = vmatpush.msra.mxu0 %v226
    %1886 = vmatpush.msra.mxu0 %v225
    %1887 = vmatmul.f32.gmra.mxu0 %v1869
    %v1888 = vpop.f32.mrf.mxu0
    %v1889 = vadd.f32 0.0, %v1888
    %1890 = vdwg.mxu0
    %v1892 = vrot.slane %v1889, 1
    %v1893 = vrot.slane %v1889, 2
    %v1896 = vadd.f32 %v189, %v1892
    %v1897 = vadd.f32 %v191, %v1893
    %v1898 = vxor.u32 %v1896, 2147483648
    %v1899 = vxor.u32 %v1897, 2147483648
    %v1900 = vmul.f32 %v1898, 1.442695
    %v1901 = vpow.pop %v1900
    %v1902 = vmul.f32 %v1899, 1.442695
    %v1903 = vpow.pop %v1902
    %v1904 = vadd.f32 %v1901, 1.0
    %v1905 = vadd.f32 %v1903, 1.0
    %v1906 = vrcp.pop %v1904
    %v1907 = vmul.f32 %v1904, %v1906
    %v1908 = vsub.f32 1.0, %v1907
    %v1909 = vmul.f32 %v1906, %v1908
    %v1910 = vadd.f32 %v1906, %v1909
    %vm1911 = vweird.f32 %v1904
    %vm1912 = vweird.f32 %v1906
    %vm1913 = vmor %vm1911, %vm1912
    %v1914 = vsel %vm1913, %v1906, %v1910
    %v1915 = vand.u32 2147483647, %v1904
    %vm1916 = vcmp.eq.f32.partialorder %v1915, 8.507059e+37
    %v1917 = vand.u32 %v1904, 2147483648
    %v1918 = vor.u32 1.1754944e-38, %v1917
    %v1919 = vsel %vm1916, %v1918, %v1914
    %v1920 = vmul.f32 1.0, %v1919
    %v1921 = vrcp.pop %v1905
    %v1922 = vmul.f32 %v1905, %v1921
    %v1923 = vsub.f32 1.0, %v1922
    %v1924 = vmul.f32 %v1921, %v1923
    %v1925 = vadd.f32 %v1921, %v1924
    %vm1926 = vweird.f32 %v1905
    %vm1927 = vweird.f32 %v1921
    %vm1928 = vmor %vm1926, %vm1927
    %v1929 = vsel %vm1928, %v1921, %v1925
    %v1930 = vand.u32 2147483647, %v1905
    %vm1931 = vcmp.eq.f32.partialorder %v1930, 8.507059e+37
    %v1932 = vand.u32 %v1905, 2147483648
    %v1933 = vor.u32 1.1754944e-38, %v1932
    %v1934 = vsel %vm1931, %v1933, %v1929
    %v1935 = vmul.f32 1.0, %v1934
    %v1936 = vadd.f32 %v1889, %v303
    %v1938 = vrot.slane %v1936, 1
    %v1939 = vrot.slane %v1936, 2
    %1940 = vrot.lane.b32.xlu0 %v1938, 96
    %v1941 = vpop.permute.xlu0 %1940
    %1942 = vrot.lane.b32.xlu0 %v1939, 96
    %v1943 = vpop.permute.xlu0 %1942
    %v1946 = vmul.f32 %v1920, %v1941
    %v1947 = vmul.f32 %v1935, %v1943
    %1950 = vrot.lane.b32.xlu0 %v1946, 32
    %v1951 = vpop.permute.xlu0 %1950
    %1952 = vrot.lane.b32.xlu0 %v1947, 32
    %v1953 = vpop.permute.xlu0 %1952
    %v1956 = vadd.f32 %v189, %v1951
    %v1957 = vadd.f32 %v191, %v1953
    %v1958 = vtanh.pop %v1956
    %v1959 = vtanh.pop %v1957
    %v1960 = vsub.f32 1.0, %v1920
    %v1961 = vsub.f32 1.0, %v1935
    %1964 = vrot.lane.b32.xlu0 %v1958, 112
    %v1965 = vpop.permute.xlu0 %1964
    %1966 = vrot.lane.b32.xlu0 %v1959, 112
    %v1967 = vpop.permute.xlu0 %1966
    %v1970 = vmul.f32 %v1960, %v1965
    %v1971 = vmul.f32 %v1961, %v1967
    %v1972 = vrot.slane %v1745, 7
    %v1973 = vrot.slane %v1746, 7
    %v1976 = vmul.f32 %v1920, %v1972
    %v1977 = vmul.f32 %v1935, %v1973
    %v1978 = vadd.f32 %v1970, %v1976
    %v1979 = vadd.f32 %v1971, %v1977
    %v1982 = vrot.slane %v1860, 1
    %v1983 = vsel %vm456, %v1861, %v1982
    %1984 = vrot.lane.b32.xlu0 %v1983, 112
    %v1985 = vpop.permute.xlu0 %1984
    %v1986 = vsel %vm233, %v1985, 0
    %1988 = vmatpush.msra.mxu0 0.0
    %1989 = vmatpush.msra.mxu0 0.0
    %1990 = vmatpush.msra.mxu0 0.0
    %1991 = vmatpush.msra.mxu0 0.0
    %1992 = vmatpush.msra.mxu0 0.0
    %1993 = vmatpush.msra.mxu0 0.0
    %1994 = vmatpush.msra.mxu0 0.0
    %1995 = vmatpush.msra.mxu0 0.0
    %1996 = vmatpush.msra.mxu0 0.0
    %1997 = vmatpush.msra.mxu0 0.0
    %1998 = vmatpush.msra.mxu0 0.0
    %1999 = vmatpush.msra.mxu0 0.0
    %2000 = vmatpush.msra.mxu0 0.0
    %2001 = vmatpush.msra.mxu0 0.0
    %2002 = vmatpush.msra.mxu0 %v228
    %2003 = vmatpush.msra.mxu0 %v227
    %2004 = vmatmul.f32.gmra.mxu0 %v1986
    %v2005 = vpop.f32.mrf.mxu0
    %v2006 = vadd.f32 0.0, %v2005
    %2007 = vdwg.mxu0
    %v2009 = vrot.slane %v2006, 1
    %v2012 = vadd.f32 %v221, %v2006
    %v2013 = vadd.f32 %v223, %v2009
    %v2014 = vxor.u32 %v2012, 2147483648
    %v2015 = vxor.u32 %v2013, 2147483648
    %v2016 = vmul.f32 %v2014, 1.442695
    %v2017 = vpow.pop %v2016
    %v2018 = vmul.f32 %v2015, 1.442695
    %v2019 = vpow.pop %v2018
    %v2020 = vadd.f32 %v2017, 1.0
    %v2021 = vadd.f32 %v2019, 1.0
    %v2022 = vrcp.pop %v2020
    %v2023 = vmul.f32 %v2020, %v2022
    %v2024 = vsub.f32 1.0, %v2023
    %v2025 = vmul.f32 %v2022, %v2024
    %v2026 = vadd.f32 %v2022, %v2025
    %vm2027 = vweird.f32 %v2020
    %vm2028 = vweird.f32 %v2022
    %vm2029 = vmor %vm2027, %vm2028
    %v2030 = vsel %vm2029, %v2022, %v2026
    %v2031 = vand.u32 2147483647, %v2020
    %vm2032 = vcmp.eq.f32.partialorder %v2031, 8.507059e+37
    %v2033 = vand.u32 %v2020, 2147483648
    %v2034 = vor.u32 1.1754944e-38, %v2033
    %v2035 = vsel %vm2032, %v2034, %v2030
    %v2036 = vmul.f32 1.0, %v2035
    %v2037 = vrcp.pop %v2021
    %v2038 = vmul.f32 %v2021, %v2037
    %v2039 = vsub.f32 1.0, %v2038
    %v2040 = vmul.f32 %v2037, %v2039
    %v2041 = vadd.f32 %v2037, %v2040
    %vm2042 = vweird.f32 %v2021
    %vm2043 = vweird.f32 %v2037
    %vm2044 = vmor %vm2042, %vm2043
    %v2045 = vsel %vm2044, %v2037, %v2041
    %v2046 = vand.u32 2147483647, %v2021
    %vm2047 = vcmp.eq.f32.partialorder %v2046, 8.507059e+37
    %v2048 = vand.u32 %v2021, 2147483648
    %v2049 = vor.u32 1.1754944e-38, %v2048
    %v2050 = vsel %vm2047, %v2049, %v2045
    %v2051 = vmul.f32 1.0, %v2050
    %v2052 = vadd.f32 %v2006, %v411
    %v2054 = vrot.slane %v2052, 1
    %2055 = vrot.lane.b32.xlu0 %v2052, 96
    %v2056 = vpop.permute.xlu0 %2055
    %2057 = vrot.lane.b32.xlu0 %v2054, 96
    %v2058 = vpop.permute.xlu0 %2057
    %v2061 = vmul.f32 %v2036, %v2056
    %v2062 = vmul.f32 %v2051, %v2058
    %2065 = vrot.lane.b32.xlu0 %v2061, 32
    %v2066 = vpop.permute.xlu0 %2065
    %2067 = vrot.lane.b32.xlu0 %v2062, 32
    %v2068 = vpop.permute.xlu0 %2067
    %v2071 = vadd.f32 %v221, %v2066
    %v2072 = vadd.f32 %v223, %v2068
    %v2073 = vtanh.pop %v2071
    %v2074 = vtanh.pop %v2072
    %v2075 = vsub.f32 1.0, %v2036
    %v2076 = vsub.f32 1.0, %v2051
    %2079 = vrot.lane.b32.xlu0 %v2073, 112
    %v2080 = vpop.permute.xlu0 %2079
    %2081 = vrot.lane.b32.xlu0 %v2074, 112
    %v2082 = vpop.permute.xlu0 %2081
    %v2085 = vmul.f32 %v2075, %v2080
    %v2086 = vmul.f32 %v2076, %v2082
    %v2087 = vrot.slane %v1861, 1
    %v2090 = vmul.f32 %v2036, %v1982
    %v2091 = vmul.f32 %v2051, %v2087
    %v2092 = vadd.f32 %v2085, %v2090
    %v2093 = vadd.f32 %v2086, %v2091
    %v2095 = vrot.slane %v567, 6
    %vm2096 = vcmask 1043459
    %v2097 = vsel %vm2096, %v2095, %v795
    %v2099 = vrot.slane %v801, 6
    %v2100 = vrot.slane %v802, 5
    %vm2101 = vcmask 1045509
    %v2102 = vsel %vm2101, %v2100, %v2099
    %v2104 = vrot.slane %v1037, 5
    %v2105 = vrot.slane %v1038, 4
    %vm2106 = vcmask 1047559
    %v2107 = vsel %vm2106, %v2105, %v2104
    %v2110 = vrot.slane %v1509, 3
    %v2111 = vrot.slane %v1510, 2
    %v2112 = vsel %vm2096, %v2111, %v2110
    %v2114 = vrot.slane %v1745, 2
    %v2115 = vrot.slane %v1746, 1
    %v2116 = vsel %vm2101, %v2115, %v2114
    %v2120 = vrot.slane %v1978, 1
    %v2121 = vsel %vm2106, %v1979, %v2120
    %vm2123 = vcmask 1041408
    %v2124 = vsel %vm2123, %v457, %v2097
    %vm2125 = vcmask 1043456
    %v2126 = vsel %vm2125, %v2124, %v2102
    %vm2127 = vcmask 1045504
    %v2128 = vsel %vm2127, %v2126, %v2107
    %v2129 = vsel %vm2123, %v1397, %v2112
    %v2130 = vsel %vm2125, %v2129, %v2116
    %v2131 = vsel %vm2127, %v2130, %v2121
    %v2134 = vrot.slane %v2093, 7
    %v2135 = vsel %vm456, %v2134, %v2092
    %v2137 = vrot.slane %v1860, 7
    %v2138 = vrot.slane %v1861, 6
    %v2139 = vsel %vm2096, %v2138, %v2137
    %v2141 = vrot.slane %v1627, 6
    %v2142 = vrot.slane %v1628, 5
    %v2143 = vsel %vm2101, %v2142, %v2141
    %v2145 = vrot.slane %v1391, 5
    %v2146 = vrot.slane %v1392, 4
    %v2147 = vsel %vm2106, %v2146, %v2145
    %v2150 = vrot.slane %v919, 3
    %v2151 = vrot.slane %v920, 2
    %v2152 = vsel %vm2096, %v2151, %v2150
    %v2154 = vrot.slane %v684, 2
    %v2155 = vsel %vm2101, %v914, %v2154
    %v2157 = vsel %vm2106, %v452, %v678
    %v2159 = vsel %vm2123, %v2135, %v2139
    %v2160 = vsel %vm2125, %v2159, %v2143
    %v2161 = vsel %vm2127, %v2160, %v2147
    %v2162 = vsel %vm2123, %v1279, %v2152
    %v2163 = vsel %vm2125, %v2162, %v2155
    %v2164 = vsel %vm2127, %v2163, %v2157
    %v2165 = vld [vmem:[#allocation4 + $0x40] sm:$0xf]
    %v2166 = vld [vmem:[#allocation4 + $0x44] sm:$0xf]
    %v2167 = vpack.c.bf16 %v2131, %v2128
    %v2168 = vld [vmem:[#allocation4 + $0x48] sm:$0xf]
    %v2169 = vld [vmem:[#allocation4 + $0x4c] sm:$0xf]
    %v2170 = vpack.c.bf16 %v2164, %v2161
    %2172 = vrot.lane.b32.xlu0 %v2170, 112
    %v2173 = vpop.permute.xlu0 %2172
    %v2176 = vunpack.c.l.b16 %v2168
    %v2177 = vunpack.c.l.b16 %v2169
    %v2178 = vpack.c.b16 %v2177, %v2176
    %v2181 = vsel %vm233, %v2173, 0
    %2183 = vmatpush.bf16.msra.mxu0 0
    %2184 = vmatpush.bf16.msra.mxu0 0
    %2185 = vmatpush.bf16.msra.mxu0 0
    %2186 = vmatpush.bf16.msra.mxu0 0
    %2187 = vmatpush.bf16.msra.mxu0 0
    %2188 = vmatpush.bf16.msra.mxu0 0
    %2189 = vmatpush.bf16.msra.mxu0 0
    %2190 = vmatpush.bf16.msra.mxu0 %v2178
    %2191 = vmatmul.bf16.gmra.mxu0 %v2181
    %v2192 = vpop.f32.mrf.mxu0
    %v2193 = vadd.f32 0.0, %v2192
    %v2194 = vpop.f32.mrf.mxu0
    %v2195 = vadd.f32 0.0, %v2194
    %2196 = vdwg.mxu0
    %2198 = vrot.lane.b32.xlu0 %v2167, 112
    %v2199 = vpop.permute.xlu0 %2198
    %v2202 = vunpack.c.l.b16 %v2165
    %v2203 = vunpack.c.l.b16 %v2166
    %v2204 = vpack.c.b16 %v2203, %v2202
    %v2207 = vsel %vm233, %v2199, 0
    %2209 = vmatpush.bf16.msra.mxu0 0
    %2210 = vmatpush.bf16.msra.mxu0 0
    %2211 = vmatpush.bf16.msra.mxu0 0
    %2212 = vmatpush.bf16.msra.mxu0 0
    %2213 = vmatpush.bf16.msra.mxu0 0
    %2214 = vmatpush.bf16.msra.mxu0 0
    %2215 = vmatpush.bf16.msra.mxu0 0
    %2216 = vmatpush.bf16.msra.mxu0 %v2204
    %2217 = vmatmul.bf16.gmra.mxu0 %v2207
    %v2218 = vpop.f32.mrf.mxu0
    %v2219 = vadd.f32 %v2193, %v2218
    %v2220 = vpop.f32.mrf.mxu0
    %v2221 = vadd.f32 %v2195, %v2220
    %2222 = vdwg.mxu0
    %v2223 = vld [vmem:[#allocation6 + $0x44] sm:$0x1]
    %v2224 = vperm.slane %v2223, 0
    %v2225 = vadd.f32 %v2219, %v2224
    %v2226 = vadd.f32 %v2221, %v2224
    %v2227 = vld [vmem:[#allocation6 + $0x20] sm:$0xff]
    %v2228 = vld [vmem:[#allocation6 + $0x28] sm:$0xff]
    %v2229 = vld [vmem:[#allocation6 + $0x48] sm:$0x1]
    %v2230 = vperm.slane %v2229, 0
    %2231 = vmatpush.msra.mxu0 0.0
    %2232 = vmatpush.msra.mxu0 0.0
    %2233 = vmatpush.msra.mxu0 0.0
    %2234 = vmatpush.msra.mxu0 0.0
    %2235 = vmatpush.msra.mxu0 0.0
    %2236 = vmatpush.msra.mxu0 0.0
    %2237 = vmatpush.msra.mxu0 0.0
    %2238 = vmatpush.msra.mxu0 0.0
    %2239 = vmatpush.msra.mxu0 0.0
    %2240 = vmatpush.msra.mxu0 0.0
    %2241 = vmatpush.msra.mxu0 0.0
    %2242 = vmatpush.msra.mxu0 0.0
    %2243 = vmatpush.msra.mxu0 0.0
    %2244 = vmatpush.msra.mxu0 0.0
    %2245 = vmatpush.msra.mxu0 %v2228
    %2246 = vmatpush.msra.mxu0 %v2227
    %2247 = vmatmul.f32.gmra.mxu0 %v235
    %v2248 = vpop.f32.mrf.mxu0
    %v2249 = vadd.f32 0.0, %v2248
    %2250 = vdwg.mxu0
    %v2251 = vadd.f32 %v2225, %v2249
    %v2252 = vxor.u32 %v2251, 2147483648
    %v2253 = vmul.f32 %v2252, 1.442695
    %v2254 = vpow.pop %v2253
    %v2255 = vadd.f32 %v2254, 1.0
    %v2256 = vrcp.pop %v2255
    %v2257 = vmul.f32 %v2255, %v2256
    %v2258 = vsub.f32 1.0, %v2257
    %v2259 = vmul.f32 %v2256, %v2258
    %v2260 = vadd.f32 %v2256, %v2259
    %vm2261 = vweird.f32 %v2255
    %vm2262 = vweird.f32 %v2256
    %vm2263 = vmor %vm2261, %vm2262
    %v2264 = vsel %vm2263, %v2256, %v2260
    %v2265 = vand.u32 2147483647, %v2255
    %vm2266 = vcmp.eq.f32.partialorder %v2265, 8.507059e+37
    %v2267 = vand.u32 %v2255, 2147483648
    %v2268 = vor.u32 1.1754944e-38, %v2267
    %v2269 = vsel %vm2266, %v2268, %v2264
    %v2270 = vmul.f32 1.0, %v2269
    %2272 = vrot.lane.b32.xlu0 %v2230, 32
    %v2273 = vpop.permute.xlu0 %2272
    %v2275 = vadd.f32 %v2249, %v2273
    %2277 = vrot.lane.b32.xlu0 %v2275, 96
    %v2278 = vpop.permute.xlu0 %2277
    %v2280 = vmul.f32 %v2270, %v2278
    %2282 = vrot.lane.b32.xlu0 %v2280, 32
    %v2283 = vpop.permute.xlu0 %2282
    %v2285 = vadd.f32 %v2225, %v2283
    %v2286 = vtanh.pop %v2285
    %v2287 = vsub.f32 1.0, %v2270
    %2289 = vrot.lane.b32.xlu0 %v2286, 112
    %v2290 = vpop.permute.xlu0 %2289
    %v2292 = vmul.f32 %v2287, %v2290
    %v2293 = vmul.f32 %v2270, 0.0
    %v2294 = vadd.f32 %v2292, %v2293
    %2296 = vrot.lane.b32.xlu0 %v2294, 112
    %v2297 = vpop.permute.xlu0 %2296
    %v2298 = vsel %vm233, %v2297, 0
    %2300 = vmatpush.msra.mxu0 0.0
    %2301 = vmatpush.msra.mxu0 0.0
    %2302 = vmatpush.msra.mxu0 0.0
    %2303 = vmatpush.msra.mxu0 0.0
    %2304 = vmatpush.msra.mxu0 0.0
    %2305 = vmatpush.msra.mxu0 0.0
    %2306 = vmatpush.msra.mxu0 0.0
    %2307 = vmatpush.msra.mxu0 0.0
    %2308 = vmatpush.msra.mxu0 0.0
    %2309 = vmatpush.msra.mxu0 0.0
    %2310 = vmatpush.msra.mxu0 0.0
    %2311 = vmatpush.msra.mxu0 0.0
    %2312 = vmatpush.msra.mxu0 0.0
    %2313 = vmatpush.msra.mxu0 0.0
    %2314 = vmatpush.msra.mxu0 %v2228
    %2315 = vmatpush.msra.mxu0 %v2227
    %2316 = vmatmul.f32.gmra.mxu0 %v2298
    %v2317 = vpop.f32.mrf.mxu0
    %v2318 = vadd.f32 0.0, %v2317
    %2319 = vdwg.mxu0
    %v2321 = vrot.slane %v2318, 6
    %v2323 = vadd.f32 %v2225, %v2321
    %v2324 = vxor.u32 %v2323, 2147483648
    %v2325 = vmul.f32 %v2324, 1.442695
    %v2326 = vpow.pop %v2325
    %v2327 = vadd.f32 %v2326, 1.0
    %v2328 = vrcp.pop %v2327
    %v2329 = vmul.f32 %v2327, %v2328
    %v2330 = vsub.f32 1.0, %v2329
    %v2331 = vmul.f32 %v2328, %v2330
    %v2332 = vadd.f32 %v2328, %v2331
    %vm2333 = vweird.f32 %v2327
    %vm2334 = vweird.f32 %v2328
    %vm2335 = vmor %vm2333, %vm2334
    %v2336 = vsel %vm2335, %v2328, %v2332
    %v2337 = vand.u32 2147483647, %v2327
    %vm2338 = vcmp.eq.f32.partialorder %v2337, 8.507059e+37
    %v2339 = vand.u32 %v2327, 2147483648
    %v2340 = vor.u32 1.1754944e-38, %v2339
    %v2341 = vsel %vm2338, %v2340, %v2336
    %v2342 = vmul.f32 1.0, %v2341
    %v2343 = vadd.f32 %v2318, %v2273
    %v2345 = vrot.slane %v2343, 6
    %2346 = vrot.lane.b32.xlu0 %v2345, 96
    %v2347 = vpop.permute.xlu0 %2346
    %v2349 = vmul.f32 %v2342, %v2347
    %2351 = vrot.lane.b32.xlu0 %v2349, 32
    %v2352 = vpop.permute.xlu0 %2351
    %v2354 = vadd.f32 %v2225, %v2352
    %v2355 = vtanh.pop %v2354
    %v2356 = vsub.f32 1.0, %v2342
    %2358 = vrot.lane.b32.xlu0 %v2355, 112
    %v2359 = vpop.permute.xlu0 %2358
    %v2361 = vmul.f32 %v2356, %v2359
    %v2362 = vrot.slane %v2294, 6
    %v2364 = vmul.f32 %v2342, %v2362
    %v2365 = vadd.f32 %v2361, %v2364
    %v2367 = vrot.slane %v2365, 2
    %2368 = vrot.lane.b32.xlu0 %v2367, 112
    %v2369 = vpop.permute.xlu0 %2368
    %v2370 = vsel %vm233, %v2369, 0
    %2372 = vmatpush.msra.mxu0 0.0
    %2373 = vmatpush.msra.mxu0 0.0
    %2374 = vmatpush.msra.mxu0 0.0
    %2375 = vmatpush.msra.mxu0 0.0
    %2376 = vmatpush.msra.mxu0 0.0
    %2377 = vmatpush.msra.mxu0 0.0
    %2378 = vmatpush.msra.mxu0 0.0
    %2379 = vmatpush.msra.mxu0 0.0
    %2380 = vmatpush.msra.mxu0 0.0
    %2381 = vmatpush.msra.mxu0 0.0
    %2382 = vmatpush.msra.mxu0 0.0
    %2383 = vmatpush.msra.mxu0 0.0
    %2384 = vmatpush.msra.mxu0 0.0
    %2385 = vmatpush.msra.mxu0 0.0
    %2386 = vmatpush.msra.mxu0 %v2228
    %2387 = vmatpush.msra.mxu0 %v2227
    %2388 = vmatmul.f32.gmra.mxu0 %v2370
    %v2389 = vpop.f32.mrf.mxu0
    %v2390 = vadd.f32 0.0, %v2389
    %2391 = vdwg.mxu0
    %v2393 = vrot.slane %v2390, 4
    %v2395 = vadd.f32 %v2225, %v2393
    %v2396 = vxor.u32 %v2395, 2147483648
    %v2397 = vmul.f32 %v2396, 1.442695
    %v2398 = vpow.pop %v2397
    %v2399 = vadd.f32 %v2398, 1.0
    %v2400 = vrcp.pop %v2399
    %v2401 = vmul.f32 %v2399, %v2400
    %v2402 = vsub.f32 1.0, %v2401
    %v2403 = vmul.f32 %v2400, %v2402
    %v2404 = vadd.f32 %v2400, %v2403
    %vm2405 = vweird.f32 %v2399
    %vm2406 = vweird.f32 %v2400
    %vm2407 = vmor %vm2405, %vm2406
    %v2408 = vsel %vm2407, %v2400, %v2404
    %v2409 = vand.u32 2147483647, %v2399
    %vm2410 = vcmp.eq.f32.partialorder %v2409, 8.507059e+37
    %v2411 = vand.u32 %v2399, 2147483648
    %v2412 = vor.u32 1.1754944e-38, %v2411
    %v2413 = vsel %vm2410, %v2412, %v2408
    %v2414 = vmul.f32 1.0, %v2413
    %v2415 = vadd.f32 %v2390, %v2273
    %v2417 = vrot.slane %v2415, 4
    %2418 = vrot.lane.b32.xlu0 %v2417, 96
    %v2419 = vpop.permute.xlu0 %2418
    %v2421 = vmul.f32 %v2414, %v2419
    %2423 = vrot.lane.b32.xlu0 %v2421, 32
    %v2424 = vpop.permute.xlu0 %2423
    %v2426 = vadd.f32 %v2225, %v2424
    %v2427 = vtanh.pop %v2426
    %v2428 = vsub.f32 1.0, %v2414
    %2430 = vrot.lane.b32.xlu0 %v2427, 112
    %v2431 = vpop.permute.xlu0 %2430
    %v2433 = vmul.f32 %v2428, %v2431
    %v2434 = vrot.slane %v2365, 6
    %v2436 = vmul.f32 %v2414, %v2434
    %v2437 = vadd.f32 %v2433, %v2436
    %v2439 = vrot.slane %v2437, 4
    %2440 = vrot.lane.b32.xlu0 %v2439, 112
    %v2441 = vpop.permute.xlu0 %2440
    %v2442 = vsel %vm233, %v2441, 0
    %2444 = vmatpush.msra.mxu0 0.0
    %2445 = vmatpush.msra.mxu0 0.0
    %2446 = vmatpush.msra.mxu0 0.0
    %2447 = vmatpush.msra.mxu0 0.0
    %2448 = vmatpush.msra.mxu0 0.0
    %2449 = vmatpush.msra.mxu0 0.0
    %2450 = vmatpush.msra.mxu0 0.0
    %2451 = vmatpush.msra.mxu0 0.0
    %2452 = vmatpush.msra.mxu0 0.0
    %2453 = vmatpush.msra.mxu0 0.0
    %2454 = vmatpush.msra.mxu0 0.0
    %2455 = vmatpush.msra.mxu0 0.0
    %2456 = vmatpush.msra.mxu0 0.0
    %2457 = vmatpush.msra.mxu0 0.0
    %2458 = vmatpush.msra.mxu0 %v2228
    %2459 = vmatpush.msra.mxu0 %v2227
    %2460 = vmatmul.f32.gmra.mxu0 %v2442
    %v2461 = vpop.f32.mrf.mxu0
    %v2462 = vadd.f32 0.0, %v2461
    %2463 = vdwg.mxu0
    %v2465 = vrot.slane %v2462, 2
    %v2467 = vadd.f32 %v2225, %v2465
    %v2468 = vxor.u32 %v2467, 2147483648
    %v2469 = vmul.f32 %v2468, 1.442695
    %v2470 = vpow.pop %v2469
    %v2471 = vadd.f32 %v2470, 1.0
    %v2472 = vrcp.pop %v2471
    %v2473 = vmul.f32 %v2471, %v2472
    %v2474 = vsub.f32 1.0, %v2473
    %v2475 = vmul.f32 %v2472, %v2474
    %v2476 = vadd.f32 %v2472, %v2475
    %vm2477 = vweird.f32 %v2471
    %vm2478 = vweird.f32 %v2472
    %vm2479 = vmor %vm2477, %vm2478
    %v2480 = vsel %vm2479, %v2472, %v2476
    %v2481 = vand.u32 2147483647, %v2471
    %vm2482 = vcmp.eq.f32.partialorder %v2481, 8.507059e+37
    %v2483 = vand.u32 %v2471, 2147483648
    %v2484 = vor.u32 1.1754944e-38, %v2483
    %v2485 = vsel %vm2482, %v2484, %v2480
    %v2486 = vmul.f32 1.0, %v2485
    %v2487 = vadd.f32 %v2462, %v2273
    %v2489 = vrot.slane %v2487, 2
    %2490 = vrot.lane.b32.xlu0 %v2489, 96
    %v2491 = vpop.permute.xlu0 %2490
    %v2493 = vmul.f32 %v2486, %v2491
    %2495 = vrot.lane.b32.xlu0 %v2493, 32
    %v2496 = vpop.permute.xlu0 %2495
    %v2498 = vadd.f32 %v2225, %v2496
    %v2499 = vtanh.pop %v2498
    %v2500 = vsub.f32 1.0, %v2486
    %2502 = vrot.lane.b32.xlu0 %v2499, 112
    %v2503 = vpop.permute.xlu0 %2502
    %v2505 = vmul.f32 %v2500, %v2503
    %v2506 = vrot.slane %v2437, 6
    %v2508 = vmul.f32 %v2486, %v2506
    %v2509 = vadd.f32 %v2505, %v2508
    %v2511 = vrot.slane %v2509, 6
    %2512 = vrot.lane.b32.xlu0 %v2511, 112
    %v2513 = vpop.permute.xlu0 %2512
    %v2514 = vsel %vm233, %v2513, 0
    %2516 = vmatpush.msra.mxu0 0.0
    %2517 = vmatpush.msra.mxu0 0.0
    %2518 = vmatpush.msra.mxu0 0.0
    %2519 = vmatpush.msra.mxu0 0.0
    %2520 = vmatpush.msra.mxu0 0.0
    %2521 = vmatpush.msra.mxu0 0.0
    %2522 = vmatpush.msra.mxu0 0.0
    %2523 = vmatpush.msra.mxu0 0.0
    %2524 = vmatpush.msra.mxu0 0.0
    %2525 = vmatpush.msra.mxu0 0.0
    %2526 = vmatpush.msra.mxu0 0.0
    %2527 = vmatpush.msra.mxu0 0.0
    %2528 = vmatpush.msra.mxu0 0.0
    %2529 = vmatpush.msra.mxu0 0.0
    %2530 = vmatpush.msra.mxu0 %v2228
    %2531 = vmatpush.msra.mxu0 %v2227
    %2532 = vmatmul.f32.gmra.mxu0 %v2514
    %v2533 = vpop.f32.mrf.mxu0
    %v2534 = vadd.f32 0.0, %v2533
    %2535 = vdwg.mxu0
    %v2536 = vadd.f32 %v2226, %v2534
    %v2537 = vxor.u32 %v2536, 2147483648
    %v2538 = vmul.f32 %v2537, 1.442695
    %v2539 = vpow.pop %v2538
    %v2540 = vadd.f32 %v2539, 1.0
    %v2541 = vrcp.pop %v2540
    %v2542 = vmul.f32 %v2540, %v2541
    %v2543 = vsub.f32 1.0, %v2542
    %v2544 = vmul.f32 %v2541, %v2543
    %v2545 = vadd.f32 %v2541, %v2544
    %vm2546 = vweird.f32 %v2540
    %vm2547 = vweird.f32 %v2541
    %vm2548 = vmor %vm2546, %vm2547
    %v2549 = vsel %vm2548, %v2541, %v2545
    %v2550 = vand.u32 2147483647, %v2540
    %vm2551 = vcmp.eq.f32.partialorder %v2550, 8.507059e+37
    %v2552 = vand.u32 %v2540, 2147483648
    %v2553 = vor.u32 1.1754944e-38, %v2552
    %v2554 = vsel %vm2551, %v2553, %v2549
    %v2555 = vmul.f32 1.0, %v2554
    %v2556 = vadd.f32 %v2534, %v2273
    %2558 = vrot.lane.b32.xlu0 %v2556, 96
    %v2559 = vpop.permute.xlu0 %2558
    %v2561 = vmul.f32 %v2555, %v2559
    %2563 = vrot.lane.b32.xlu0 %v2561, 32
    %v2564 = vpop.permute.xlu0 %2563
    %v2566 = vadd.f32 %v2226, %v2564
    %v2567 = vtanh.pop %v2566
    %v2568 = vsub.f32 1.0, %v2555
    %2570 = vrot.lane.b32.xlu0 %v2567, 112
    %v2571 = vpop.permute.xlu0 %2570
    %v2573 = vmul.f32 %v2568, %v2571
    %v2575 = vmul.f32 %v2555, %v2511
    %v2576 = vadd.f32 %v2573, %v2575
    %2578 = vrot.lane.b32.xlu0 %v2576, 112
    %v2579 = vpop.permute.xlu0 %2578
    %v2580 = vsel %vm233, %v2579, 0
    %2582 = vmatpush.msra.mxu0 0.0
    %2583 = vmatpush.msra.mxu0 0.0
    %2584 = vmatpush.msra.mxu0 0.0
    %2585 = vmatpush.msra.mxu0 0.0
    %2586 = vmatpush.msra.mxu0 0.0
    %2587 = vmatpush.msra.mxu0 0.0
    %2588 = vmatpush.msra.mxu0 0.0
    %2589 = vmatpush.msra.mxu0 0.0
    %2590 = vmatpush.msra.mxu0 0.0
    %2591 = vmatpush.msra.mxu0 0.0
    %2592 = vmatpush.msra.mxu0 0.0
    %2593 = vmatpush.msra.mxu0 0.0
    %2594 = vmatpush.msra.mxu0 0.0
    %2595 = vmatpush.msra.mxu0 0.0
    %2596 = vmatpush.msra.mxu0 %v2228
    %2597 = vmatpush.msra.mxu0 %v2227
    %2598 = vmatmul.f32.gmra.mxu0 %v2580
    %v2599 = vpop.f32.mrf.mxu0
    %v2600 = vadd.f32 0.0, %v2599
    %2601 = vdwg.mxu0
    %v2603 = vrot.slane %v2600, 6
    %v2605 = vadd.f32 %v2226, %v2603
    %v2606 = vxor.u32 %v2605, 2147483648
    %v2607 = vmul.f32 %v2606, 1.442695
    %v2608 = vpow.pop %v2607
    %v2609 = vadd.f32 %v2608, 1.0
    %v2610 = vrcp.pop %v2609
    %v2611 = vmul.f32 %v2609, %v2610
    %v2612 = vsub.f32 1.0, %v2611
    %v2613 = vmul.f32 %v2610, %v2612
    %v2614 = vadd.f32 %v2610, %v2613
    %vm2615 = vweird.f32 %v2609
    %vm2616 = vweird.f32 %v2610
    %vm2617 = vmor %vm2615, %vm2616
    %v2618 = vsel %vm2617, %v2610, %v2614
    %v2619 = vand.u32 2147483647, %v2609
    %vm2620 = vcmp.eq.f32.partialorder %v2619, 8.507059e+37
    %v2621 = vand.u32 %v2609, 2147483648
    %v2622 = vor.u32 1.1754944e-38, %v2621
    %v2623 = vsel %vm2620, %v2622, %v2618
    %v2624 = vmul.f32 1.0, %v2623
    %v2625 = vadd.f32 %v2600, %v2273
    %v2627 = vrot.slane %v2625, 6
    %2628 = vrot.lane.b32.xlu0 %v2627, 96
    %v2629 = vpop.permute.xlu0 %2628
    %v2631 = vmul.f32 %v2624, %v2629
    %2633 = vrot.lane.b32.xlu0 %v2631, 32
    %v2634 = vpop.permute.xlu0 %2633
    %v2636 = vadd.f32 %v2226, %v2634
    %v2637 = vtanh.pop %v2636
    %v2638 = vsub.f32 1.0, %v2624
    %2640 = vrot.lane.b32.xlu0 %v2637, 112
    %v2641 = vpop.permute.xlu0 %2640
    %v2643 = vmul.f32 %v2638, %v2641
    %v2644 = vrot.slane %v2576, 6
    %v2646 = vmul.f32 %v2624, %v2644
    %v2647 = vadd.f32 %v2643, %v2646
    %v2649 = vrot.slane %v2647, 2
    %2650 = vrot.lane.b32.xlu0 %v2649, 112
    %v2651 = vpop.permute.xlu0 %2650
    %v2652 = vsel %vm233, %v2651, 0
    %2654 = vmatpush.msra.mxu0 0.0
    %2655 = vmatpush.msra.mxu0 0.0
    %2656 = vmatpush.msra.mxu0 0.0
    %2657 = vmatpush.msra.mxu0 0.0
    %2658 = vmatpush.msra.mxu0 0.0
    %2659 = vmatpush.msra.mxu0 0.0
    %2660 = vmatpush.msra.mxu0 0.0
    %2661 = vmatpush.msra.mxu0 0.0
    %2662 = vmatpush.msra.mxu0 0.0
    %2663 = vmatpush.msra.mxu0 0.0
    %2664 = vmatpush.msra.mxu0 0.0
    %2665 = vmatpush.msra.mxu0 0.0
    %2666 = vmatpush.msra.mxu0 0.0
    %2667 = vmatpush.msra.mxu0 0.0
    %2668 = vmatpush.msra.mxu0 %v2228
    %2669 = vmatpush.msra.mxu0 %v2227
    %2670 = vmatmul.f32.gmra.mxu0 %v2652
    %v2671 = vpop.f32.mrf.mxu0
    %v2672 = vadd.f32 0.0, %v2671
    %2673 = vdwg.mxu0
    %v2675 = vrot.slane %v2672, 4
    %v2677 = vadd.f32 %v2226, %v2675
    %v2678 = vxor.u32 %v2677, 2147483648
    %v2679 = vmul.f32 %v2678, 1.442695
    %v2680 = vpow.pop %v2679
    %v2681 = vadd.f32 %v2680, 1.0
    %v2682 = vrcp.pop %v2681
    %v2683 = vmul.f32 %v2681, %v2682
    %v2684 = vsub.f32 1.0, %v2683
    %v2685 = vmul.f32 %v2682, %v2684
    %v2686 = vadd.f32 %v2682, %v2685
    %vm2687 = vweird.f32 %v2681
    %vm2688 = vweird.f32 %v2682
    %vm2689 = vmor %vm2687, %vm2688
    %v2690 = vsel %vm2689, %v2682, %v2686
    %v2691 = vand.u32 2147483647, %v2681
    %vm2692 = vcmp.eq.f32.partialorder %v2691, 8.507059e+37
    %v2693 = vand.u32 %v2681, 2147483648
    %v2694 = vor.u32 1.1754944e-38, %v2693
    %v2695 = vsel %vm2692, %v2694, %v2690
    %v2696 = vmul.f32 1.0, %v2695
    %v2697 = vadd.f32 %v2672, %v2273
    %v2699 = vrot.slane %v2697, 4
    %2700 = vrot.lane.b32.xlu0 %v2699, 96
    %v2701 = vpop.permute.xlu0 %2700
    %v2703 = vmul.f32 %v2696, %v2701
    %2705 = vrot.lane.b32.xlu0 %v2703, 32
    %v2706 = vpop.permute.xlu0 %2705
    %v2708 = vadd.f32 %v2226, %v2706
    %v2709 = vtanh.pop %v2708
    %v2710 = vsub.f32 1.0, %v2696
    %2712 = vrot.lane.b32.xlu0 %v2709, 112
    %v2713 = vpop.permute.xlu0 %2712
    %v2715 = vmul.f32 %v2710, %v2713
    %v2716 = vrot.slane %v2647, 6
    %v2718 = vmul.f32 %v2696, %v2716
    %v2719 = vadd.f32 %v2715, %v2718
    %v2721 = vrot.slane %v2719, 4
    %2722 = vrot.lane.b32.xlu0 %v2721, 112
    %v2723 = vpop.permute.xlu0 %2722
    %v2724 = vsel %vm233, %v2723, 0
    %2726 = vmatpush.msra.mxu0 0.0
    %2727 = vmatpush.msra.mxu0 0.0
    %2728 = vmatpush.msra.mxu0 0.0
    %2729 = vmatpush.msra.mxu0 0.0
    %2730 = vmatpush.msra.mxu0 0.0
    %2731 = vmatpush.msra.mxu0 0.0
    %2732 = vmatpush.msra.mxu0 0.0
    %2733 = vmatpush.msra.mxu0 0.0
    %2734 = vmatpush.msra.mxu0 0.0
    %2735 = vmatpush.msra.mxu0 0.0
    %2736 = vmatpush.msra.mxu0 0.0
    %2737 = vmatpush.msra.mxu0 0.0
    %2738 = vmatpush.msra.mxu0 0.0
    %2739 = vmatpush.msra.mxu0 0.0
    %2740 = vmatpush.msra.mxu0 %v2228
    %2741 = vmatpush.msra.mxu0 %v2227
    %2742 = vmatmul.f32.gmra.mxu0 %v2724
    %v2743 = vpop.f32.mrf.mxu0
    %v2744 = vadd.f32 0.0, %v2743
    %2745 = vdwg.mxu0
    %v2747 = vrot.slane %v2744, 2
    %v2749 = vadd.f32 %v2226, %v2747
    %v2750 = vxor.u32 %v2749, 2147483648
    %v2751 = vmul.f32 %v2750, 1.442695
    %v2752 = vpow.pop %v2751
    %v2753 = vadd.f32 %v2752, 1.0
    %v2754 = vrcp.pop %v2753
    %v2755 = vmul.f32 %v2753, %v2754
    %v2756 = vsub.f32 1.0, %v2755
    %v2757 = vmul.f32 %v2754, %v2756
    %v2758 = vadd.f32 %v2754, %v2757
    %vm2759 = vweird.f32 %v2753
    %vm2760 = vweird.f32 %v2754
    %vm2761 = vmor %vm2759, %vm2760
    %v2762 = vsel %vm2761, %v2754, %v2758
    %v2763 = vand.u32 2147483647, %v2753
    %vm2764 = vcmp.eq.f32.partialorder %v2763, 8.507059e+37
    %v2765 = vand.u32 %v2753, 2147483648
    %v2766 = vor.u32 1.1754944e-38, %v2765
    %v2767 = vsel %vm2764, %v2766, %v2762
    %v2768 = vmul.f32 1.0, %v2767
    %v2769 = vadd.f32 %v2744, %v2273
    %v2771 = vrot.slane %v2769, 2
    %2772 = vrot.lane.b32.xlu0 %v2771, 96
    %v2773 = vpop.permute.xlu0 %2772
    %v2775 = vmul.f32 %v2768, %v2773
    %2777 = vrot.lane.b32.xlu0 %v2775, 32
    %v2778 = vpop.permute.xlu0 %2777
    %v2780 = vadd.f32 %v2226, %v2778
    %v2781 = vtanh.pop %v2780
    %v2782 = vsub.f32 1.0, %v2768
    %2784 = vrot.lane.b32.xlu0 %v2781, 112
    %v2785 = vpop.permute.xlu0 %2784
    %v2787 = vmul.f32 %v2782, %v2785
    %v2788 = vrot.slane %v2719, 6
    %v2790 = vmul.f32 %v2768, %v2788
    %v2791 = vadd.f32 %v2787, %v2790
    %v2792 = vld [vmem:[#allocation4 + $0x50] sm:$0xf]
    %v2793 = vld [vmem:[#allocation4 + $0x54] sm:$0xf]
    %v2794 = vpack.c.bf16 %v1978, %v1978
    %v2795 = vpack.c.bf16 %v1979, %v1979
    %v2796 = vld [vmem:[#allocation4 + $0x58] sm:$0xf]
    %v2797 = vld [vmem:[#allocation4 + $0x5c] sm:$0xf]
    %v2798 = vpack.c.bf16 %v451, %v451
    %v2799 = vpack.c.bf16 %v452, %v452
    %v2802 = vunpack.c.l.b16 %v2798
    %v2803 = vunpack.c.l.b16 %v2799
    %v2804 = vrot.slane %v2802, 7
    %v2805 = vrot.slane %v2803, 6
    %v2806 = vsel %vm456, %v2805, %v2804
    %v2807 = vpack.c.b16 %v2806, %v2806
    %2808 = vrot.lane.b32.xlu0 %v2807, 112
    %v2809 = vpop.permute.xlu0 %2808
    %v2812 = vunpack.c.l.b16 %v2796
    %v2813 = vunpack.c.l.b16 %v2797
    %v2814 = vpack.c.b16 %v2813, %v2812
    %v2817 = vsel %vm233, %v2809, 0
    %2819 = vmatpush.bf16.msra.mxu0 0
    %2820 = vmatpush.bf16.msra.mxu0 0
    %2821 = vmatpush.bf16.msra.mxu0 0
    %2822 = vmatpush.bf16.msra.mxu0 0
    %2823 = vmatpush.bf16.msra.mxu0 0
    %2824 = vmatpush.bf16.msra.mxu0 0
    %2825 = vmatpush.bf16.msra.mxu0 0
    %2826 = vmatpush.bf16.msra.mxu0 %v2814
    %2827 = vmatmul.bf16.gmra.mxu0 %v2817
    %v2828 = vpop.f32.mrf.mxu0
    %v2829 = vadd.f32 0.0, %v2828
    %v2830 = vpop.f32.mrf.mxu0
    %2831 = vdwg.mxu0
    %v2834 = vunpack.c.l.b16 %v2794
    %v2835 = vunpack.c.l.b16 %v2795
    %v2836 = vrot.slane %v2834, 7
    %v2837 = vrot.slane %v2835, 6
    %v2838 = vsel %vm456, %v2837, %v2836
    %v2839 = vpack.c.b16 %v2838, %v2838
    %2840 = vrot.lane.b32.xlu0 %v2839, 112
    %v2841 = vpop.permute.xlu0 %2840
    %v2844 = vunpack.c.l.b16 %v2792
    %v2845 = vunpack.c.l.b16 %v2793
    %v2846 = vpack.c.b16 %v2845, %v2844
    %v2849 = vsel %vm233, %v2841, 0
    %2851 = vmatpush.bf16.msra.mxu0 0
    %2852 = vmatpush.bf16.msra.mxu0 0
    %2853 = vmatpush.bf16.msra.mxu0 0
    %2854 = vmatpush.bf16.msra.mxu0 0
    %2855 = vmatpush.bf16.msra.mxu0 0
    %2856 = vmatpush.bf16.msra.mxu0 0
    %2857 = vmatpush.bf16.msra.mxu0 0
    %2858 = vmatpush.bf16.msra.mxu0 %v2846
    %2859 = vmatmul.bf16.gmra.mxu0 %v2849
    %v2860 = vpop.f32.mrf.mxu0
    %v2861 = vadd.f32 %v2829, %v2860
    %v2862 = vpop.f32.mrf.mxu0
    %2863 = vdwg.mxu0
    %v2864 = vld [vmem:[#allocation6 + $0x45] sm:$0x1]
    %v2865 = vperm.slane %v2864, 0
    %v2866 = vadd.f32 %v2861, %v2865
    %v2867 = vld [vmem:[#allocation6 + $0x49] sm:$0x1]
    %v2868 = vperm.slane %v2867, 0
    %v2869 = vld [vmem:[#allocation6 + $0x30] sm:$0xff]
    %v2870 = vld [vmem:[#allocation6 + $0x38] sm:$0xff]
    %2871 = vmatpush.msra.mxu0 0.0
    %2872 = vmatpush.msra.mxu0 0.0
    %2873 = vmatpush.msra.mxu0 0.0
    %2874 = vmatpush.msra.mxu0 0.0
    %2875 = vmatpush.msra.mxu0 0.0
    %2876 = vmatpush.msra.mxu0 0.0
    %2877 = vmatpush.msra.mxu0 0.0
    %2878 = vmatpush.msra.mxu0 0.0
    %2879 = vmatpush.msra.mxu0 0.0
    %2880 = vmatpush.msra.mxu0 0.0
    %2881 = vmatpush.msra.mxu0 0.0
    %2882 = vmatpush.msra.mxu0 0.0
    %2883 = vmatpush.msra.mxu0 0.0
    %2884 = vmatpush.msra.mxu0 0.0
    %2885 = vmatpush.msra.mxu0 %v2870
    %2886 = vmatpush.msra.mxu0 %v2869
    %2887 = vmatmul.f32.gmra.mxu0 %v235
    %v2888 = vpop.f32.mrf.mxu0
    %v2889 = vadd.f32 0.0, %v2888
    %2890 = vdwg.mxu0
    %v2891 = vadd.f32 %v2866, %v2889
    %v2892 = vxor.u32 %v2891, 2147483648
    %v2893 = vmul.f32 %v2892, 1.442695
    %v2894 = vpow.pop %v2893
    %v2895 = vadd.f32 %v2894, 1.0
    %v2896 = vrcp.pop %v2895
    %v2897 = vmul.f32 %v2895, %v2896
    %v2898 = vsub.f32 1.0, %v2897
    %v2899 = vmul.f32 %v2896, %v2898
    %v2900 = vadd.f32 %v2896, %v2899
    %vm2901 = vweird.f32 %v2895
    %vm2902 = vweird.f32 %v2896
    %vm2903 = vmor %vm2901, %vm2902
    %v2904 = vsel %vm2903, %v2896, %v2900
    %v2905 = vand.u32 2147483647, %v2895
    %vm2906 = vcmp.eq.f32.partialorder %v2905, 8.507059e+37
    %v2907 = vand.u32 %v2895, 2147483648
    %v2908 = vor.u32 1.1754944e-38, %v2907
    %v2909 = vsel %vm2906, %v2908, %v2904
    %v2910 = vmul.f32 1.0, %v2909
    %2912 = vrot.lane.b32.xlu0 %v2868, 32
    %v2913 = vpop.permute.xlu0 %2912
    %v2915 = vadd.f32 %v2889, %v2913
    %2917 = vrot.lane.b32.xlu0 %v2915, 96
    %v2918 = vpop.permute.xlu0 %2917
    %v2920 = vmul.f32 %v2910, %v2918
    %2922 = vrot.lane.b32.xlu0 %v2920, 32
    %v2923 = vpop.permute.xlu0 %2922
    %v2925 = vadd.f32 %v2866, %v2923
    %v2926 = vtanh.pop %v2925
    %v2927 = vsub.f32 1.0, %v2910
    %2929 = vrot.lane.b32.xlu0 %v2926, 112
    %v2930 = vpop.permute.xlu0 %2929
    %v2932 = vmul.f32 %v2927, %v2930
    %v2933 = vmul.f32 %v2910, 0.0
    %v2934 = vadd.f32 %v2932, %v2933
    %2936 = vrot.lane.b32.xlu0 %v2791, 112
    %v2937 = vpop.permute.xlu0 %2936
    %v2940 = vrot.slane %v2934, 2
    %v2942 = vsel %vm233, %v2937, %v2940
    %v2943 = vld [vmem:[#allocation4 + $0x60] sm:$0xf]
    %v2944 = vld [vmem:[#allocation4 + $0x64] sm:$0xf]
    %v2945 = vld [vmem:[#allocation4 + $0x68] sm:$0xf]
    %v2946 = vld [vmem:[#allocation4 + $0x6c] sm:$0xf]
    %v2947 = vpack.c.bf16 %v2942, %v2942
    %v2948 = vld [vmem:[#allocation6 + $0x4a] sm:$0x1]
    %v2949 = vperm.slane %v2948, 0
    %v2951 = vrot.slane %v2947, 3
    %v2956 = vunpack.c.l.b16 %v2943
    %v2957 = vunpack.c.l.b16 %v2944
    %v2958 = vunpack.c.l.b16 %v2945
    %v2959 = vunpack.c.l.b16 %v2946
    %v2960 = vpack.c.b16 %v2957, %v2956
    %v2961 = vpack.c.b16 %v2959, %v2958
    %v2965 = vsel %vm83, %v2951, 0
    %2967 = vmatpush.bf16.msra.mxu0 0
    %2968 = vmatpush.bf16.msra.mxu0 0
    %2969 = vmatpush.bf16.msra.mxu0 0
    %2970 = vmatpush.bf16.msra.mxu0 0
    %2971 = vmatpush.bf16.msra.mxu0 0
    %2972 = vmatpush.bf16.msra.mxu0 0
    %2973 = vmatpush.bf16.msra.mxu0 %v2961
    %2974 = vmatpush.bf16.msra.mxu0 %v2960
    %2975 = vmatmul.bf16.gmra.mxu0 %v2965
    %v2976 = vpop.f32.mrf.mxu0
    %v2977 = vadd.f32 %v2949, %v2976
    %v2978 = vpop.f32.mrf.mxu0
    %2979 = vdwg.mxu0
    %v2980 = vadd.f32 %v2977, 3.0
    %v2981 = vmax.f32 %v2980, 0.0
    %v2982 = vmin.f32 %v2981, 6.0
    %v2983 = vmul.f32 %v2977, %v2982
    %v2984 = vmul.f32 %v2983, 0.16666667
    %v2985 = vld [vmem:[#allocation4 + $0x70] sm:$0xf]
    %v2986 = vld [vmem:[#allocation4 + $0x74] sm:$0xf]
    %v2987 = vld [vmem:[#allocation4 + $0x78] sm:$0xf]
    %v2988 = vld [vmem:[#allocation4 + $0x7c] sm:$0xf]
    %v2989 = vpack.c.bf16 %v2984, %v2984
    %v2990 = vld [vmem:[#allocation6 + $0x4b] sm:$0x1]
    %v2991 = vperm.slane %v2990, 0
    %v2996 = vunpack.c.l.b16 %v2985
    %v2997 = vunpack.c.l.b16 %v2986
    %v2998 = vunpack.c.l.b16 %v2987
    %v2999 = vunpack.c.l.b16 %v2988
    %v3000 = vpack.c.b16 %v2997, %v2996
    %v3001 = vpack.c.b16 %v2999, %v2998
    %v3005 = vsel %vm83, %v2989, 0
    %3007 = vmatpush.bf16.msra.mxu0 0
    %3008 = vmatpush.bf16.msra.mxu0 0
    %3009 = vmatpush.bf16.msra.mxu0 0
    %3010 = vmatpush.bf16.msra.mxu0 0
    %3011 = vmatpush.bf16.msra.mxu0 0
    %3012 = vmatpush.bf16.msra.mxu0 0
    %3013 = vmatpush.bf16.msra.mxu0 %v3001
    %3014 = vmatpush.bf16.msra.mxu0 %v3000
    %3015 = vmatmul.bf16.gmra.mxu0 %v3005
    %v3016 = vpop.f32.mrf.mxu0
    %v3017 = vadd.f32 %v2991, %v3016
    %v3018 = vpop.f32.mrf.mxu0
    %3019 = vdwg.mxu0
    %3020 = vst [vmem:[%s3] sm:$0x3] %v3017
    // Predicated region
    $region26: #{sentiment_head_pallas.1} parent=1 // pred_check
      _
    $region27: #{sentiment_head_pallas.1} parent=1 // pred_check_branch
      %3022 = sbr.rel (0) target = $region29
    $region28: #{sentiment_head_pallas.1} parent=1 // pred_region
      _
    $region29: #{sentiment_head_pallas.1} parent=1 // pred_fallthru
      _
    // Predicated region
    $region30: #{sentiment_head_pallas.1} parent=1 // pred_check
      _
    $region31: #{sentiment_head_pallas.1} parent=1 // pred_check_branch
      %3024 = sbr.rel (0) target = $region33
    $region32: #{sentiment_head_pallas.1} parent=1 // pred_region
      _
    $region33: #{sentiment_head_pallas.1} parent=1 // pred_fallthru
      _
    %3025 = vsyncpa [#allocation3], 1
    %3026 = vsyncpa [#allocation5], 1

</llo_original>
